<compile_context>
chip_gen: v7x
topology: tpu7x:2x2x1
jax: 0.10.0
libtpu: 0.0.40
codegen_flags: <defaults>
</compile_context>

<pallas_src>
import functools

import jax
import jax.numpy as jnp
from jax.experimental import pallas as pl
from jax.experimental.pallas import tpu as pltpu


EMB_DIM = 16
HIDDEN = 16
NUM_CLASSES = 2
LANE = 128   # fc2 output padded to this width for lane-dense stores


def _round_up(x, m):
    return ((x + m - 1) // m) * m


def _samplenet_kernel(tok_ref, embw_ref, b1_ref, w2_ref, b2_ref, o_ref,
                      counts_ref, *, t_chunk, n_chunks, onehot_dtype):
    """One batch tile.

    tok_ref    : (TILE_B, T_pad) int32 token ids (lane-dense)
    embw_ref   : (V, HIDDEN) f32 = (emb_table @ w1) / T   (fc1 + mean folded)
    b1_ref     : (1, HIDDEN) f32
    w2_ref     : (HIDDEN, LANE) f32, zero-padded past NUM_CLASSES
    b2_ref     : (1, LANE) f32, zero-padded
    o_ref      : (TILE_B, LANE) f32 lane-dense output block
    counts_ref : (TILE_B, V) f32 VMEM scratch (token counts)
    """
    tile_b = tok_ref.shape[0]
    vocab = embw_ref.shape[0]

    counts_ref[...] = jnp.zeros_like(counts_ref)

    def accumulate(c, carry):
        t0 = pl.multiple_of(c * t_chunk, t_chunk)
        tok_c = tok_ref[:, pl.ds(t0, t_chunk)]                 # (TILE_B, t_chunk)
        vocab_ids = jax.lax.broadcasted_iota(
            jnp.int32, (tile_b, t_chunk, vocab), 2)
        # Out-of-range pad tokens (== V) never match -> contribute zero counts.
        onehot = (tok_c[:, :, None] == vocab_ids).astype(onehot_dtype)
        partial = jnp.sum(onehot, axis=1)                      # (TILE_B, V), exact (<= t_chunk)
        counts_ref[...] += partial.astype(jnp.float32)
        return carry

    jax.lax.fori_loop(0, n_chunks, accumulate, 0, unroll=True)

    # Fused gather + AdaptiveAvgPool1d(1) + fc1: counts @ ((emb @ w1)/T), then ReLU.
    h = jnp.dot(counts_ref[...], embw_ref[...],
                preferred_element_type=jnp.float32)
    h = jnp.maximum(h + b1_ref[...], 0.0)

    # fc2 (lane-padded to 128 outputs).
    out = jnp.dot(h, w2_ref[...], preferred_element_type=jnp.float32) + b2_ref[...]
    o_ref[...] = out.astype(o_ref.dtype)


def samplenet_forward(tokens, emb_table, w1, b1, w2, b2, *,
                      tile_b=256, t_chunk=128):
    """tokens: (B, T) int; returns logits (B, NUM_CLASSES) float32."""
    B, T = tokens.shape
    V, D = emb_table.shape
    assert D == EMB_DIM and w1.shape == (EMB_DIM, HIDDEN)
    assert w2.shape == (HIDDEN, NUM_CLASSES)

    # --- batch tiling (MXU-filling by default, multiple of 8, <= padded B) ---
    tile_b = min(tile_b, _round_up(B, 8))
    tile_b = max(8, _round_up(tile_b, 8))
    num_tiles = pl.cdiv(B, tile_b)
    B_pad = num_tiles * tile_b

    # --- sequence chunking (decouples one-hot working set from T) ---
    t_chunk_eff = T if T <= t_chunk else t_chunk
    T_pad = _round_up(T, t_chunk_eff)
    n_chunks = T_pad // t_chunk_eff

    # Pad tokens; pad value V is out-of-vocab -> zero contribution to counts,
    # so the mean over the ORIGINAL T stays exact.  Padded batch rows are
    # sliced off below.
    tok = tokens.astype(jnp.int32)
    if B_pad != B or T_pad != T:
        tok = jnp.pad(tok, ((0, B_pad - B), (0, T_pad - T)), constant_values=V)

    # Fold fc1 weight and the 1/T mean-pool scale into the embedding table
    # (done once per call, not per tile).
    emb_fold = (emb_table.astype(jnp.float32) @ w1.astype(jnp.float32)) * (1.0 / T)
    b1_2d = b1.reshape(1, HIDDEN).astype(jnp.float32)

    # Lane-dense fc2: pad the 2-wide output to 128 lanes.
    w2_pad = jnp.zeros((HIDDEN, LANE), jnp.float32).at[:, :NUM_CLASSES].set(w2)
    b2_pad = jnp.zeros((1, LANE), jnp.float32).at[:, :NUM_CLASSES].set(b2)

    # bf16 one-hot/counts on chips with a bf16 VALU (v6e/v7x); f32 on v5e & older.
    kind = jax.devices()[0].device_kind.lower()
    old_gen = any(g in kind for g in ("v2", "v3", "v4", "v5"))
    onehot_dtype = jnp.float32 if old_gen else jnp.bfloat16

    # Explicit VMEM budget: token block (double-buffered) + one-hot chunk +
    # counts scratch + resident tables + output block.  Capped at 64 MiB so it
    # is valid on v7x while lifting v5e's 16 MiB scoped default.
    oh_bytes = jnp.dtype(onehot_dtype).itemsize
    vmem_est = (
        2 * tile_b * T_pad * 4
        + 2 * tile_b * LANE * 4
        + tile_b * V * 4
        + tile_b * t_chunk_eff * V * (oh_bytes + 4)
        + V * HIDDEN * 4 + HIDDEN * LANE * 4 + 2 * LANE * 4
    )
    vmem_limit = int(min(64 * 2**20, max(32 * 2**20, 2 * vmem_est)))

    kernel = functools.partial(_samplenet_kernel, t_chunk=t_chunk_eff,
                               n_chunks=n_chunks, onehot_dtype=onehot_dtype)

    out = pl.pallas_call(
        kernel,
        out_shape=jax.ShapeDtypeStruct((B_pad, LANE), jnp.float32),
        grid_spec=pltpu.PrefetchScalarGridSpec(
            num_scalar_prefetch=0,
            grid=(num_tiles,),
            in_specs=[
                pl.BlockSpec((tile_b, T_pad), lambda i: (i, 0)),   # tokens: lane-dense, batch-tiled
                pl.BlockSpec((V, HIDDEN), lambda i: (0, 0)),       # folded (emb@w1)/T: resident
                pl.BlockSpec((1, HIDDEN), lambda i: (0, 0)),       # b1: resident
                pl.BlockSpec((HIDDEN, LANE), lambda i: (0, 0)),    # padded w2: resident
                pl.BlockSpec((1, LANE), lambda i: (0, 0)),         # padded b2: resident
            ],
            out_specs=pl.BlockSpec((tile_b, LANE), lambda i: (i, 0)),
            scratch_shapes=[pltpu.VMEM((tile_b, V), jnp.float32)],
        ),
        compiler_params=pltpu.CompilerParams(
            dimension_semantics=("parallel",),   # megacore-shard batch tiles (v7x)
            vmem_limit_bytes=vmem_limit,
        ),
    )(tok, emb_fold, b1_2d, w2_pad, b2_pad)
    return out[:B, :NUM_CLASSES]


def init_params(key, vocab_size):
    """Deterministic init matching PyTorch default init schemes (shapes only)."""
    k_emb, k_w1, k_b1, k_w2, k_b2 = jax.random.split(key, 5)
    emb_table = jax.random.normal(k_emb, (vocab_size, EMB_DIM), jnp.float32)
    bound1 = 1.0 / jnp.sqrt(EMB_DIM)
    w1 = jax.random.uniform(k_w1, (EMB_DIM, HIDDEN), jnp.float32, -bound1, bound1)
    b1 = jax.random.uniform(k_b1, (HIDDEN,), jnp.float32, -bound1, bound1)
    bound2 = 1.0 / jnp.sqrt(HIDDEN)
    w2 = jax.random.uniform(k_w2, (HIDDEN, NUM_CLASSES), jnp.float32, -bound2, bound2)
    b2 = jax.random.uniform(k_b2, (NUM_CLASSES,), jnp.float32, -bound2, bound2)
    return emb_table, w1, b1, w2, b2


if __name__ == "__main__":
    key = jax.random.PRNGKey(0)
    k_params, k_tok = jax.random.split(key)

    VOCAB = 128     # lane-dense vocab axis for the in-kernel one-hot / K=128 matmul
    B, T = 40, 160  # B > 1 keeps the torch .squeeze() batch dim; T > 128 exercises chunking
    TILE_B = 16     # 3 batch tiles (40 -> 48 padded) -> exercises the parallel grid + padding

    emb_table, w1, b1, w2, b2 = init_params(k_params, VOCAB)
    tokens = jax.random.randint(k_tok, (B, T), 0, VOCAB, dtype=jnp.int32)

    logits = samplenet_forward(tokens, emb_table, w1, b1, w2, b2, tile_b=TILE_B)
    logits = jax.block_until_ready(logits)

    # Pure-JAX reference of the same math (gather -> mean -> fc1 -> relu -> fc2).
    x_ref = jnp.take(emb_table, tokens, axis=0).mean(axis=1)
    h_ref = jnp.maximum(x_ref @ w1 + b1, 0.0)
    ref = h_ref @ w2 + b2
    assert logits.shape == (B, NUM_CLASSES)
    assert jnp.allclose(logits, ref, atol=1e-4, rtol=1e-4), (
        float(jnp.max(jnp.abs(logits - ref))))

    print("KERNEL_OK")
</pallas_src>

<mosaic_0001>
module attributes {stable_mosaic.version = 11 : i64} {
  func.func @_samplenet_kernel(%arg0: i32, %arg1: memref<16x256xi32, #tpu.memory_space<vmem>>, %arg2: memref<128x16xf32, #tpu.memory_space<vmem>>, %arg3: memref<1x16xf32, #tpu.memory_space<vmem>>, %arg4: memref<16x128xf32, #tpu.memory_space<vmem>>, %arg5: memref<1x128xf32, #tpu.memory_space<vmem>>, %arg6: memref<16x128xf32, #tpu.memory_space<vmem>>, %arg7: memref<16x128xf32, #tpu.memory_space<vmem>>) attributes {dimension_semantics = [#tpu.dimension_semantics<parallel>], iteration_bounds = array<i64: 3>, scalar_prefetch = 0 : i64, scratch_operands = 1 : i64, tpu.core_type = #tpu.core_type<tc>, window_params = [{transform_indices = @transform_0, window_bounds = array<i64: 16, 256>}, {pipeline_mode = #tpu.pipeline_mode<synchronous>, transform_indices = @transform_1, window_bounds = array<i64: 128, 16>}, {pipeline_mode = #tpu.pipeline_mode<synchronous>, transform_indices = @transform_2, window_bounds = array<i64: 1, 16>}, {pipeline_mode = #tpu.pipeline_mode<synchronous>, transform_indices = @transform_3, window_bounds = array<i64: 16, 128>}, {pipeline_mode = #tpu.pipeline_mode<synchronous>, transform_indices = @transform_4, window_bounds = array<i64: 1, 128>}, {transform_indices = @transform_5, window_bounds = array<i64: 16, 128>}]} {
    %cst = arith.constant 0.000000e+00 : f32
    %0 = vector.broadcast %cst : f32 to vector<16x128xf32>
    %c0 = arith.constant 0 : index
    %c0_0 = arith.constant 0 : index
    %1 = vector.load %arg7[%c0, %c0_0] : memref<16x128xf32, #tpu.memory_space<vmem>>, vector<16x128xf32>
    tpu.vector_store %arg7[%c0, %c0_0], %0 {strides = array<i32>} : memref<16x128xf32, #tpu.memory_space<vmem>>, vector<16x128xf32>,
    %c0_i32 = arith.constant 0 : i32
    %c128_i32 = arith.constant 128 : i32
    %2 = arith.muli %c0_i32, %c128_i32 : i32
    %3 = tpu.assume_multiple %2, 128 : i32
    %c0_1 = arith.constant 0 : index
    %4 = arith.index_cast %3 : i32 to index
    %5 = vector.load %arg1[%c0_1, %4] : memref<16x256xi32, #tpu.memory_space<vmem>>, vector<16x128xi32>
    %6 = tpu.iota {dimensions = array<i32: 2>} : vector<16x128x128xi32>
    %7 = vector.shape_cast %5 : vector<16x128xi32> to vector<16x128x1xi32>
    %8 = vector.broadcast %7 : vector<16x128x1xi32> to vector<16x128x128xi32>
    %9 = arith.cmpi eq, %8, %6 : vector<16x128x128xi32>
    %10 = arith.extui %9 : vector<16x128x128xi1> to vector<16x128x128xi32>
    %11 = arith.sitofp %10 : vector<16x128x128xi32> to vector<16x128x128xf32>
    %12 = arith.truncf %11 : vector<16x128x128xf32> to vector<16x128x128xbf16>
    %13 = arith.extf %12 : vector<16x128x128xbf16> to vector<16x128x128xf32>
    %cst_2 = arith.constant dense<0.000000e+00> : vector<16x128xf32>
    %14 = vector.multi_reduction <add>, %13, %cst_2 [1] : vector<16x128x128xf32> to vector<16x128xf32>
    %15 = arith.truncf %14 : vector<16x128xf32> to vector<16x128xbf16>
    %c0_3 = arith.constant 0 : index
    %c0_4 = arith.constant 0 : index
    %16 = vector.load %arg7[%c0_3, %c0_4] : memref<16x128xf32, #tpu.memory_space<vmem>>, vector<16x128xf32>
    %17 = arith.extf %15 : vector<16x128xbf16> to vector<16x128xf32>
    %18 = arith.addf %16, %17 : vector<16x128xf32>
    %c0_5 = arith.constant 0 : index
    %c0_6 = arith.constant 0 : index
    %19 = vector.load %arg7[%c0_5, %c0_6] : memref<16x128xf32, #tpu.memory_space<vmem>>, vector<16x128xf32>
    tpu.vector_store %arg7[%c0_5, %c0_6], %18 {strides = array<i32>} : memref<16x128xf32, #tpu.memory_space<vmem>>, vector<16x128xf32>,
    %c1_i32 = arith.constant 1 : i32
    %c128_i32_7 = arith.constant 128 : i32
    %20 = arith.muli %c1_i32, %c128_i32_7 : i32
    %21 = tpu.assume_multiple %20, 128 : i32
    %c0_8 = arith.constant 0 : index
    %22 = arith.index_cast %21 : i32 to index
    %23 = vector.load %arg1[%c0_8, %22] : memref<16x256xi32, #tpu.memory_space<vmem>>, vector<16x128xi32>
    %24 = tpu.iota {dimensions = array<i32: 2>} : vector<16x128x128xi32>
    %25 = vector.shape_cast %23 : vector<16x128xi32> to vector<16x128x1xi32>
    %26 = vector.broadcast %25 : vector<16x128x1xi32> to vector<16x128x128xi32>
    %27 = arith.cmpi eq, %26, %24 : vector<16x128x128xi32>
    %28 = arith.extui %27 : vector<16x128x128xi1> to vector<16x128x128xi32>
    %29 = arith.sitofp %28 : vector<16x128x128xi32> to vector<16x128x128xf32>
    %30 = arith.truncf %29 : vector<16x128x128xf32> to vector<16x128x128xbf16>
    %31 = arith.extf %30 : vector<16x128x128xbf16> to vector<16x128x128xf32>
    %cst_9 = arith.constant dense<0.000000e+00> : vector<16x128xf32>
    %32 = vector.multi_reduction <add>, %31, %cst_9 [1] : vector<16x128x128xf32> to vector<16x128xf32>
    %33 = arith.truncf %32 : vector<16x128xf32> to vector<16x128xbf16>
    %c0_10 = arith.constant 0 : index
    %c0_11 = arith.constant 0 : index
    %34 = vector.load %arg7[%c0_10, %c0_11] : memref<16x128xf32, #tpu.memory_space<vmem>>, vector<16x128xf32>
    %35 = arith.extf %33 : vector<16x128xbf16> to vector<16x128xf32>
    %36 = arith.addf %34, %35 : vector<16x128xf32>
    %c0_12 = arith.constant 0 : index
    %c0_13 = arith.constant 0 : index
    %37 = vector.load %arg7[%c0_12, %c0_13] : memref<16x128xf32, #tpu.memory_space<vmem>>, vector<16x128xf32>
    tpu.vector_store %arg7[%c0_12, %c0_13], %36 {strides = array<i32>} : memref<16x128xf32, #tpu.memory_space<vmem>>, vector<16x128xf32>,
    %c2_i32 = arith.constant 2 : i32
    %c0_14 = arith.constant 0 : index
    %c0_15 = arith.constant 0 : index
    %38 = vector.load %arg7[%c0_14, %c0_15] : memref<16x128xf32, #tpu.memory_space<vmem>>, vector<16x128xf32>
    %c0_16 = arith.constant 0 : index
    %c0_17 = arith.constant 0 : index
    %39 = vector.load %arg2[%c0_16, %c0_17] : memref<128x16xf32, #tpu.memory_space<vmem>>, vector<128x16xf32>
    %cst_18 = arith.constant dense<0.000000e+00> : vector<16x16xf32>
    %40 = tpu.matmul %38, %39, %cst_18 {dimension_numbers = #tpu.dot_dimension_numbers<[1], [0], [0], [1], [0, 0, 1, 1], [], []>} : vector<16x128xf32>, vector<128x16xf32>, vector<16x16xf32> -> vector<16x16xf32>
    %c0_19 = arith.constant 0 : index
    %c0_20 = arith.constant 0 : index
    %41 = vector.load %arg3[%c0_19, %c0_20] : memref<1x16xf32, #tpu.memory_space<vmem>>, vector<1x16xf32>
    %42 = vector.broadcast %41 : vector<1x16xf32> to vector<16x16xf32>
    %43 = arith.addf %40, %42 : vector<16x16xf32>
    %cst_21 = arith.constant 0.000000e+00 : f32
    %44 = vector.broadcast %cst_21 : f32 to vector<16x16xf32>
    %45 = arith.maximumf %43, %44 : vector<16x16xf32>
    %c0_22 = arith.constant 0 : index
    %c0_23 = arith.constant 0 : index
    %46 = vector.load %arg4[%c0_22, %c0_23] : memref<16x128xf32, #tpu.memory_space<vmem>>, vector<16x128xf32>
    %cst_24 = arith.constant dense<0.000000e+00> : vector<16x128xf32>
    %47 = tpu.matmul %45, %46, %cst_24 {dimension_numbers = #tpu.dot_dimension_numbers<[1], [0], [0], [1], [0, 0, 1, 1], [], []>} : vector<16x16xf32>, vector<16x128xf32>, vector<16x128xf32> -> vector<16x128xf32>
    %c0_25 = arith.constant 0 : index
    %c0_26 = arith.constant 0 : index
    %48 = vector.load %arg5[%c0_25, %c0_26] : memref<1x128xf32, #tpu.memory_space<vmem>>, vector<1x128xf32>
    %49 = vector.broadcast %48 : vector<1x128xf32> to vector<16x128xf32>
    %50 = arith.addf %47, %49 : vector<16x128xf32>
    %c0_27 = arith.constant 0 : index
    %c0_28 = arith.constant 0 : index
    %51 = vector.load %arg6[%c0_27, %c0_28] : memref<16x128xf32, #tpu.memory_space<vmem>>, vector<16x128xf32>
    tpu.vector_store %arg6[%c0_27, %c0_28], %50 {strides = array<i32>} : memref<16x128xf32, #tpu.memory_space<vmem>>, vector<16x128xf32>,
    return
  }
  func.func @transform_0(%arg0: i32) -> (i32, i32) {
    %c0_i32 = arith.constant 0 : i32
    %c0_i32_0 = arith.constant 0 : i32
    return %arg0, %c0_i32 : i32, i32
  }
  func.func @transform_1(%arg0: i32) -> (i32, i32) {
    %c0_i32 = arith.constant 0 : i32
    %c0_i32_0 = arith.constant 0 : i32
    %c0_i32_1 = arith.constant 0 : i32
    return %c0_i32, %c0_i32_0 : i32, i32
  }
  func.func @transform_2(%arg0: i32) -> (i32, i32) {
    %c0_i32 = arith.constant 0 : i32
    %c0_i32_0 = arith.constant 0 : i32
    %c0_i32_1 = arith.constant 0 : i32
    return %c0_i32, %c0_i32_0 : i32, i32
  }
  func.func @transform_3(%arg0: i32) -> (i32, i32) {
    %c0_i32 = arith.constant 0 : i32
    %c0_i32_0 = arith.constant 0 : i32
    %c0_i32_1 = arith.constant 0 : i32
    return %c0_i32, %c0_i32_0 : i32, i32
  }
  func.func @transform_4(%arg0: i32) -> (i32, i32) {
    %c0_i32 = arith.constant 0 : i32
    %c0_i32_0 = arith.constant 0 : i32
    %c0_i32_1 = arith.constant 0 : i32
    return %c0_i32, %c0_i32_0 : i32, i32
  }
  func.func @transform_5(%arg0: i32) -> (i32, i32) {
    %c0_i32 = arith.constant 0 : i32
    %c0_i32_0 = arith.constant 0 : i32
    return %arg0, %c0_i32 : i32, i32
  }
}

</mosaic_0001>

<llo_original>
// kernel: tpu_custom_call.1
$region0: #{tpu_custom_call.1}
  #allocation0 [shape = 'u32[]', space=smem, size = 0x4, offset = 0x4, fixed_abs, tag = 'smem constant byte address 0x4 - core index']
  #allocation1 [shape = 'u32[144,128]{1,0:T(1,128)}', space=vmem, size = 0x12000, scoped, tag = 'internal scratch']
  #allocation2 [shape = 'f32[16,128]{1,0:T(8,128)}', space=vmem, size = 0x2000, scoped, tag = 'scratch operand']
  %s0 = inlined_call_operand.vmem [shape: s32[48,256], index: 0, kind: input, shape index: {}]
  %s1 = inlined_call_operand.vmem [shape: f32[128,16], index: 1, kind: input, shape index: {}]
  %s2 = inlined_call_operand.vmem [shape: f32[1,16], index: 2, kind: input, shape index: {}]
  %s3 = inlined_call_operand.vmem [shape: f32[16,128], index: 3, kind: input, shape index: {}]
  %s4 = inlined_call_operand.vmem [shape: f32[1,128], index: 4, kind: input, shape index: {}]
  %s5 = inlined_call_operand.hbm [shape: f32[48,128], index: 5, kind: output, shape index: {}]
  %s6 = sld [smem:[#allocation0]]
  $region53: #{tpu_custom_call.1} parent=0
    _
  %s8 = ssub.s32 1, %s6
  %s9 = scalar_select 0, %s8, %s6
  $region1: #{tpu_custom_call.1} parent=0
    #allocation3 [shape = 'u8[16384]{0}', space=vmem, size = 0x4000, scoped, tag = 'output window, operand 0']
    #allocation4 [shape = 's32[2]{0}', space=sflag, size = 0x8, scoped, tag = 'scoped memory for tpu_custom_call.1']
    %10 = vsyncpa [#allocation4], 0
    %s11 = scalar_lea.sflag [#allocation4], 1
    %12 = vsyncpa %s11, 0
    loop: start=0, step=1, limit=5
    $region2: #{tpu_custom_call.1} parent=1 // loop_pre_header
      _
    $region3: #{tpu_custom_call.1} parent=1 // loop_header
      %s14 = sphi 0, %s18
      %p15 = scmp.ge.s32.totalorder %s14, 5
      %s24 = sphi 0, %s26
      %s27 = sphi 0, %s24
      %s28 = sphi 0, %s27
      %s44 = sphi 0, %s28
      %s48 = sphi 0, %s48
      %s50 = sphi 0, %s48
      %s51 = sphi 0, %s50
      %s65 = sphi 0, %s51
      %s69 = sphi 0, %s69
      %s71 = sphi 0, %s69
      %s72 = sphi 0, %s71
      %s86 = sphi 0, %s72
      %s90 = sphi 0, %s90
      %s92 = sphi 0, %s90
      %s93 = sphi 0, %s92
      %s107 = sphi 0, %s93
      %s111 = sphi 0, %s111
      %s113 = sphi 0, %s111
      %s114 = sphi 0, %s113
      %s128 = sphi 0, %s114
      %s134 = sphi 0, %s136
      %s137 = sphi 0, %s134
      %s138 = sphi 0, %s137
      %s154 = sphi 0, %s138
    $region4: #{tpu_custom_call.1} parent=1 // loop_header_branch
      %17 = sbr.rel (%p15) target = $region8
    $region5: #{tpu_custom_call.1} parent=1 // loop_body
      %s19 = ssub.s32 %s14, 1
      %s20 = ssub.s32 %s14, 2
      %s21 = sadd.s32 %s14, 1
      %s22 = ssub.s32 %s14, %s21
      %p23 = scmp.eq.s32.totalorder %s22, 0
      %s25 = sadd.s32 %s24, 1
      %s26 = scalar_select %p23, %s24, %s25
      %p29 = pneg %p23
      %p30 = scmp.eq.s32.totalorder %s14, 2
      %p31 = por %p29, %p30
      %p32 = scmp.ne.s32.totalorder %s24, %s27
      %p33 = scmp.eq.s32.totalorder %s14, 0
      %p34 = por %p32, %p33
      %p35 = scmp.ne.s32.totalorder %s24, %s27
      %p36 = scmp.eq.s32.totalorder %s19, 2
      %p37 = por %p35, %p36
      %p38 = scmp.ne.s32.totalorder %s27, %s28
      %p39 = scmp.eq.s32.totalorder %s19, 0
      %p40 = por %p38, %p39
      %p41 = scmp.ne.s32.totalorder %s27, %s28
      %p42 = scmp.eq.s32.totalorder %s20, 2
      %p43 = por %p41, %p42
      %p45 = scmp.ne.s32.totalorder %s28, %s44
      %p46 = scmp.eq.s32.totalorder %s20, 0
      %p47 = por %p45, %p46
      %s49 = sadd.s32 %s48, 1
      %p52 = scmp.eq.s32.totalorder %s14, 2
      %p53 = scmp.ne.s32.totalorder %s48, %s50
      %p54 = scmp.eq.s32.totalorder %s14, 0
      %p55 = por %p53, %p54
      %p56 = scmp.ne.s32.totalorder %s48, %s50
      %p57 = scmp.eq.s32.totalorder %s19, 2
      %p58 = por %p56, %p57
      %p59 = scmp.ne.s32.totalorder %s50, %s51
      %p60 = scmp.eq.s32.totalorder %s19, 0
      %p61 = por %p59, %p60
      %p62 = scmp.ne.s32.totalorder %s50, %s51
      %p63 = scmp.eq.s32.totalorder %s20, 2
      %p64 = por %p62, %p63
      %p66 = scmp.ne.s32.totalorder %s51, %s65
      %p67 = scmp.eq.s32.totalorder %s20, 0
      %p68 = por %p66, %p67
      %s70 = sadd.s32 %s69, 1
      %p73 = scmp.eq.s32.totalorder %s14, 2
      %p74 = scmp.ne.s32.totalorder %s69, %s71
      %p75 = scmp.eq.s32.totalorder %s14, 0
      %p76 = por %p74, %p75
      %p77 = scmp.ne.s32.totalorder %s69, %s71
      %p78 = scmp.eq.s32.totalorder %s19, 2
      %p79 = por %p77, %p78
      %p80 = scmp.ne.s32.totalorder %s71, %s72
      %p81 = scmp.eq.s32.totalorder %s19, 0
      %p82 = por %p80, %p81
      %p83 = scmp.ne.s32.totalorder %s71, %s72
      %p84 = scmp.eq.s32.totalorder %s20, 2
      %p85 = por %p83, %p84
      %p87 = scmp.ne.s32.totalorder %s72, %s86
      %p88 = scmp.eq.s32.totalorder %s20, 0
      %p89 = por %p87, %p88
      %s91 = sadd.s32 %s90, 1
      %p94 = scmp.eq.s32.totalorder %s14, 2
      %p95 = scmp.ne.s32.totalorder %s90, %s92
      %p96 = scmp.eq.s32.totalorder %s14, 0
      %p97 = por %p95, %p96
      %p98 = scmp.ne.s32.totalorder %s90, %s92
      %p99 = scmp.eq.s32.totalorder %s19, 2
      %p100 = por %p98, %p99
      %p101 = scmp.ne.s32.totalorder %s92, %s93
      %p102 = scmp.eq.s32.totalorder %s19, 0
      %p103 = por %p101, %p102
      %p104 = scmp.ne.s32.totalorder %s92, %s93
      %p105 = scmp.eq.s32.totalorder %s20, 2
      %p106 = por %p104, %p105
      %p108 = scmp.ne.s32.totalorder %s93, %s107
      %p109 = scmp.eq.s32.totalorder %s20, 0
      %p110 = por %p108, %p109
      %s112 = sadd.s32 %s111, 1
      %p115 = scmp.eq.s32.totalorder %s14, 2
      %p116 = scmp.ne.s32.totalorder %s111, %s113
      %p117 = scmp.eq.s32.totalorder %s14, 0
      %p118 = por %p116, %p117
      %p119 = scmp.ne.s32.totalorder %s111, %s113
      %p120 = scmp.eq.s32.totalorder %s19, 2
      %p121 = por %p119, %p120
      %p122 = scmp.ne.s32.totalorder %s113, %s114
      %p123 = scmp.eq.s32.totalorder %s19, 0
      %p124 = por %p122, %p123
      %p125 = scmp.ne.s32.totalorder %s113, %s114
      %p126 = scmp.eq.s32.totalorder %s20, 2
      %p127 = por %p125, %p126
      %p129 = scmp.ne.s32.totalorder %s114, %s128
      %p130 = scmp.eq.s32.totalorder %s20, 0
      %p131 = por %p129, %p130
      %s132 = ssub.s32 %s14, %s21
      %p133 = scmp.eq.s32.totalorder %s132, 0
      %s135 = sadd.s32 %s134, 1
      %s136 = scalar_select %p133, %s134, %s135
      %p139 = pneg %p133
      %p140 = scmp.eq.s32.totalorder %s14, 2
      %p141 = por %p139, %p140
      %p142 = scmp.ne.s32.totalorder %s134, %s137
      %p143 = scmp.eq.s32.totalorder %s14, 0
      %p144 = por %p142, %p143
      %p145 = scmp.ne.s32.totalorder %s134, %s137
      %p146 = scmp.eq.s32.totalorder %s19, 2
      %p147 = por %p145, %p146
      %p148 = scmp.ne.s32.totalorder %s137, %s138
      %p149 = scmp.eq.s32.totalorder %s19, 0
      %p150 = por %p148, %p149
      %p151 = scmp.ne.s32.totalorder %s137, %s138
      %p152 = scmp.eq.s32.totalorder %s20, 2
      %p153 = por %p151, %p152
      %p155 = scmp.ne.s32.totalorder %s138, %s154
      %p156 = scmp.eq.s32.totalorder %s20, 0
      %p157 = por %p155, %p156
      %p158 = scmp.le.s32.totalorder 1, %s14
      %p159 = scmp.lt.s32.totalorder %s14, 4
      %p160 = pnand %p158, %p159
      %p161 = pneg %p160
      // Predicated region
      $region9: #{tpu_custom_call.1} parent=5 // pred_check
        _
      $region10: #{tpu_custom_call.1} parent=5 // pred_check_branch
        %163 = sbr.rel (%p160) target = $region12
      $region11: #{tpu_custom_call.1} parent=5 // pred_region
        %s164 = ssub.s32 %s14, 1
        // Predicated region
        $region13: #{tpu_custom_call.1} parent=11 // pred_check
          %p165 = pneg %p61
        $region14: #{tpu_custom_call.1} parent=11 // pred_check_branch
          %167 = sbr.rel (%p165) target = $region16
        $region15: #{tpu_custom_call.1} parent=11 // pred_region
          _
        $region16: #{tpu_custom_call.1} parent=11 // pred_fallthru
          _
        // Predicated region
        $region17: #{tpu_custom_call.1} parent=11 // pred_check
          %p168 = pneg %p82
        $region18: #{tpu_custom_call.1} parent=11 // pred_check_branch
          %170 = sbr.rel (%p168) target = $region20
        $region19: #{tpu_custom_call.1} parent=11 // pred_region
          _
        $region20: #{tpu_custom_call.1} parent=11 // pred_fallthru
          _
        // Predicated region
        $region21: #{tpu_custom_call.1} parent=11 // pred_check
          %p171 = pneg %p103
        $region22: #{tpu_custom_call.1} parent=11 // pred_check_branch
          %173 = sbr.rel (%p171) target = $region24
        $region23: #{tpu_custom_call.1} parent=11 // pred_region
          _
        $region24: #{tpu_custom_call.1} parent=11 // pred_fallthru
          _
        // Predicated region
        $region25: #{tpu_custom_call.1} parent=11 // pred_check
          %p174 = pneg %p124
        $region26: #{tpu_custom_call.1} parent=11 // pred_check_branch
          %176 = sbr.rel (%p174) target = $region28
        $region27: #{tpu_custom_call.1} parent=11 // pred_region
          _
        $region28: #{tpu_custom_call.1} parent=11 // pred_fallthru
          _
      $region12: #{tpu_custom_call.1} parent=5 // pred_fallthru
        _
      %p177 = scmp.lt.s32.totalorder %s14, 3
      // Predicated region
      $region29: #{tpu_custom_call.1} parent=5 // pred_check
        %p178 = pneg %p177
      $region30: #{tpu_custom_call.1} parent=5 // pred_check_branch
        %180 = sbr.rel (%p178) target = $region32
      $region31: #{tpu_custom_call.1} parent=5 // pred_region
        // Predicated region
        $region33: #{tpu_custom_call.1} parent=31 // pred_check
          %p181 = pneg %p34
        $region34: #{tpu_custom_call.1} parent=31 // pred_check_branch
          %183 = sbr.rel (%p181) target = $region36
        $region35: #{tpu_custom_call.1} parent=31 // pred_region
          %s184 = smul.u32 2, %s14
          %p185 = scmp.lt.s32.totalorder %s184, 5
          %s186 = scalar_select %p185, %s184, 5
          %s187 = smul.addr %s186, 2
          %s188 = smul.addr %s187, 8
          %s189 = scalar_lea.vmem %s0, %s188
          %s190 = smul.u32 2, %s14
        $region36: #{tpu_custom_call.1} parent=31 // pred_fallthru
          _
      $region32: #{tpu_custom_call.1} parent=5 // pred_fallthru
        _
      %p191 = scmp.le.s32.totalorder 1, %s14
      %p192 = scmp.lt.s32.totalorder %s14, 4
      %p193 = pnand %p191, %p192
      %p194 = pneg %p193
      // Predicated region
      $region37: #{tpu_custom_call.1} parent=5 // pred_check
        _
      $region38: #{tpu_custom_call.1} parent=5 // pred_check_branch
        %196 = sbr.rel (%p193) target = $region40
      $region39: #{tpu_custom_call.1} parent=5 // pred_region
        %s197 = ssub.s32 %s14, 1
        %s198 = smul.u32 2, %s19
        %p199 = scmp.lt.s32.totalorder %s198, 5
        %s200 = scalar_select %p199, %s198, 5
        %s201 = smul.addr %s200, 2
        %s202 = smul.addr %s201, 8
        %s203 = scalar_lea.vmem %s0, %s202
        %p204 = pneg %p40
        %p205 = pneg %p37
        %p206 = pneg %p61
        %p207 = pneg %p58
        %p208 = pneg %p82
        %p209 = pneg %p79
        %p210 = pneg %p103
        %p211 = pneg %p100
        %p212 = pneg %p124
        %p213 = pneg %p121
        %p214 = pneg %p150
        %p215 = pneg %p147
        %s216 = sand.u32 %s137, 1
        %s217 = scalar_lea.sflag [#allocation4], %s216
        %s218 = sand.u32 %s137, 1
        %s219 = smul.addr %s218, 16
        %s220 = scalar_lea.vmem [#allocation3], %s219
        %s221 = smul.u32 2, %s19
        %p222 = scmp.lt.s32.totalorder %s221, 5
        %s223 = scalar_select %p222, %s221, 5
        %s224 = smul.addr %s223, 2
        %s225 = smul.addr %s224, 8
        %s226 = scalar_lea.vmem %s0, %s225
        %s227 = smul.u32 2, %s19
        %s228 = smul.u32 2, %s19
        %229 = vst [vmem:[#allocation2] sm:$0xff] 0.0
        %230 = vst [vmem:[#allocation2 + $0x8] sm:$0xff] 0.0
        %v231 = vld [vmem:[%s226] sm:$0xff]
        %v232 = vld [vmem:[%s226 + $0x10] sm:$0xff]
        %v233 = vlaneseq
        %v234 = vand.u32 %v233, 127
        %v235 = vlaneseq
        %v236 = vshrl.u32 %v235, 7
        %v237 = vsub.s32 0, %v236
        %v238 = vrot.slane %v231, %v237
        %240 = vbcast.lane.b32.xlu0 %v238, 256
        %v241 = vpop.permute.xlu0 %240
        %s243 = sor.u32 256, 8
        %244 = vbcast.lane.b32.xlu0 %v238, %s243
        %v245 = vpop.permute.xlu0 %244
        %s247 = sor.u32 256, 16
        %248 = vbcast.lane.b32.xlu0 %v238, %s247
        %v249 = vpop.permute.xlu0 %248
        %s251 = sor.u32 256, 24
        %252 = vbcast.lane.b32.xlu0 %v238, %s251
        %v253 = vpop.permute.xlu0 %252
        %s255 = sor.u32 256, 32
        %256 = vbcast.lane.b32.xlu0 %v238, %s255
        %v257 = vpop.permute.xlu0 %256
        %s259 = sor.u32 256, 40
        %260 = vbcast.lane.b32.xlu0 %v238, %s259
        %v261 = vpop.permute.xlu0 %260
        %s263 = sor.u32 256, 48
        %264 = vbcast.lane.b32.xlu0 %v238, %s263
        %v265 = vpop.permute.xlu0 %264
        %s267 = sor.u32 256, 56
        %268 = vbcast.lane.b32.xlu0 %v238, %s267
        %v269 = vpop.permute.xlu0 %268
        %s271 = sor.u32 256, 64
        %272 = vbcast.lane.b32.xlu0 %v238, %s271
        %v273 = vpop.permute.xlu0 %272
        %s275 = sor.u32 256, 72
        %276 = vbcast.lane.b32.xlu0 %v238, %s275
        %v277 = vpop.permute.xlu0 %276
        %s279 = sor.u32 256, 80
        %280 = vbcast.lane.b32.xlu0 %v238, %s279
        %v281 = vpop.permute.xlu0 %280
        %s283 = sor.u32 256, 88
        %284 = vbcast.lane.b32.xlu0 %v238, %s283
        %v285 = vpop.permute.xlu0 %284
        %s287 = sor.u32 256, 96
        %288 = vbcast.lane.b32.xlu0 %v238, %s287
        %v289 = vpop.permute.xlu0 %288
        %s291 = sor.u32 256, 104
        %292 = vbcast.lane.b32.xlu0 %v238, %s291
        %v293 = vpop.permute.xlu0 %292
        %s295 = sor.u32 256, 112
        %296 = vbcast.lane.b32.xlu0 %v238, %s295
        %v297 = vpop.permute.xlu0 %296
        %s299 = sor.u32 256, 120
        %300 = vbcast.lane.b32.xlu0 %v238, %s299
        %v301 = vpop.permute.xlu0 %300
        %v302 = vlaneseq
        %v303 = vshrl.u32 %v302, 7
        %v304 = vsub.s32 1, %v303
        %v305 = vrot.slane %v231, %v304
        %307 = vbcast.lane.b32.xlu0 %v305, 256
        %v308 = vpop.permute.xlu0 %307
        %s310 = sor.u32 256, 8
        %311 = vbcast.lane.b32.xlu0 %v305, %s310
        %v312 = vpop.permute.xlu0 %311
        %s314 = sor.u32 256, 16
        %315 = vbcast.lane.b32.xlu0 %v305, %s314
        %v316 = vpop.permute.xlu0 %315
        %s318 = sor.u32 256, 24
        %319 = vbcast.lane.b32.xlu0 %v305, %s318
        %v320 = vpop.permute.xlu0 %319
        %s322 = sor.u32 256, 32
        %323 = vbcast.lane.b32.xlu0 %v305, %s322
        %v324 = vpop.permute.xlu0 %323
        %s326 = sor.u32 256, 40
        %327 = vbcast.lane.b32.xlu0 %v305, %s326
        %v328 = vpop.permute.xlu0 %327
        %s330 = sor.u32 256, 48
        %331 = vbcast.lane.b32.xlu0 %v305, %s330
        %v332 = vpop.permute.xlu0 %331
        %s334 = sor.u32 256, 56
        %335 = vbcast.lane.b32.xlu0 %v305, %s334
        %v336 = vpop.permute.xlu0 %335
        %s338 = sor.u32 256, 64
        %339 = vbcast.lane.b32.xlu0 %v305, %s338
        %v340 = vpop.permute.xlu0 %339
        %s342 = sor.u32 256, 72
        %343 = vbcast.lane.b32.xlu0 %v305, %s342
        %v344 = vpop.permute.xlu0 %343
        %s346 = sor.u32 256, 80
        %347 = vbcast.lane.b32.xlu0 %v305, %s346
        %v348 = vpop.permute.xlu0 %347
        %s350 = sor.u32 256, 88
        %351 = vbcast.lane.b32.xlu0 %v305, %s350
        %v352 = vpop.permute.xlu0 %351
        %s354 = sor.u32 256, 96
        %355 = vbcast.lane.b32.xlu0 %v305, %s354
        %v356 = vpop.permute.xlu0 %355
        %s358 = sor.u32 256, 104
        %359 = vbcast.lane.b32.xlu0 %v305, %s358
        %v360 = vpop.permute.xlu0 %359
        %s362 = sor.u32 256, 112
        %363 = vbcast.lane.b32.xlu0 %v305, %s362
        %v364 = vpop.permute.xlu0 %363
        %s366 = sor.u32 256, 120
        %367 = vbcast.lane.b32.xlu0 %v305, %s366
        %v368 = vpop.permute.xlu0 %367
        %v369 = vlaneseq
        %v370 = vshrl.u32 %v369, 7
        %v371 = vsub.s32 2, %v370
        %v372 = vrot.slane %v231, %v371
        %374 = vbcast.lane.b32.xlu0 %v372, 256
        %v375 = vpop.permute.xlu0 %374
        %s377 = sor.u32 256, 8
        %378 = vbcast.lane.b32.xlu0 %v372, %s377
        %v379 = vpop.permute.xlu0 %378
        %s381 = sor.u32 256, 16
        %382 = vbcast.lane.b32.xlu0 %v372, %s381
        %v383 = vpop.permute.xlu0 %382
        %s385 = sor.u32 256, 24
        %386 = vbcast.lane.b32.xlu0 %v372, %s385
        %v387 = vpop.permute.xlu0 %386
        %s389 = sor.u32 256, 32
        %390 = vbcast.lane.b32.xlu0 %v372, %s389
        %v391 = vpop.permute.xlu0 %390
        %s393 = sor.u32 256, 40
        %394 = vbcast.lane.b32.xlu0 %v372, %s393
        %v395 = vpop.permute.xlu0 %394
        %s397 = sor.u32 256, 48
        %398 = vbcast.lane.b32.xlu0 %v372, %s397
        %v399 = vpop.permute.xlu0 %398
        %s401 = sor.u32 256, 56
        %402 = vbcast.lane.b32.xlu0 %v372, %s401
        %v403 = vpop.permute.xlu0 %402
        %s405 = sor.u32 256, 64
        %406 = vbcast.lane.b32.xlu0 %v372, %s405
        %v407 = vpop.permute.xlu0 %406
        %s409 = sor.u32 256, 72
        %410 = vbcast.lane.b32.xlu0 %v372, %s409
        %v411 = vpop.permute.xlu0 %410
        %s413 = sor.u32 256, 80
        %414 = vbcast.lane.b32.xlu0 %v372, %s413
        %v415 = vpop.permute.xlu0 %414
        %s417 = sor.u32 256, 88
        %418 = vbcast.lane.b32.xlu0 %v372, %s417
        %v419 = vpop.permute.xlu0 %418
        %s421 = sor.u32 256, 96
        %422 = vbcast.lane.b32.xlu0 %v372, %s421
        %v423 = vpop.permute.xlu0 %422
        %s425 = sor.u32 256, 104
        %426 = vbcast.lane.b32.xlu0 %v372, %s425
        %v427 = vpop.permute.xlu0 %426
        %s429 = sor.u32 256, 112
        %430 = vbcast.lane.b32.xlu0 %v372, %s429
        %v431 = vpop.permute.xlu0 %430
        %s433 = sor.u32 256, 120
        %434 = vbcast.lane.b32.xlu0 %v372, %s433
        %v435 = vpop.permute.xlu0 %434
        %v436 = vlaneseq
        %v437 = vshrl.u32 %v436, 7
        %v438 = vsub.s32 3, %v437
        %v439 = vrot.slane %v231, %v438
        %441 = vbcast.lane.b32.xlu0 %v439, 256
        %v442 = vpop.permute.xlu0 %441
        %s444 = sor.u32 256, 8
        %445 = vbcast.lane.b32.xlu0 %v439, %s444
        %v446 = vpop.permute.xlu0 %445
        %s448 = sor.u32 256, 16
        %449 = vbcast.lane.b32.xlu0 %v439, %s448
        %v450 = vpop.permute.xlu0 %449
        %s452 = sor.u32 256, 24
        %453 = vbcast.lane.b32.xlu0 %v439, %s452
        %v454 = vpop.permute.xlu0 %453
        %s456 = sor.u32 256, 32
        %457 = vbcast.lane.b32.xlu0 %v439, %s456
        %v458 = vpop.permute.xlu0 %457
        %s460 = sor.u32 256, 40
        %461 = vbcast.lane.b32.xlu0 %v439, %s460
        %v462 = vpop.permute.xlu0 %461
        %s464 = sor.u32 256, 48
        %465 = vbcast.lane.b32.xlu0 %v439, %s464
        %v466 = vpop.permute.xlu0 %465
        %s468 = sor.u32 256, 56
        %469 = vbcast.lane.b32.xlu0 %v439, %s468
        %v470 = vpop.permute.xlu0 %469
        %s472 = sor.u32 256, 64
        %473 = vbcast.lane.b32.xlu0 %v439, %s472
        %v474 = vpop.permute.xlu0 %473
        %s476 = sor.u32 256, 72
        %477 = vbcast.lane.b32.xlu0 %v439, %s476
        %v478 = vpop.permute.xlu0 %477
        %s480 = sor.u32 256, 80
        %481 = vbcast.lane.b32.xlu0 %v439, %s480
        %v482 = vpop.permute.xlu0 %481
        %s484 = sor.u32 256, 88
        %485 = vbcast.lane.b32.xlu0 %v439, %s484
        %v486 = vpop.permute.xlu0 %485
        %s488 = sor.u32 256, 96
        %489 = vbcast.lane.b32.xlu0 %v439, %s488
        %v490 = vpop.permute.xlu0 %489
        %s492 = sor.u32 256, 104
        %493 = vbcast.lane.b32.xlu0 %v439, %s492
        %v494 = vpop.permute.xlu0 %493
        %s496 = sor.u32 256, 112
        %497 = vbcast.lane.b32.xlu0 %v439, %s496
        %v498 = vpop.permute.xlu0 %497
        %s500 = sor.u32 256, 120
        %501 = vbcast.lane.b32.xlu0 %v439, %s500
        %v502 = vpop.permute.xlu0 %501
        %v503 = vlaneseq
        %v504 = vshrl.u32 %v503, 7
        %v505 = vsub.s32 4, %v504
        %v506 = vrot.slane %v231, %v505
        %508 = vbcast.lane.b32.xlu0 %v506, 256
        %v509 = vpop.permute.xlu0 %508
        %s511 = sor.u32 256, 8
        %512 = vbcast.lane.b32.xlu0 %v506, %s511
        %v513 = vpop.permute.xlu0 %512
        %s515 = sor.u32 256, 16
        %516 = vbcast.lane.b32.xlu0 %v506, %s515
        %v517 = vpop.permute.xlu0 %516
        %s519 = sor.u32 256, 24
        %520 = vbcast.lane.b32.xlu0 %v506, %s519
        %v521 = vpop.permute.xlu0 %520
        %s523 = sor.u32 256, 32
        %524 = vbcast.lane.b32.xlu0 %v506, %s523
        %v525 = vpop.permute.xlu0 %524
        %s527 = sor.u32 256, 40
        %528 = vbcast.lane.b32.xlu0 %v506, %s527
        %v529 = vpop.permute.xlu0 %528
        %s531 = sor.u32 256, 48
        %532 = vbcast.lane.b32.xlu0 %v506, %s531
        %v533 = vpop.permute.xlu0 %532
        %s535 = sor.u32 256, 56
        %536 = vbcast.lane.b32.xlu0 %v506, %s535
        %v537 = vpop.permute.xlu0 %536
        %s539 = sor.u32 256, 64
        %540 = vbcast.lane.b32.xlu0 %v506, %s539
        %v541 = vpop.permute.xlu0 %540
        %s543 = sor.u32 256, 72
        %544 = vbcast.lane.b32.xlu0 %v506, %s543
        %v545 = vpop.permute.xlu0 %544
        %s547 = sor.u32 256, 80
        %548 = vbcast.lane.b32.xlu0 %v506, %s547
        %v549 = vpop.permute.xlu0 %548
        %s551 = sor.u32 256, 88
        %552 = vbcast.lane.b32.xlu0 %v506, %s551
        %v553 = vpop.permute.xlu0 %552
        %s555 = sor.u32 256, 96
        %556 = vbcast.lane.b32.xlu0 %v506, %s555
        %v557 = vpop.permute.xlu0 %556
        %s559 = sor.u32 256, 104
        %560 = vbcast.lane.b32.xlu0 %v506, %s559
        %v561 = vpop.permute.xlu0 %560
        %s563 = sor.u32 256, 112
        %564 = vbcast.lane.b32.xlu0 %v506, %s563
        %v565 = vpop.permute.xlu0 %564
        %s567 = sor.u32 256, 120
        %568 = vbcast.lane.b32.xlu0 %v506, %s567
        %v569 = vpop.permute.xlu0 %568
        %v570 = vlaneseq
        %v571 = vshrl.u32 %v570, 7
        %v572 = vsub.s32 5, %v571
        %v573 = vrot.slane %v231, %v572
        %575 = vbcast.lane.b32.xlu0 %v573, 256
        %v576 = vpop.permute.xlu0 %575
        %s578 = sor.u32 256, 8
        %579 = vbcast.lane.b32.xlu0 %v573, %s578
        %v580 = vpop.permute.xlu0 %579
        %s582 = sor.u32 256, 16
        %583 = vbcast.lane.b32.xlu0 %v573, %s582
        %v584 = vpop.permute.xlu0 %583
        %s586 = sor.u32 256, 24
        %587 = vbcast.lane.b32.xlu0 %v573, %s586
        %v588 = vpop.permute.xlu0 %587
        %s590 = sor.u32 256, 32
        %591 = vbcast.lane.b32.xlu0 %v573, %s590
        %v592 = vpop.permute.xlu0 %591
        %s594 = sor.u32 256, 40
        %595 = vbcast.lane.b32.xlu0 %v573, %s594
        %v596 = vpop.permute.xlu0 %595
        %s598 = sor.u32 256, 48
        %599 = vbcast.lane.b32.xlu0 %v573, %s598
        %v600 = vpop.permute.xlu0 %599
        %s602 = sor.u32 256, 56
        %603 = vbcast.lane.b32.xlu0 %v573, %s602
        %v604 = vpop.permute.xlu0 %603
        %s606 = sor.u32 256, 64
        %607 = vbcast.lane.b32.xlu0 %v573, %s606
        %v608 = vpop.permute.xlu0 %607
        %s610 = sor.u32 256, 72
        %611 = vbcast.lane.b32.xlu0 %v573, %s610
        %v612 = vpop.permute.xlu0 %611
        %s614 = sor.u32 256, 80
        %615 = vbcast.lane.b32.xlu0 %v573, %s614
        %v616 = vpop.permute.xlu0 %615
        %s618 = sor.u32 256, 88
        %619 = vbcast.lane.b32.xlu0 %v573, %s618
        %v620 = vpop.permute.xlu0 %619
        %s622 = sor.u32 256, 96
        %623 = vbcast.lane.b32.xlu0 %v573, %s622
        %v624 = vpop.permute.xlu0 %623
        %s626 = sor.u32 256, 104
        %627 = vbcast.lane.b32.xlu0 %v573, %s626
        %v628 = vpop.permute.xlu0 %627
        %s630 = sor.u32 256, 112
        %631 = vbcast.lane.b32.xlu0 %v573, %s630
        %v632 = vpop.permute.xlu0 %631
        %s634 = sor.u32 256, 120
        %635 = vbcast.lane.b32.xlu0 %v573, %s634
        %v636 = vpop.permute.xlu0 %635
        %v637 = vlaneseq
        %v638 = vshrl.u32 %v637, 7
        %v639 = vsub.s32 6, %v638
        %v640 = vrot.slane %v231, %v639
        %642 = vbcast.lane.b32.xlu0 %v640, 256
        %v643 = vpop.permute.xlu0 %642
        %s645 = sor.u32 256, 8
        %646 = vbcast.lane.b32.xlu0 %v640, %s645
        %v647 = vpop.permute.xlu0 %646
        %s649 = sor.u32 256, 16
        %650 = vbcast.lane.b32.xlu0 %v640, %s649
        %v651 = vpop.permute.xlu0 %650
        %s653 = sor.u32 256, 24
        %654 = vbcast.lane.b32.xlu0 %v640, %s653
        %v655 = vpop.permute.xlu0 %654
        %s657 = sor.u32 256, 32
        %658 = vbcast.lane.b32.xlu0 %v640, %s657
        %v659 = vpop.permute.xlu0 %658
        %s661 = sor.u32 256, 40
        %662 = vbcast.lane.b32.xlu0 %v640, %s661
        %v663 = vpop.permute.xlu0 %662
        %s665 = sor.u32 256, 48
        %666 = vbcast.lane.b32.xlu0 %v640, %s665
        %v667 = vpop.permute.xlu0 %666
        %s669 = sor.u32 256, 56
        %670 = vbcast.lane.b32.xlu0 %v640, %s669
        %v671 = vpop.permute.xlu0 %670
        %s673 = sor.u32 256, 64
        %674 = vbcast.lane.b32.xlu0 %v640, %s673
        %v675 = vpop.permute.xlu0 %674
        %s677 = sor.u32 256, 72
        %678 = vbcast.lane.b32.xlu0 %v640, %s677
        %v679 = vpop.permute.xlu0 %678
        %s681 = sor.u32 256, 80
        %682 = vbcast.lane.b32.xlu0 %v640, %s681
        %v683 = vpop.permute.xlu0 %682
        %s685 = sor.u32 256, 88
        %686 = vbcast.lane.b32.xlu0 %v640, %s685
        %v687 = vpop.permute.xlu0 %686
        %s689 = sor.u32 256, 96
        %690 = vbcast.lane.b32.xlu0 %v640, %s689
        %v691 = vpop.permute.xlu0 %690
        %s693 = sor.u32 256, 104
        %694 = vbcast.lane.b32.xlu0 %v640, %s693
        %v695 = vpop.permute.xlu0 %694
        %s697 = sor.u32 256, 112
        %698 = vbcast.lane.b32.xlu0 %v640, %s697
        %v699 = vpop.permute.xlu0 %698
        %s701 = sor.u32 256, 120
        %702 = vbcast.lane.b32.xlu0 %v640, %s701
        %v703 = vpop.permute.xlu0 %702
        %v704 = vlaneseq
        %v705 = vshrl.u32 %v704, 7
        %v706 = vsub.s32 7, %v705
        %v707 = vrot.slane %v231, %v706
        %709 = vbcast.lane.b32.xlu0 %v707, 256
        %v710 = vpop.permute.xlu0 %709
        %s712 = sor.u32 256, 8
        %713 = vbcast.lane.b32.xlu0 %v707, %s712
        %v714 = vpop.permute.xlu0 %713
        %s716 = sor.u32 256, 16
        %717 = vbcast.lane.b32.xlu0 %v707, %s716
        %v718 = vpop.permute.xlu0 %717
        %s720 = sor.u32 256, 24
        %721 = vbcast.lane.b32.xlu0 %v707, %s720
        %v722 = vpop.permute.xlu0 %721
        %s724 = sor.u32 256, 32
        %725 = vbcast.lane.b32.xlu0 %v707, %s724
        %v726 = vpop.permute.xlu0 %725
        %s728 = sor.u32 256, 40
        %729 = vbcast.lane.b32.xlu0 %v707, %s728
        %v730 = vpop.permute.xlu0 %729
        %s732 = sor.u32 256, 48
        %733 = vbcast.lane.b32.xlu0 %v707, %s732
        %v734 = vpop.permute.xlu0 %733
        %s736 = sor.u32 256, 56
        %737 = vbcast.lane.b32.xlu0 %v707, %s736
        %v738 = vpop.permute.xlu0 %737
        %s740 = sor.u32 256, 64
        %741 = vbcast.lane.b32.xlu0 %v707, %s740
        %v742 = vpop.permute.xlu0 %741
        %s744 = sor.u32 256, 72
        %745 = vbcast.lane.b32.xlu0 %v707, %s744
        %v746 = vpop.permute.xlu0 %745
        %s748 = sor.u32 256, 80
        %749 = vbcast.lane.b32.xlu0 %v707, %s748
        %v750 = vpop.permute.xlu0 %749
        %s752 = sor.u32 256, 88
        %753 = vbcast.lane.b32.xlu0 %v707, %s752
        %v754 = vpop.permute.xlu0 %753
        %s756 = sor.u32 256, 96
        %757 = vbcast.lane.b32.xlu0 %v707, %s756
        %v758 = vpop.permute.xlu0 %757
        %s760 = sor.u32 256, 104
        %761 = vbcast.lane.b32.xlu0 %v707, %s760
        %v762 = vpop.permute.xlu0 %761
        %s764 = sor.u32 256, 112
        %765 = vbcast.lane.b32.xlu0 %v707, %s764
        %v766 = vpop.permute.xlu0 %765
        %s768 = sor.u32 256, 120
        %769 = vbcast.lane.b32.xlu0 %v707, %s768
        %v770 = vpop.permute.xlu0 %769
        %v771 = vlaneseq
        %v772 = vshrl.u32 %v771, 7
        %v773 = vsub.s32 0, %v772
        %v774 = vrot.slane %v232, %v773
        %776 = vbcast.lane.b32.xlu0 %v774, 256
        %v777 = vpop.permute.xlu0 %776
        %s779 = sor.u32 256, 8
        %780 = vbcast.lane.b32.xlu0 %v774, %s779
        %v781 = vpop.permute.xlu0 %780
        %s783 = sor.u32 256, 16
        %784 = vbcast.lane.b32.xlu0 %v774, %s783
        %v785 = vpop.permute.xlu0 %784
        %s787 = sor.u32 256, 24
        %788 = vbcast.lane.b32.xlu0 %v774, %s787
        %v789 = vpop.permute.xlu0 %788
        %s791 = sor.u32 256, 32
        %792 = vbcast.lane.b32.xlu0 %v774, %s791
        %v793 = vpop.permute.xlu0 %792
        %s795 = sor.u32 256, 40
        %796 = vbcast.lane.b32.xlu0 %v774, %s795
        %v797 = vpop.permute.xlu0 %796
        %s799 = sor.u32 256, 48
        %800 = vbcast.lane.b32.xlu0 %v774, %s799
        %v801 = vpop.permute.xlu0 %800
        %s803 = sor.u32 256, 56
        %804 = vbcast.lane.b32.xlu0 %v774, %s803
        %v805 = vpop.permute.xlu0 %804
        %s807 = sor.u32 256, 64
        %808 = vbcast.lane.b32.xlu0 %v774, %s807
        %v809 = vpop.permute.xlu0 %808
        %s811 = sor.u32 256, 72
        %812 = vbcast.lane.b32.xlu0 %v774, %s811
        %v813 = vpop.permute.xlu0 %812
        %s815 = sor.u32 256, 80
        %816 = vbcast.lane.b32.xlu0 %v774, %s815
        %v817 = vpop.permute.xlu0 %816
        %s819 = sor.u32 256, 88
        %820 = vbcast.lane.b32.xlu0 %v774, %s819
        %v821 = vpop.permute.xlu0 %820
        %s823 = sor.u32 256, 96
        %824 = vbcast.lane.b32.xlu0 %v774, %s823
        %v825 = vpop.permute.xlu0 %824
        %s827 = sor.u32 256, 104
        %828 = vbcast.lane.b32.xlu0 %v774, %s827
        %v829 = vpop.permute.xlu0 %828
        %s831 = sor.u32 256, 112
        %832 = vbcast.lane.b32.xlu0 %v774, %s831
        %v833 = vpop.permute.xlu0 %832
        %s835 = sor.u32 256, 120
        %836 = vbcast.lane.b32.xlu0 %v774, %s835
        %v837 = vpop.permute.xlu0 %836
        %v838 = vlaneseq
        %v839 = vshrl.u32 %v838, 7
        %v840 = vsub.s32 1, %v839
        %v841 = vrot.slane %v232, %v840
        %843 = vbcast.lane.b32.xlu0 %v841, 256
        %v844 = vpop.permute.xlu0 %843
        %s846 = sor.u32 256, 8
        %847 = vbcast.lane.b32.xlu0 %v841, %s846
        %v848 = vpop.permute.xlu0 %847
        %s850 = sor.u32 256, 16
        %851 = vbcast.lane.b32.xlu0 %v841, %s850
        %v852 = vpop.permute.xlu0 %851
        %s854 = sor.u32 256, 24
        %855 = vbcast.lane.b32.xlu0 %v841, %s854
        %v856 = vpop.permute.xlu0 %855
        %s858 = sor.u32 256, 32
        %859 = vbcast.lane.b32.xlu0 %v841, %s858
        %v860 = vpop.permute.xlu0 %859
        %s862 = sor.u32 256, 40
        %863 = vbcast.lane.b32.xlu0 %v841, %s862
        %v864 = vpop.permute.xlu0 %863
        %s866 = sor.u32 256, 48
        %867 = vbcast.lane.b32.xlu0 %v841, %s866
        %v868 = vpop.permute.xlu0 %867
        %s870 = sor.u32 256, 56
        %871 = vbcast.lane.b32.xlu0 %v841, %s870
        %v872 = vpop.permute.xlu0 %871
        %s874 = sor.u32 256, 64
        %875 = vbcast.lane.b32.xlu0 %v841, %s874
        %v876 = vpop.permute.xlu0 %875
        %s878 = sor.u32 256, 72
        %879 = vbcast.lane.b32.xlu0 %v841, %s878
        %v880 = vpop.permute.xlu0 %879
        %s882 = sor.u32 256, 80
        %883 = vbcast.lane.b32.xlu0 %v841, %s882
        %v884 = vpop.permute.xlu0 %883
        %s886 = sor.u32 256, 88
        %887 = vbcast.lane.b32.xlu0 %v841, %s886
        %v888 = vpop.permute.xlu0 %887
        %s890 = sor.u32 256, 96
        %891 = vbcast.lane.b32.xlu0 %v841, %s890
        %v892 = vpop.permute.xlu0 %891
        %s894 = sor.u32 256, 104
        %895 = vbcast.lane.b32.xlu0 %v841, %s894
        %v896 = vpop.permute.xlu0 %895
        %s898 = sor.u32 256, 112
        %899 = vbcast.lane.b32.xlu0 %v841, %s898
        %v900 = vpop.permute.xlu0 %899
        %s902 = sor.u32 256, 120
        %903 = vbcast.lane.b32.xlu0 %v841, %s902
        %v904 = vpop.permute.xlu0 %903
        %v905 = vlaneseq
        %v906 = vshrl.u32 %v905, 7
        %v907 = vsub.s32 2, %v906
        %v908 = vrot.slane %v232, %v907
        %910 = vbcast.lane.b32.xlu0 %v908, 256
        %v911 = vpop.permute.xlu0 %910
        %s913 = sor.u32 256, 8
        %914 = vbcast.lane.b32.xlu0 %v908, %s913
        %v915 = vpop.permute.xlu0 %914
        %s917 = sor.u32 256, 16
        %918 = vbcast.lane.b32.xlu0 %v908, %s917
        %v919 = vpop.permute.xlu0 %918
        %s921 = sor.u32 256, 24
        %922 = vbcast.lane.b32.xlu0 %v908, %s921
        %v923 = vpop.permute.xlu0 %922
        %s925 = sor.u32 256, 32
        %926 = vbcast.lane.b32.xlu0 %v908, %s925
        %v927 = vpop.permute.xlu0 %926
        %s929 = sor.u32 256, 40
        %930 = vbcast.lane.b32.xlu0 %v908, %s929
        %v931 = vpop.permute.xlu0 %930
        %s933 = sor.u32 256, 48
        %934 = vbcast.lane.b32.xlu0 %v908, %s933
        %v935 = vpop.permute.xlu0 %934
        %s937 = sor.u32 256, 56
        %938 = vbcast.lane.b32.xlu0 %v908, %s937
        %v939 = vpop.permute.xlu0 %938
        %s941 = sor.u32 256, 64
        %942 = vbcast.lane.b32.xlu0 %v908, %s941
        %v943 = vpop.permute.xlu0 %942
        %s945 = sor.u32 256, 72
        %946 = vbcast.lane.b32.xlu0 %v908, %s945
        %v947 = vpop.permute.xlu0 %946
        %s949 = sor.u32 256, 80
        %950 = vbcast.lane.b32.xlu0 %v908, %s949
        %v951 = vpop.permute.xlu0 %950
        %s953 = sor.u32 256, 88
        %954 = vbcast.lane.b32.xlu0 %v908, %s953
        %v955 = vpop.permute.xlu0 %954
        %s957 = sor.u32 256, 96
        %958 = vbcast.lane.b32.xlu0 %v908, %s957
        %v959 = vpop.permute.xlu0 %958
        %s961 = sor.u32 256, 104
        %962 = vbcast.lane.b32.xlu0 %v908, %s961
        %v963 = vpop.permute.xlu0 %962
        %s965 = sor.u32 256, 112
        %966 = vbcast.lane.b32.xlu0 %v908, %s965
        %v967 = vpop.permute.xlu0 %966
        %s969 = sor.u32 256, 120
        %970 = vbcast.lane.b32.xlu0 %v908, %s969
        %v971 = vpop.permute.xlu0 %970
        %v972 = vlaneseq
        %v973 = vshrl.u32 %v972, 7
        %v974 = vsub.s32 3, %v973
        %v975 = vrot.slane %v232, %v974
        %977 = vbcast.lane.b32.xlu0 %v975, 256
        %v978 = vpop.permute.xlu0 %977
        %s980 = sor.u32 256, 8
        %981 = vbcast.lane.b32.xlu0 %v975, %s980
        %v982 = vpop.permute.xlu0 %981
        %s984 = sor.u32 256, 16
        %985 = vbcast.lane.b32.xlu0 %v975, %s984
        %v986 = vpop.permute.xlu0 %985
        %s988 = sor.u32 256, 24
        %989 = vbcast.lane.b32.xlu0 %v975, %s988
        %v990 = vpop.permute.xlu0 %989
        %s992 = sor.u32 256, 32
        %993 = vbcast.lane.b32.xlu0 %v975, %s992
        %v994 = vpop.permute.xlu0 %993
        %s996 = sor.u32 256, 40
        %997 = vbcast.lane.b32.xlu0 %v975, %s996
        %v998 = vpop.permute.xlu0 %997
        %s1000 = sor.u32 256, 48
        %1001 = vbcast.lane.b32.xlu0 %v975, %s1000
        %v1002 = vpop.permute.xlu0 %1001
        %s1004 = sor.u32 256, 56
        %1005 = vbcast.lane.b32.xlu0 %v975, %s1004
        %v1006 = vpop.permute.xlu0 %1005
        %s1008 = sor.u32 256, 64
        %1009 = vbcast.lane.b32.xlu0 %v975, %s1008
        %v1010 = vpop.permute.xlu0 %1009
        %s1012 = sor.u32 256, 72
        %1013 = vbcast.lane.b32.xlu0 %v975, %s1012
        %v1014 = vpop.permute.xlu0 %1013
        %s1016 = sor.u32 256, 80
        %1017 = vbcast.lane.b32.xlu0 %v975, %s1016
        %v1018 = vpop.permute.xlu0 %1017
        %s1020 = sor.u32 256, 88
        %1021 = vbcast.lane.b32.xlu0 %v975, %s1020
        %v1022 = vpop.permute.xlu0 %1021
        %s1024 = sor.u32 256, 96
        %1025 = vbcast.lane.b32.xlu0 %v975, %s1024
        %v1026 = vpop.permute.xlu0 %1025
        %s1028 = sor.u32 256, 104
        %1029 = vbcast.lane.b32.xlu0 %v975, %s1028
        %v1030 = vpop.permute.xlu0 %1029
        %s1032 = sor.u32 256, 112
        %1033 = vbcast.lane.b32.xlu0 %v975, %s1032
        %v1034 = vpop.permute.xlu0 %1033
        %s1036 = sor.u32 256, 120
        %1037 = vbcast.lane.b32.xlu0 %v975, %s1036
        %v1038 = vpop.permute.xlu0 %1037
        %v1039 = vlaneseq
        %v1040 = vshrl.u32 %v1039, 7
        %v1041 = vsub.s32 4, %v1040
        %v1042 = vrot.slane %v232, %v1041
        %1044 = vbcast.lane.b32.xlu0 %v1042, 256
        %v1045 = vpop.permute.xlu0 %1044
        %s1047 = sor.u32 256, 8
        %1048 = vbcast.lane.b32.xlu0 %v1042, %s1047
        %v1049 = vpop.permute.xlu0 %1048
        %s1051 = sor.u32 256, 16
        %1052 = vbcast.lane.b32.xlu0 %v1042, %s1051
        %v1053 = vpop.permute.xlu0 %1052
        %s1055 = sor.u32 256, 24
        %1056 = vbcast.lane.b32.xlu0 %v1042, %s1055
        %v1057 = vpop.permute.xlu0 %1056
        %s1059 = sor.u32 256, 32
        %1060 = vbcast.lane.b32.xlu0 %v1042, %s1059
        %v1061 = vpop.permute.xlu0 %1060
        %s1063 = sor.u32 256, 40
        %1064 = vbcast.lane.b32.xlu0 %v1042, %s1063
        %v1065 = vpop.permute.xlu0 %1064
        %s1067 = sor.u32 256, 48
        %1068 = vbcast.lane.b32.xlu0 %v1042, %s1067
        %v1069 = vpop.permute.xlu0 %1068
        %s1071 = sor.u32 256, 56
        %1072 = vbcast.lane.b32.xlu0 %v1042, %s1071
        %v1073 = vpop.permute.xlu0 %1072
        %s1075 = sor.u32 256, 64
        %1076 = vbcast.lane.b32.xlu0 %v1042, %s1075
        %v1077 = vpop.permute.xlu0 %1076
        %s1079 = sor.u32 256, 72
        %1080 = vbcast.lane.b32.xlu0 %v1042, %s1079
        %v1081 = vpop.permute.xlu0 %1080
        %s1083 = sor.u32 256, 80
        %1084 = vbcast.lane.b32.xlu0 %v1042, %s1083
        %v1085 = vpop.permute.xlu0 %1084
        %s1087 = sor.u32 256, 88
        %1088 = vbcast.lane.b32.xlu0 %v1042, %s1087
        %v1089 = vpop.permute.xlu0 %1088
        %s1091 = sor.u32 256, 96
        %1092 = vbcast.lane.b32.xlu0 %v1042, %s1091
        %v1093 = vpop.permute.xlu0 %1092
        %s1095 = sor.u32 256, 104
        %1096 = vbcast.lane.b32.xlu0 %v1042, %s1095
        %v1097 = vpop.permute.xlu0 %1096
        %s1099 = sor.u32 256, 112
        %1100 = vbcast.lane.b32.xlu0 %v1042, %s1099
        %v1101 = vpop.permute.xlu0 %1100
        %s1103 = sor.u32 256, 120
        %1104 = vbcast.lane.b32.xlu0 %v1042, %s1103
        %v1105 = vpop.permute.xlu0 %1104
        %v1106 = vlaneseq
        %v1107 = vshrl.u32 %v1106, 7
        %v1108 = vsub.s32 5, %v1107
        %v1109 = vrot.slane %v232, %v1108
        %1111 = vbcast.lane.b32.xlu0 %v1109, 256
        %v1112 = vpop.permute.xlu0 %1111
        %s1114 = sor.u32 256, 8
        %1115 = vbcast.lane.b32.xlu0 %v1109, %s1114
        %v1116 = vpop.permute.xlu0 %1115
        %s1118 = sor.u32 256, 16
        %1119 = vbcast.lane.b32.xlu0 %v1109, %s1118
        %v1120 = vpop.permute.xlu0 %1119
        %s1122 = sor.u32 256, 24
        %1123 = vbcast.lane.b32.xlu0 %v1109, %s1122
        %v1124 = vpop.permute.xlu0 %1123
        %s1126 = sor.u32 256, 32
        %1127 = vbcast.lane.b32.xlu0 %v1109, %s1126
        %v1128 = vpop.permute.xlu0 %1127
        %s1130 = sor.u32 256, 40
        %1131 = vbcast.lane.b32.xlu0 %v1109, %s1130
        %v1132 = vpop.permute.xlu0 %1131
        %s1134 = sor.u32 256, 48
        %1135 = vbcast.lane.b32.xlu0 %v1109, %s1134
        %v1136 = vpop.permute.xlu0 %1135
        %s1138 = sor.u32 256, 56
        %1139 = vbcast.lane.b32.xlu0 %v1109, %s1138
        %v1140 = vpop.permute.xlu0 %1139
        %s1142 = sor.u32 256, 64
        %1143 = vbcast.lane.b32.xlu0 %v1109, %s1142
        %v1144 = vpop.permute.xlu0 %1143
        %s1146 = sor.u32 256, 72
        %1147 = vbcast.lane.b32.xlu0 %v1109, %s1146
        %v1148 = vpop.permute.xlu0 %1147
        %s1150 = sor.u32 256, 80
        %1151 = vbcast.lane.b32.xlu0 %v1109, %s1150
        %v1152 = vpop.permute.xlu0 %1151
        %s1154 = sor.u32 256, 88
        %1155 = vbcast.lane.b32.xlu0 %v1109, %s1154
        %v1156 = vpop.permute.xlu0 %1155
        %s1158 = sor.u32 256, 96
        %1159 = vbcast.lane.b32.xlu0 %v1109, %s1158
        %v1160 = vpop.permute.xlu0 %1159
        %s1162 = sor.u32 256, 104
        %1163 = vbcast.lane.b32.xlu0 %v1109, %s1162
        %v1164 = vpop.permute.xlu0 %1163
        %s1166 = sor.u32 256, 112
        %1167 = vbcast.lane.b32.xlu0 %v1109, %s1166
        %v1168 = vpop.permute.xlu0 %1167
        %s1170 = sor.u32 256, 120
        %1171 = vbcast.lane.b32.xlu0 %v1109, %s1170
        %v1172 = vpop.permute.xlu0 %1171
        %v1173 = vlaneseq
        %v1174 = vshrl.u32 %v1173, 7
        %v1175 = vsub.s32 6, %v1174
        %v1176 = vrot.slane %v232, %v1175
        %1178 = vbcast.lane.b32.xlu0 %v1176, 256
        %v1179 = vpop.permute.xlu0 %1178
        %s1181 = sor.u32 256, 8
        %1182 = vbcast.lane.b32.xlu0 %v1176, %s1181
        %v1183 = vpop.permute.xlu0 %1182
        %s1185 = sor.u32 256, 16
        %1186 = vbcast.lane.b32.xlu0 %v1176, %s1185
        %v1187 = vpop.permute.xlu0 %1186
        %s1189 = sor.u32 256, 24
        %1190 = vbcast.lane.b32.xlu0 %v1176, %s1189
        %v1191 = vpop.permute.xlu0 %1190
        %s1193 = sor.u32 256, 32
        %1194 = vbcast.lane.b32.xlu0 %v1176, %s1193
        %v1195 = vpop.permute.xlu0 %1194
        %s1197 = sor.u32 256, 40
        %1198 = vbcast.lane.b32.xlu0 %v1176, %s1197
        %v1199 = vpop.permute.xlu0 %1198
        %s1201 = sor.u32 256, 48
        %1202 = vbcast.lane.b32.xlu0 %v1176, %s1201
        %v1203 = vpop.permute.xlu0 %1202
        %s1205 = sor.u32 256, 56
        %1206 = vbcast.lane.b32.xlu0 %v1176, %s1205
        %v1207 = vpop.permute.xlu0 %1206
        %s1209 = sor.u32 256, 64
        %1210 = vbcast.lane.b32.xlu0 %v1176, %s1209
        %v1211 = vpop.permute.xlu0 %1210
        %s1213 = sor.u32 256, 72
        %1214 = vbcast.lane.b32.xlu0 %v1176, %s1213
        %v1215 = vpop.permute.xlu0 %1214
        %s1217 = sor.u32 256, 80
        %1218 = vbcast.lane.b32.xlu0 %v1176, %s1217
        %v1219 = vpop.permute.xlu0 %1218
        %s1221 = sor.u32 256, 88
        %1222 = vbcast.lane.b32.xlu0 %v1176, %s1221
        %v1223 = vpop.permute.xlu0 %1222
        %s1225 = sor.u32 256, 96
        %1226 = vbcast.lane.b32.xlu0 %v1176, %s1225
        %v1227 = vpop.permute.xlu0 %1226
        %s1229 = sor.u32 256, 104
        %1230 = vbcast.lane.b32.xlu0 %v1176, %s1229
        %v1231 = vpop.permute.xlu0 %1230
        %s1233 = sor.u32 256, 112
        %1234 = vbcast.lane.b32.xlu0 %v1176, %s1233
        %v1235 = vpop.permute.xlu0 %1234
        %s1237 = sor.u32 256, 120
        %1238 = vbcast.lane.b32.xlu0 %v1176, %s1237
        %v1239 = vpop.permute.xlu0 %1238
        %v1240 = vlaneseq
        %v1241 = vshrl.u32 %v1240, 7
        %v1242 = vsub.s32 7, %v1241
        %v1243 = vrot.slane %v232, %v1242
        %1245 = vbcast.lane.b32.xlu0 %v1243, 256
        %v1246 = vpop.permute.xlu0 %1245
        %s1248 = sor.u32 256, 8
        %1249 = vbcast.lane.b32.xlu0 %v1243, %s1248
        %v1250 = vpop.permute.xlu0 %1249
        %s1252 = sor.u32 256, 16
        %1253 = vbcast.lane.b32.xlu0 %v1243, %s1252
        %v1254 = vpop.permute.xlu0 %1253
        %s1256 = sor.u32 256, 24
        %1257 = vbcast.lane.b32.xlu0 %v1243, %s1256
        %v1258 = vpop.permute.xlu0 %1257
        %s1260 = sor.u32 256, 32
        %1261 = vbcast.lane.b32.xlu0 %v1243, %s1260
        %v1262 = vpop.permute.xlu0 %1261
        %s1264 = sor.u32 256, 40
        %1265 = vbcast.lane.b32.xlu0 %v1243, %s1264
        %v1266 = vpop.permute.xlu0 %1265
        %s1268 = sor.u32 256, 48
        %1269 = vbcast.lane.b32.xlu0 %v1243, %s1268
        %v1270 = vpop.permute.xlu0 %1269
        %s1272 = sor.u32 256, 56
        %1273 = vbcast.lane.b32.xlu0 %v1243, %s1272
        %v1274 = vpop.permute.xlu0 %1273
        %s1276 = sor.u32 256, 64
        %1277 = vbcast.lane.b32.xlu0 %v1243, %s1276
        %v1278 = vpop.permute.xlu0 %1277
        %s1280 = sor.u32 256, 72
        %1281 = vbcast.lane.b32.xlu0 %v1243, %s1280
        %v1282 = vpop.permute.xlu0 %1281
        %s1284 = sor.u32 256, 80
        %1285 = vbcast.lane.b32.xlu0 %v1243, %s1284
        %v1286 = vpop.permute.xlu0 %1285
        %s1288 = sor.u32 256, 88
        %1289 = vbcast.lane.b32.xlu0 %v1243, %s1288
        %v1290 = vpop.permute.xlu0 %1289
        %s1292 = sor.u32 256, 96
        %1293 = vbcast.lane.b32.xlu0 %v1243, %s1292
        %v1294 = vpop.permute.xlu0 %1293
        %s1296 = sor.u32 256, 104
        %1297 = vbcast.lane.b32.xlu0 %v1243, %s1296
        %v1298 = vpop.permute.xlu0 %1297
        %s1300 = sor.u32 256, 112
        %1301 = vbcast.lane.b32.xlu0 %v1243, %s1300
        %v1302 = vpop.permute.xlu0 %1301
        %s1304 = sor.u32 256, 120
        %1305 = vbcast.lane.b32.xlu0 %v1243, %s1304
        %v1306 = vpop.permute.xlu0 %1305
        %vm1307 = vcmp.eq.s32.totalorder %v241, %v234
        %vm1308 = vcmp.eq.s32.totalorder %v245, %v234
        %vm1309 = vcmp.eq.s32.totalorder %v249, %v234
        %vm1310 = vcmp.eq.s32.totalorder %v253, %v234
        %vm1311 = vcmp.eq.s32.totalorder %v257, %v234
        %vm1312 = vcmp.eq.s32.totalorder %v261, %v234
        %vm1313 = vcmp.eq.s32.totalorder %v265, %v234
        %vm1314 = vcmp.eq.s32.totalorder %v269, %v234
        %vm1315 = vcmp.eq.s32.totalorder %v273, %v234
        %vm1316 = vcmp.eq.s32.totalorder %v277, %v234
        %vm1317 = vcmp.eq.s32.totalorder %v281, %v234
        %vm1318 = vcmp.eq.s32.totalorder %v285, %v234
        %vm1319 = vcmp.eq.s32.totalorder %v289, %v234
        %vm1320 = vcmp.eq.s32.totalorder %v293, %v234
        %vm1321 = vcmp.eq.s32.totalorder %v297, %v234
        %vm1322 = vcmp.eq.s32.totalorder %v301, %v234
        %vm1323 = vcmp.eq.s32.totalorder %v308, %v234
        %vm1324 = vcmp.eq.s32.totalorder %v312, %v234
        %vm1325 = vcmp.eq.s32.totalorder %v316, %v234
        %vm1326 = vcmp.eq.s32.totalorder %v320, %v234
        %vm1327 = vcmp.eq.s32.totalorder %v324, %v234
        %vm1328 = vcmp.eq.s32.totalorder %v328, %v234
        %vm1329 = vcmp.eq.s32.totalorder %v332, %v234
        %vm1330 = vcmp.eq.s32.totalorder %v336, %v234
        %vm1331 = vcmp.eq.s32.totalorder %v340, %v234
        %vm1332 = vcmp.eq.s32.totalorder %v344, %v234
        %vm1333 = vcmp.eq.s32.totalorder %v348, %v234
        %vm1334 = vcmp.eq.s32.totalorder %v352, %v234
        %vm1335 = vcmp.eq.s32.totalorder %v356, %v234
        %vm1336 = vcmp.eq.s32.totalorder %v360, %v234
        %vm1337 = vcmp.eq.s32.totalorder %v364, %v234
        %vm1338 = vcmp.eq.s32.totalorder %v368, %v234
        %vm1339 = vcmp.eq.s32.totalorder %v375, %v234
        %vm1340 = vcmp.eq.s32.totalorder %v379, %v234
        %vm1341 = vcmp.eq.s32.totalorder %v383, %v234
        %vm1342 = vcmp.eq.s32.totalorder %v387, %v234
        %vm1343 = vcmp.eq.s32.totalorder %v391, %v234
        %vm1344 = vcmp.eq.s32.totalorder %v395, %v234
        %vm1345 = vcmp.eq.s32.totalorder %v399, %v234
        %vm1346 = vcmp.eq.s32.totalorder %v403, %v234
        %vm1347 = vcmp.eq.s32.totalorder %v407, %v234
        %vm1348 = vcmp.eq.s32.totalorder %v411, %v234
        %vm1349 = vcmp.eq.s32.totalorder %v415, %v234
        %vm1350 = vcmp.eq.s32.totalorder %v419, %v234
        %vm1351 = vcmp.eq.s32.totalorder %v423, %v234
        %vm1352 = vcmp.eq.s32.totalorder %v427, %v234
        %vm1353 = vcmp.eq.s32.totalorder %v431, %v234
        %vm1354 = vcmp.eq.s32.totalorder %v435, %v234
        %vm1355 = vcmp.eq.s32.totalorder %v442, %v234
        %vm1356 = vcmp.eq.s32.totalorder %v446, %v234
        %vm1357 = vcmp.eq.s32.totalorder %v450, %v234
        %vm1358 = vcmp.eq.s32.totalorder %v454, %v234
        %vm1359 = vcmp.eq.s32.totalorder %v458, %v234
        %vm1360 = vcmp.eq.s32.totalorder %v462, %v234
        %vm1361 = vcmp.eq.s32.totalorder %v466, %v234
        %vm1362 = vcmp.eq.s32.totalorder %v470, %v234
        %vm1363 = vcmp.eq.s32.totalorder %v474, %v234
        %vm1364 = vcmp.eq.s32.totalorder %v478, %v234
        %vm1365 = vcmp.eq.s32.totalorder %v482, %v234
        %vm1366 = vcmp.eq.s32.totalorder %v486, %v234
        %vm1367 = vcmp.eq.s32.totalorder %v490, %v234
        %vm1368 = vcmp.eq.s32.totalorder %v494, %v234
        %vm1369 = vcmp.eq.s32.totalorder %v498, %v234
        %vm1370 = vcmp.eq.s32.totalorder %v502, %v234
        %vm1371 = vcmp.eq.s32.totalorder %v509, %v234
        %vm1372 = vcmp.eq.s32.totalorder %v513, %v234
        %vm1373 = vcmp.eq.s32.totalorder %v517, %v234
        %vm1374 = vcmp.eq.s32.totalorder %v521, %v234
        %vm1375 = vcmp.eq.s32.totalorder %v525, %v234
        %vm1376 = vcmp.eq.s32.totalorder %v529, %v234
        %vm1377 = vcmp.eq.s32.totalorder %v533, %v234
        %vm1378 = vcmp.eq.s32.totalorder %v537, %v234
        %vm1379 = vcmp.eq.s32.totalorder %v541, %v234
        %vm1380 = vcmp.eq.s32.totalorder %v545, %v234
        %vm1381 = vcmp.eq.s32.totalorder %v549, %v234
        %vm1382 = vcmp.eq.s32.totalorder %v553, %v234
        %vm1383 = vcmp.eq.s32.totalorder %v557, %v234
        %vm1384 = vcmp.eq.s32.totalorder %v561, %v234
        %vm1385 = vcmp.eq.s32.totalorder %v565, %v234
        %vm1386 = vcmp.eq.s32.totalorder %v569, %v234
        %vm1387 = vcmp.eq.s32.totalorder %v576, %v234
        %vm1388 = vcmp.eq.s32.totalorder %v580, %v234
        %vm1389 = vcmp.eq.s32.totalorder %v584, %v234
        %vm1390 = vcmp.eq.s32.totalorder %v588, %v234
        %vm1391 = vcmp.eq.s32.totalorder %v592, %v234
        %vm1392 = vcmp.eq.s32.totalorder %v596, %v234
        %vm1393 = vcmp.eq.s32.totalorder %v600, %v234
        %vm1394 = vcmp.eq.s32.totalorder %v604, %v234
        %vm1395 = vcmp.eq.s32.totalorder %v608, %v234
        %vm1396 = vcmp.eq.s32.totalorder %v612, %v234
        %vm1397 = vcmp.eq.s32.totalorder %v616, %v234
        %vm1398 = vcmp.eq.s32.totalorder %v620, %v234
        %vm1399 = vcmp.eq.s32.totalorder %v624, %v234
        %vm1400 = vcmp.eq.s32.totalorder %v628, %v234
        %vm1401 = vcmp.eq.s32.totalorder %v632, %v234
        %vm1402 = vcmp.eq.s32.totalorder %v636, %v234
        %vm1403 = vcmp.eq.s32.totalorder %v643, %v234
        %vm1404 = vcmp.eq.s32.totalorder %v647, %v234
        %vm1405 = vcmp.eq.s32.totalorder %v651, %v234
        %vm1406 = vcmp.eq.s32.totalorder %v655, %v234
        %vm1407 = vcmp.eq.s32.totalorder %v659, %v234
        %vm1408 = vcmp.eq.s32.totalorder %v663, %v234
        %vm1409 = vcmp.eq.s32.totalorder %v667, %v234
        %vm1410 = vcmp.eq.s32.totalorder %v671, %v234
        %vm1411 = vcmp.eq.s32.totalorder %v675, %v234
        %vm1412 = vcmp.eq.s32.totalorder %v679, %v234
        %vm1413 = vcmp.eq.s32.totalorder %v683, %v234
        %vm1414 = vcmp.eq.s32.totalorder %v687, %v234
        %vm1415 = vcmp.eq.s32.totalorder %v691, %v234
        %vm1416 = vcmp.eq.s32.totalorder %v695, %v234
        %vm1417 = vcmp.eq.s32.totalorder %v699, %v234
        %vm1418 = vcmp.eq.s32.totalorder %v703, %v234
        %vm1419 = vcmp.eq.s32.totalorder %v710, %v234
        %vm1420 = vcmp.eq.s32.totalorder %v714, %v234
        %vm1421 = vcmp.eq.s32.totalorder %v718, %v234
        %vm1422 = vcmp.eq.s32.totalorder %v722, %v234
        %vm1423 = vcmp.eq.s32.totalorder %v726, %v234
        %vm1424 = vcmp.eq.s32.totalorder %v730, %v234
        %vm1425 = vcmp.eq.s32.totalorder %v734, %v234
        %vm1426 = vcmp.eq.s32.totalorder %v738, %v234
        %vm1427 = vcmp.eq.s32.totalorder %v742, %v234
        %vm1428 = vcmp.eq.s32.totalorder %v746, %v234
        %vm1429 = vcmp.eq.s32.totalorder %v750, %v234
        %vm1430 = vcmp.eq.s32.totalorder %v754, %v234
        %vm1431 = vcmp.eq.s32.totalorder %v758, %v234
        %vm1432 = vcmp.eq.s32.totalorder %v762, %v234
        %vm1433 = vcmp.eq.s32.totalorder %v766, %v234
        %vm1434 = vcmp.eq.s32.totalorder %v770, %v234
        %vm1435 = vcmp.eq.s32.totalorder %v777, %v234
        %vm1436 = vcmp.eq.s32.totalorder %v781, %v234
        %vm1437 = vcmp.eq.s32.totalorder %v785, %v234
        %vm1438 = vcmp.eq.s32.totalorder %v789, %v234
        %vm1439 = vcmp.eq.s32.totalorder %v793, %v234
        %vm1440 = vcmp.eq.s32.totalorder %v797, %v234
        %vm1441 = vcmp.eq.s32.totalorder %v801, %v234
        %vm1442 = vcmp.eq.s32.totalorder %v805, %v234
        %vm1443 = vcmp.eq.s32.totalorder %v809, %v234
        %vm1444 = vcmp.eq.s32.totalorder %v813, %v234
        %vm1445 = vcmp.eq.s32.totalorder %v817, %v234
        %vm1446 = vcmp.eq.s32.totalorder %v821, %v234
        %vm1447 = vcmp.eq.s32.totalorder %v825, %v234
        %vm1448 = vcmp.eq.s32.totalorder %v829, %v234
        %vm1449 = vcmp.eq.s32.totalorder %v833, %v234
        %vm1450 = vcmp.eq.s32.totalorder %v837, %v234
        %vm1451 = vcmp.eq.s32.totalorder %v844, %v234
        %vm1452 = vcmp.eq.s32.totalorder %v848, %v234
        %vm1453 = vcmp.eq.s32.totalorder %v852, %v234
        %vm1454 = vcmp.eq.s32.totalorder %v856, %v234
        %vm1455 = vcmp.eq.s32.totalorder %v860, %v234
        %vm1456 = vcmp.eq.s32.totalorder %v864, %v234
        %vm1457 = vcmp.eq.s32.totalorder %v868, %v234
        %vm1458 = vcmp.eq.s32.totalorder %v872, %v234
        %vm1459 = vcmp.eq.s32.totalorder %v876, %v234
        %vm1460 = vcmp.eq.s32.totalorder %v880, %v234
        %vm1461 = vcmp.eq.s32.totalorder %v884, %v234
        %vm1462 = vcmp.eq.s32.totalorder %v888, %v234
        %vm1463 = vcmp.eq.s32.totalorder %v892, %v234
        %vm1464 = vcmp.eq.s32.totalorder %v896, %v234
        %vm1465 = vcmp.eq.s32.totalorder %v900, %v234
        %vm1466 = vcmp.eq.s32.totalorder %v904, %v234
        %vm1467 = vcmp.eq.s32.totalorder %v911, %v234
        %vm1468 = vcmp.eq.s32.totalorder %v915, %v234
        %vm1469 = vcmp.eq.s32.totalorder %v919, %v234
        %vm1470 = vcmp.eq.s32.totalorder %v923, %v234
        %vm1471 = vcmp.eq.s32.totalorder %v927, %v234
        %vm1472 = vcmp.eq.s32.totalorder %v931, %v234
        %vm1473 = vcmp.eq.s32.totalorder %v935, %v234
        %vm1474 = vcmp.eq.s32.totalorder %v939, %v234
        %vm1475 = vcmp.eq.s32.totalorder %v943, %v234
        %vm1476 = vcmp.eq.s32.totalorder %v947, %v234
        %vm1477 = vcmp.eq.s32.totalorder %v951, %v234
        %vm1478 = vcmp.eq.s32.totalorder %v955, %v234
        %vm1479 = vcmp.eq.s32.totalorder %v959, %v234
        %vm1480 = vcmp.eq.s32.totalorder %v963, %v234
        %vm1481 = vcmp.eq.s32.totalorder %v967, %v234
        %vm1482 = vcmp.eq.s32.totalorder %v971, %v234
        %vm1483 = vcmp.eq.s32.totalorder %v978, %v234
        %vm1484 = vcmp.eq.s32.totalorder %v982, %v234
        %vm1485 = vcmp.eq.s32.totalorder %v986, %v234
        %vm1486 = vcmp.eq.s32.totalorder %v990, %v234
        %vm1487 = vcmp.eq.s32.totalorder %v994, %v234
        %vm1488 = vcmp.eq.s32.totalorder %v998, %v234
        %vm1489 = vcmp.eq.s32.totalorder %v1002, %v234
        %vm1490 = vcmp.eq.s32.totalorder %v1006, %v234
        %vm1491 = vcmp.eq.s32.totalorder %v1010, %v234
        %vm1492 = vcmp.eq.s32.totalorder %v1014, %v234
        %vm1493 = vcmp.eq.s32.totalorder %v1018, %v234
        %vm1494 = vcmp.eq.s32.totalorder %v1022, %v234
        %vm1495 = vcmp.eq.s32.totalorder %v1026, %v234
        %vm1496 = vcmp.eq.s32.totalorder %v1030, %v234
        %vm1497 = vcmp.eq.s32.totalorder %v1034, %v234
        %vm1498 = vcmp.eq.s32.totalorder %v1038, %v234
        %vm1499 = vcmp.eq.s32.totalorder %v1045, %v234
        %vm1500 = vcmp.eq.s32.totalorder %v1049, %v234
        %vm1501 = vcmp.eq.s32.totalorder %v1053, %v234
        %vm1502 = vcmp.eq.s32.totalorder %v1057, %v234
        %vm1503 = vcmp.eq.s32.totalorder %v1061, %v234
        %vm1504 = vcmp.eq.s32.totalorder %v1065, %v234
        %vm1505 = vcmp.eq.s32.totalorder %v1069, %v234
        %vm1506 = vcmp.eq.s32.totalorder %v1073, %v234
        %vm1507 = vcmp.eq.s32.totalorder %v1077, %v234
        %vm1508 = vcmp.eq.s32.totalorder %v1081, %v234
        %vm1509 = vcmp.eq.s32.totalorder %v1085, %v234
        %vm1510 = vcmp.eq.s32.totalorder %v1089, %v234
        %vm1511 = vcmp.eq.s32.totalorder %v1093, %v234
        %vm1512 = vcmp.eq.s32.totalorder %v1097, %v234
        %vm1513 = vcmp.eq.s32.totalorder %v1101, %v234
        %vm1514 = vcmp.eq.s32.totalorder %v1105, %v234
        %vm1515 = vcmp.eq.s32.totalorder %v1112, %v234
        %vm1516 = vcmp.eq.s32.totalorder %v1116, %v234
        %vm1517 = vcmp.eq.s32.totalorder %v1120, %v234
        %vm1518 = vcmp.eq.s32.totalorder %v1124, %v234
        %vm1519 = vcmp.eq.s32.totalorder %v1128, %v234
        %vm1520 = vcmp.eq.s32.totalorder %v1132, %v234
        %vm1521 = vcmp.eq.s32.totalorder %v1136, %v234
        %vm1522 = vcmp.eq.s32.totalorder %v1140, %v234
        %vm1523 = vcmp.eq.s32.totalorder %v1144, %v234
        %vm1524 = vcmp.eq.s32.totalorder %v1148, %v234
        %vm1525 = vcmp.eq.s32.totalorder %v1152, %v234
        %vm1526 = vcmp.eq.s32.totalorder %v1156, %v234
        %vm1527 = vcmp.eq.s32.totalorder %v1160, %v234
        %vm1528 = vcmp.eq.s32.totalorder %v1164, %v234
        %vm1529 = vcmp.eq.s32.totalorder %v1168, %v234
        %vm1530 = vcmp.eq.s32.totalorder %v1172, %v234
        %vm1531 = vcmp.eq.s32.totalorder %v1179, %v234
        %vm1532 = vcmp.eq.s32.totalorder %v1183, %v234
        %vm1533 = vcmp.eq.s32.totalorder %v1187, %v234
        %vm1534 = vcmp.eq.s32.totalorder %v1191, %v234
        %vm1535 = vcmp.eq.s32.totalorder %v1195, %v234
        %vm1536 = vcmp.eq.s32.totalorder %v1199, %v234
        %vm1537 = vcmp.eq.s32.totalorder %v1203, %v234
        %vm1538 = vcmp.eq.s32.totalorder %v1207, %v234
        %vm1539 = vcmp.eq.s32.totalorder %v1211, %v234
        %vm1540 = vcmp.eq.s32.totalorder %v1215, %v234
        %vm1541 = vcmp.eq.s32.totalorder %v1219, %v234
        %vm1542 = vcmp.eq.s32.totalorder %v1223, %v234
        %vm1543 = vcmp.eq.s32.totalorder %v1227, %v234
        %vm1544 = vcmp.eq.s32.totalorder %v1231, %v234
        %vm1545 = vcmp.eq.s32.totalorder %v1235, %v234
        %vm1546 = vcmp.eq.s32.totalorder %v1239, %v234
        %vm1547 = vcmp.eq.s32.totalorder %v1246, %v234
        %vm1548 = vcmp.eq.s32.totalorder %v1250, %v234
        %vm1549 = vcmp.eq.s32.totalorder %v1254, %v234
        %vm1550 = vcmp.eq.s32.totalorder %v1258, %v234
        %vm1551 = vcmp.eq.s32.totalorder %v1262, %v234
        %vm1552 = vcmp.eq.s32.totalorder %v1266, %v234
        %vm1553 = vcmp.eq.s32.totalorder %v1270, %v234
        %vm1554 = vcmp.eq.s32.totalorder %v1274, %v234
        %vm1555 = vcmp.eq.s32.totalorder %v1278, %v234
        %vm1556 = vcmp.eq.s32.totalorder %v1282, %v234
        %vm1557 = vcmp.eq.s32.totalorder %v1286, %v234
        %vm1558 = vcmp.eq.s32.totalorder %v1290, %v234
        %vm1559 = vcmp.eq.s32.totalorder %v1294, %v234
        %vm1560 = vcmp.eq.s32.totalorder %v1298, %v234
        %vm1561 = vcmp.eq.s32.totalorder %v1302, %v234
        %vm1562 = vcmp.eq.s32.totalorder %v1306, %v234
        %v1563 = vsel %vm1307, 1, 0
        %v1564 = vsel %vm1308, 1, 0
        %v1565 = vsel %vm1309, 1, 0
        %v1566 = vsel %vm1310, 1, 0
        %v1567 = vsel %vm1311, 1, 0
        %v1568 = vsel %vm1312, 1, 0
        %v1569 = vsel %vm1313, 1, 0
        %v1570 = vsel %vm1314, 1, 0
        %v1571 = vsel %vm1315, 1, 0
        %v1572 = vsel %vm1316, 1, 0
        %v1573 = vsel %vm1317, 1, 0
        %v1574 = vsel %vm1318, 1, 0
        %v1575 = vsel %vm1319, 1, 0
        %v1576 = vsel %vm1320, 1, 0
        %v1577 = vsel %vm1321, 1, 0
        %v1578 = vsel %vm1322, 1, 0
        %v1579 = vsel %vm1323, 1, 0
        %v1580 = vsel %vm1324, 1, 0
        %v1581 = vsel %vm1325, 1, 0
        %v1582 = vsel %vm1326, 1, 0
        %v1583 = vsel %vm1327, 1, 0
        %v1584 = vsel %vm1328, 1, 0
        %v1585 = vsel %vm1329, 1, 0
        %v1586 = vsel %vm1330, 1, 0
        %v1587 = vsel %vm1331, 1, 0
        %v1588 = vsel %vm1332, 1, 0
        %v1589 = vsel %vm1333, 1, 0
        %v1590 = vsel %vm1334, 1, 0
        %v1591 = vsel %vm1335, 1, 0
        %v1592 = vsel %vm1336, 1, 0
        %v1593 = vsel %vm1337, 1, 0
        %v1594 = vsel %vm1338, 1, 0
        %v1595 = vsel %vm1339, 1, 0
        %v1596 = vsel %vm1340, 1, 0
        %v1597 = vsel %vm1341, 1, 0
        %v1598 = vsel %vm1342, 1, 0
        %v1599 = vsel %vm1343, 1, 0
        %v1600 = vsel %vm1344, 1, 0
        %v1601 = vsel %vm1345, 1, 0
        %v1602 = vsel %vm1346, 1, 0
        %v1603 = vsel %vm1347, 1, 0
        %v1604 = vsel %vm1348, 1, 0
        %v1605 = vsel %vm1349, 1, 0
        %v1606 = vsel %vm1350, 1, 0
        %v1607 = vsel %vm1351, 1, 0
        %v1608 = vsel %vm1352, 1, 0
        %v1609 = vsel %vm1353, 1, 0
        %v1610 = vsel %vm1354, 1, 0
        %v1611 = vsel %vm1355, 1, 0
        %v1612 = vsel %vm1356, 1, 0
        %v1613 = vsel %vm1357, 1, 0
        %v1614 = vsel %vm1358, 1, 0
        %v1615 = vsel %vm1359, 1, 0
        %v1616 = vsel %vm1360, 1, 0
        %v1617 = vsel %vm1361, 1, 0
        %v1618 = vsel %vm1362, 1, 0
        %v1619 = vsel %vm1363, 1, 0
        %v1620 = vsel %vm1364, 1, 0
        %v1621 = vsel %vm1365, 1, 0
        %v1622 = vsel %vm1366, 1, 0
        %v1623 = vsel %vm1367, 1, 0
        %v1624 = vsel %vm1368, 1, 0
        %v1625 = vsel %vm1369, 1, 0
        %v1626 = vsel %vm1370, 1, 0
        %v1627 = vsel %vm1371, 1, 0
        %v1628 = vsel %vm1372, 1, 0
        %v1629 = vsel %vm1373, 1, 0
        %v1630 = vsel %vm1374, 1, 0
        %v1631 = vsel %vm1375, 1, 0
        %v1632 = vsel %vm1376, 1, 0
        %v1633 = vsel %vm1377, 1, 0
        %v1634 = vsel %vm1378, 1, 0
        %v1635 = vsel %vm1379, 1, 0
        %v1636 = vsel %vm1380, 1, 0
        %v1637 = vsel %vm1381, 1, 0
        %v1638 = vsel %vm1382, 1, 0
        %v1639 = vsel %vm1383, 1, 0
        %v1640 = vsel %vm1384, 1, 0
        %v1641 = vsel %vm1385, 1, 0
        %v1642 = vsel %vm1386, 1, 0
        %v1643 = vsel %vm1387, 1, 0
        %v1644 = vsel %vm1388, 1, 0
        %v1645 = vsel %vm1389, 1, 0
        %v1646 = vsel %vm1390, 1, 0
        %v1647 = vsel %vm1391, 1, 0
        %v1648 = vsel %vm1392, 1, 0
        %v1649 = vsel %vm1393, 1, 0
        %v1650 = vsel %vm1394, 1, 0
        %v1651 = vsel %vm1395, 1, 0
        %v1652 = vsel %vm1396, 1, 0
        %v1653 = vsel %vm1397, 1, 0
        %v1654 = vsel %vm1398, 1, 0
        %v1655 = vsel %vm1399, 1, 0
        %v1656 = vsel %vm1400, 1, 0
        %v1657 = vsel %vm1401, 1, 0
        %v1658 = vsel %vm1402, 1, 0
        %v1659 = vsel %vm1403, 1, 0
        %v1660 = vsel %vm1404, 1, 0
        %v1661 = vsel %vm1405, 1, 0
        %v1662 = vsel %vm1406, 1, 0
        %v1663 = vsel %vm1407, 1, 0
        %v1664 = vsel %vm1408, 1, 0
        %v1665 = vsel %vm1409, 1, 0
        %v1666 = vsel %vm1410, 1, 0
        %v1667 = vsel %vm1411, 1, 0
        %v1668 = vsel %vm1412, 1, 0
        %v1669 = vsel %vm1413, 1, 0
        %v1670 = vsel %vm1414, 1, 0
        %v1671 = vsel %vm1415, 1, 0
        %v1672 = vsel %vm1416, 1, 0
        %v1673 = vsel %vm1417, 1, 0
        %v1674 = vsel %vm1418, 1, 0
        %v1675 = vsel %vm1419, 1, 0
        %v1676 = vsel %vm1420, 1, 0
        %v1677 = vsel %vm1421, 1, 0
        %v1678 = vsel %vm1422, 1, 0
        %v1679 = vsel %vm1423, 1, 0
        %v1680 = vsel %vm1424, 1, 0
        %v1681 = vsel %vm1425, 1, 0
        %v1682 = vsel %vm1426, 1, 0
        %v1683 = vsel %vm1427, 1, 0
        %v1684 = vsel %vm1428, 1, 0
        %v1685 = vsel %vm1429, 1, 0
        %v1686 = vsel %vm1430, 1, 0
        %v1687 = vsel %vm1431, 1, 0
        %v1688 = vsel %vm1432, 1, 0
        %v1689 = vsel %vm1433, 1, 0
        %v1690 = vsel %vm1434, 1, 0
        %v1691 = vsel %vm1435, 1, 0
        %v1692 = vsel %vm1436, 1, 0
        %v1693 = vsel %vm1437, 1, 0
        %v1694 = vsel %vm1438, 1, 0
        %v1695 = vsel %vm1439, 1, 0
        %v1696 = vsel %vm1440, 1, 0
        %v1697 = vsel %vm1441, 1, 0
        %v1698 = vsel %vm1442, 1, 0
        %v1699 = vsel %vm1443, 1, 0
        %v1700 = vsel %vm1444, 1, 0
        %v1701 = vsel %vm1445, 1, 0
        %v1702 = vsel %vm1446, 1, 0
        %v1703 = vsel %vm1447, 1, 0
        %v1704 = vsel %vm1448, 1, 0
        %v1705 = vsel %vm1449, 1, 0
        %v1706 = vsel %vm1450, 1, 0
        %v1707 = vsel %vm1451, 1, 0
        %v1708 = vsel %vm1452, 1, 0
        %v1709 = vsel %vm1453, 1, 0
        %v1710 = vsel %vm1454, 1, 0
        %v1711 = vsel %vm1455, 1, 0
        %v1712 = vsel %vm1456, 1, 0
        %v1713 = vsel %vm1457, 1, 0
        %v1714 = vsel %vm1458, 1, 0
        %v1715 = vsel %vm1459, 1, 0
        %v1716 = vsel %vm1460, 1, 0
        %v1717 = vsel %vm1461, 1, 0
        %v1718 = vsel %vm1462, 1, 0
        %v1719 = vsel %vm1463, 1, 0
        %v1720 = vsel %vm1464, 1, 0
        %v1721 = vsel %vm1465, 1, 0
        %v1722 = vsel %vm1466, 1, 0
        %v1723 = vsel %vm1467, 1, 0
        %v1724 = vsel %vm1468, 1, 0
        %v1725 = vsel %vm1469, 1, 0
        %v1726 = vsel %vm1470, 1, 0
        %v1727 = vsel %vm1471, 1, 0
        %v1728 = vsel %vm1472, 1, 0
        %v1729 = vsel %vm1473, 1, 0
        %v1730 = vsel %vm1474, 1, 0
        %v1731 = vsel %vm1475, 1, 0
        %v1732 = vsel %vm1476, 1, 0
        %v1733 = vsel %vm1477, 1, 0
        %v1734 = vsel %vm1478, 1, 0
        %v1735 = vsel %vm1479, 1, 0
        %v1736 = vsel %vm1480, 1, 0
        %v1737 = vsel %vm1481, 1, 0
        %v1738 = vsel %vm1482, 1, 0
        %v1739 = vsel %vm1483, 1, 0
        %v1740 = vsel %vm1484, 1, 0
        %v1741 = vsel %vm1485, 1, 0
        %v1742 = vsel %vm1486, 1, 0
        %v1743 = vsel %vm1487, 1, 0
        %v1744 = vsel %vm1488, 1, 0
        %v1745 = vsel %vm1489, 1, 0
        %v1746 = vsel %vm1490, 1, 0
        %v1747 = vsel %vm1491, 1, 0
        %v1748 = vsel %vm1492, 1, 0
        %v1749 = vsel %vm1493, 1, 0
        %v1750 = vsel %vm1494, 1, 0
        %v1751 = vsel %vm1495, 1, 0
        %v1752 = vsel %vm1496, 1, 0
        %v1753 = vsel %vm1497, 1, 0
        %v1754 = vsel %vm1498, 1, 0
        %v1755 = vsel %vm1499, 1, 0
        %v1756 = vsel %vm1500, 1, 0
        %v1757 = vsel %vm1501, 1, 0
        %v1758 = vsel %vm1502, 1, 0
        %v1759 = vsel %vm1503, 1, 0
        %v1760 = vsel %vm1504, 1, 0
        %v1761 = vsel %vm1505, 1, 0
        %v1762 = vsel %vm1506, 1, 0
        %v1763 = vsel %vm1507, 1, 0
        %v1764 = vsel %vm1508, 1, 0
        %v1765 = vsel %vm1509, 1, 0
        %v1766 = vsel %vm1510, 1, 0
        %v1767 = vsel %vm1511, 1, 0
        %v1768 = vsel %vm1512, 1, 0
        %v1769 = vsel %vm1513, 1, 0
        %v1770 = vsel %vm1514, 1, 0
        %v1771 = vsel %vm1515, 1, 0
        %v1772 = vsel %vm1516, 1, 0
        %v1773 = vsel %vm1517, 1, 0
        %v1774 = vsel %vm1518, 1, 0
        %v1775 = vsel %vm1519, 1, 0
        %v1776 = vsel %vm1520, 1, 0
        %v1777 = vsel %vm1521, 1, 0
        %v1778 = vsel %vm1522, 1, 0
        %v1779 = vsel %vm1523, 1, 0
        %v1780 = vsel %vm1524, 1, 0
        %v1781 = vsel %vm1525, 1, 0
        %v1782 = vsel %vm1526, 1, 0
        %v1783 = vsel %vm1527, 1, 0
        %v1784 = vsel %vm1528, 1, 0
        %v1785 = vsel %vm1529, 1, 0
        %v1786 = vsel %vm1530, 1, 0
        %v1787 = vsel %vm1531, 1, 0
        %v1788 = vsel %vm1532, 1, 0
        %v1789 = vsel %vm1533, 1, 0
        %v1790 = vsel %vm1534, 1, 0
        %v1791 = vsel %vm1535, 1, 0
        %v1792 = vsel %vm1536, 1, 0
        %v1793 = vsel %vm1537, 1, 0
        %v1794 = vsel %vm1538, 1, 0
        %v1795 = vsel %vm1539, 1, 0
        %v1796 = vsel %vm1540, 1, 0
        %v1797 = vsel %vm1541, 1, 0
        %v1798 = vsel %vm1542, 1, 0
        %v1799 = vsel %vm1543, 1, 0
        %v1800 = vsel %vm1544, 1, 0
        %v1801 = vsel %vm1545, 1, 0
        %v1802 = vsel %vm1546, 1, 0
        %v1803 = vsel %vm1547, 1, 0
        %v1804 = vsel %vm1548, 1, 0
        %v1805 = vsel %vm1549, 1, 0
        %v1806 = vsel %vm1550, 1, 0
        %v1807 = vsel %vm1551, 1, 0
        %v1808 = vsel %vm1552, 1, 0
        %v1809 = vsel %vm1553, 1, 0
        %v1810 = vsel %vm1554, 1, 0
        %v1811 = vsel %vm1555, 1, 0
        %v1812 = vsel %vm1556, 1, 0
        %v1813 = vsel %vm1557, 1, 0
        %v1814 = vsel %vm1558, 1, 0
        %v1815 = vsel %vm1559, 1, 0
        %v1816 = vsel %vm1560, 1, 0
        %v1817 = vsel %vm1561, 1, 0
        %v1818 = vsel %vm1562, 1, 0
        %v1819 = vcvt.s32.f32 %v1563
        %v1820 = vcvt.s32.f32 %v1564
        %v1821 = vcvt.s32.f32 %v1565
        %v1822 = vcvt.s32.f32 %v1566
        %v1823 = vcvt.s32.f32 %v1567
        %v1824 = vcvt.s32.f32 %v1568
        %v1825 = vcvt.s32.f32 %v1569
        %v1826 = vcvt.s32.f32 %v1570
        %v1827 = vcvt.s32.f32 %v1571
        %v1828 = vcvt.s32.f32 %v1572
        %v1829 = vcvt.s32.f32 %v1573
        %v1830 = vcvt.s32.f32 %v1574
        %v1831 = vcvt.s32.f32 %v1575
        %v1832 = vcvt.s32.f32 %v1576
        %v1833 = vcvt.s32.f32 %v1577
        %v1834 = vcvt.s32.f32 %v1578
        %v1835 = vcvt.s32.f32 %v1579
        %v1836 = vcvt.s32.f32 %v1580
        %v1837 = vcvt.s32.f32 %v1581
        %v1838 = vcvt.s32.f32 %v1582
        %v1839 = vcvt.s32.f32 %v1583
        %v1840 = vcvt.s32.f32 %v1584
        %v1841 = vcvt.s32.f32 %v1585
        %v1842 = vcvt.s32.f32 %v1586
        %v1843 = vcvt.s32.f32 %v1587
        %v1844 = vcvt.s32.f32 %v1588
        %v1845 = vcvt.s32.f32 %v1589
        %v1846 = vcvt.s32.f32 %v1590
        %v1847 = vcvt.s32.f32 %v1591
        %v1848 = vcvt.s32.f32 %v1592
        %v1849 = vcvt.s32.f32 %v1593
        %v1850 = vcvt.s32.f32 %v1594
        %v1851 = vcvt.s32.f32 %v1595
        %v1852 = vcvt.s32.f32 %v1596
        %v1853 = vcvt.s32.f32 %v1597
        %v1854 = vcvt.s32.f32 %v1598
        %v1855 = vcvt.s32.f32 %v1599
        %v1856 = vcvt.s32.f32 %v1600
        %v1857 = vcvt.s32.f32 %v1601
        %v1858 = vcvt.s32.f32 %v1602
        %v1859 = vcvt.s32.f32 %v1603
        %v1860 = vcvt.s32.f32 %v1604
        %v1861 = vcvt.s32.f32 %v1605
        %v1862 = vcvt.s32.f32 %v1606
        %v1863 = vcvt.s32.f32 %v1607
        %v1864 = vcvt.s32.f32 %v1608
        %v1865 = vcvt.s32.f32 %v1609
        %v1866 = vcvt.s32.f32 %v1610
        %v1867 = vcvt.s32.f32 %v1611
        %v1868 = vcvt.s32.f32 %v1612
        %v1869 = vcvt.s32.f32 %v1613
        %v1870 = vcvt.s32.f32 %v1614
        %v1871 = vcvt.s32.f32 %v1615
        %v1872 = vcvt.s32.f32 %v1616
        %v1873 = vcvt.s32.f32 %v1617
        %v1874 = vcvt.s32.f32 %v1618
        %v1875 = vcvt.s32.f32 %v1619
        %v1876 = vcvt.s32.f32 %v1620
        %v1877 = vcvt.s32.f32 %v1621
        %v1878 = vcvt.s32.f32 %v1622
        %v1879 = vcvt.s32.f32 %v1623
        %v1880 = vcvt.s32.f32 %v1624
        %v1881 = vcvt.s32.f32 %v1625
        %v1882 = vcvt.s32.f32 %v1626
        %v1883 = vcvt.s32.f32 %v1627
        %v1884 = vcvt.s32.f32 %v1628
        %v1885 = vcvt.s32.f32 %v1629
        %v1886 = vcvt.s32.f32 %v1630
        %v1887 = vcvt.s32.f32 %v1631
        %v1888 = vcvt.s32.f32 %v1632
        %v1889 = vcvt.s32.f32 %v1633
        %v1890 = vcvt.s32.f32 %v1634
        %v1891 = vcvt.s32.f32 %v1635
        %v1892 = vcvt.s32.f32 %v1636
        %v1893 = vcvt.s32.f32 %v1637
        %v1894 = vcvt.s32.f32 %v1638
        %v1895 = vcvt.s32.f32 %v1639
        %v1896 = vcvt.s32.f32 %v1640
        %v1897 = vcvt.s32.f32 %v1641
        %v1898 = vcvt.s32.f32 %v1642
        %v1899 = vcvt.s32.f32 %v1643
        %v1900 = vcvt.s32.f32 %v1644
        %v1901 = vcvt.s32.f32 %v1645
        %v1902 = vcvt.s32.f32 %v1646
        %v1903 = vcvt.s32.f32 %v1647
        %v1904 = vcvt.s32.f32 %v1648
        %v1905 = vcvt.s32.f32 %v1649
        %v1906 = vcvt.s32.f32 %v1650
        %v1907 = vcvt.s32.f32 %v1651
        %v1908 = vcvt.s32.f32 %v1652
        %v1909 = vcvt.s32.f32 %v1653
        %v1910 = vcvt.s32.f32 %v1654
        %v1911 = vcvt.s32.f32 %v1655
        %v1912 = vcvt.s32.f32 %v1656
        %v1913 = vcvt.s32.f32 %v1657
        %v1914 = vcvt.s32.f32 %v1658
        %v1915 = vcvt.s32.f32 %v1659
        %v1916 = vcvt.s32.f32 %v1660
        %v1917 = vcvt.s32.f32 %v1661
        %v1918 = vcvt.s32.f32 %v1662
        %v1919 = vcvt.s32.f32 %v1663
        %v1920 = vcvt.s32.f32 %v1664
        %v1921 = vcvt.s32.f32 %v1665
        %v1922 = vcvt.s32.f32 %v1666
        %v1923 = vcvt.s32.f32 %v1667
        %v1924 = vcvt.s32.f32 %v1668
        %v1925 = vcvt.s32.f32 %v1669
        %v1926 = vcvt.s32.f32 %v1670
        %v1927 = vcvt.s32.f32 %v1671
        %v1928 = vcvt.s32.f32 %v1672
        %v1929 = vcvt.s32.f32 %v1673
        %v1930 = vcvt.s32.f32 %v1674
        %v1931 = vcvt.s32.f32 %v1675
        %v1932 = vcvt.s32.f32 %v1676
        %v1933 = vcvt.s32.f32 %v1677
        %v1934 = vcvt.s32.f32 %v1678
        %v1935 = vcvt.s32.f32 %v1679
        %v1936 = vcvt.s32.f32 %v1680
        %v1937 = vcvt.s32.f32 %v1681
        %v1938 = vcvt.s32.f32 %v1682
        %v1939 = vcvt.s32.f32 %v1683
        %v1940 = vcvt.s32.f32 %v1684
        %v1941 = vcvt.s32.f32 %v1685
        %v1942 = vcvt.s32.f32 %v1686
        %v1943 = vcvt.s32.f32 %v1687
        %v1944 = vcvt.s32.f32 %v1688
        %v1945 = vcvt.s32.f32 %v1689
        %v1946 = vcvt.s32.f32 %v1690
        %v1947 = vcvt.s32.f32 %v1691
        %v1948 = vcvt.s32.f32 %v1692
        %v1949 = vcvt.s32.f32 %v1693
        %v1950 = vcvt.s32.f32 %v1694
        %v1951 = vcvt.s32.f32 %v1695
        %v1952 = vcvt.s32.f32 %v1696
        %v1953 = vcvt.s32.f32 %v1697
        %v1954 = vcvt.s32.f32 %v1698
        %v1955 = vcvt.s32.f32 %v1699
        %v1956 = vcvt.s32.f32 %v1700
        %v1957 = vcvt.s32.f32 %v1701
        %v1958 = vcvt.s32.f32 %v1702
        %v1959 = vcvt.s32.f32 %v1703
        %v1960 = vcvt.s32.f32 %v1704
        %v1961 = vcvt.s32.f32 %v1705
        %v1962 = vcvt.s32.f32 %v1706
        %v1963 = vcvt.s32.f32 %v1707
        %v1964 = vcvt.s32.f32 %v1708
        %v1965 = vcvt.s32.f32 %v1709
        %v1966 = vcvt.s32.f32 %v1710
        %v1967 = vcvt.s32.f32 %v1711
        %v1968 = vcvt.s32.f32 %v1712
        %v1969 = vcvt.s32.f32 %v1713
        %v1970 = vcvt.s32.f32 %v1714
        %v1971 = vcvt.s32.f32 %v1715
        %v1972 = vcvt.s32.f32 %v1716
        %v1973 = vcvt.s32.f32 %v1717
        %v1974 = vcvt.s32.f32 %v1718
        %v1975 = vcvt.s32.f32 %v1719
        %v1976 = vcvt.s32.f32 %v1720
        %v1977 = vcvt.s32.f32 %v1721
        %v1978 = vcvt.s32.f32 %v1722
        %v1979 = vcvt.s32.f32 %v1723
        %v1980 = vcvt.s32.f32 %v1724
        %v1981 = vcvt.s32.f32 %v1725
        %v1982 = vcvt.s32.f32 %v1726
        %v1983 = vcvt.s32.f32 %v1727
        %v1984 = vcvt.s32.f32 %v1728
        %v1985 = vcvt.s32.f32 %v1729
        %v1986 = vcvt.s32.f32 %v1730
        %v1987 = vcvt.s32.f32 %v1731
        %v1988 = vcvt.s32.f32 %v1732
        %v1989 = vcvt.s32.f32 %v1733
        %v1990 = vcvt.s32.f32 %v1734
        %v1991 = vcvt.s32.f32 %v1735
        %v1992 = vcvt.s32.f32 %v1736
        %v1993 = vcvt.s32.f32 %v1737
        %v1994 = vcvt.s32.f32 %v1738
        %v1995 = vcvt.s32.f32 %v1739
        %v1996 = vcvt.s32.f32 %v1740
        %v1997 = vcvt.s32.f32 %v1741
        %v1998 = vcvt.s32.f32 %v1742
        %v1999 = vcvt.s32.f32 %v1743
        %v2000 = vcvt.s32.f32 %v1744
        %v2001 = vcvt.s32.f32 %v1745
        %v2002 = vcvt.s32.f32 %v1746
        %v2003 = vcvt.s32.f32 %v1747
        %v2004 = vcvt.s32.f32 %v1748
        %v2005 = vcvt.s32.f32 %v1749
        %v2006 = vcvt.s32.f32 %v1750
        %v2007 = vcvt.s32.f32 %v1751
        %v2008 = vcvt.s32.f32 %v1752
        %v2009 = vcvt.s32.f32 %v1753
        %v2010 = vcvt.s32.f32 %v1754
        %v2011 = vcvt.s32.f32 %v1755
        %v2012 = vcvt.s32.f32 %v1756
        %v2013 = vcvt.s32.f32 %v1757
        %v2014 = vcvt.s32.f32 %v1758
        %v2015 = vcvt.s32.f32 %v1759
        %v2016 = vcvt.s32.f32 %v1760
        %v2017 = vcvt.s32.f32 %v1761
        %v2018 = vcvt.s32.f32 %v1762
        %v2019 = vcvt.s32.f32 %v1763
        %v2020 = vcvt.s32.f32 %v1764
        %v2021 = vcvt.s32.f32 %v1765
        %v2022 = vcvt.s32.f32 %v1766
        %v2023 = vcvt.s32.f32 %v1767
        %v2024 = vcvt.s32.f32 %v1768
        %v2025 = vcvt.s32.f32 %v1769
        %v2026 = vcvt.s32.f32 %v1770
        %v2027 = vcvt.s32.f32 %v1771
        %v2028 = vcvt.s32.f32 %v1772
        %v2029 = vcvt.s32.f32 %v1773
        %v2030 = vcvt.s32.f32 %v1774
        %v2031 = vcvt.s32.f32 %v1775
        %v2032 = vcvt.s32.f32 %v1776
        %v2033 = vcvt.s32.f32 %v1777
        %v2034 = vcvt.s32.f32 %v1778
        %v2035 = vcvt.s32.f32 %v1779
        %v2036 = vcvt.s32.f32 %v1780
        %v2037 = vcvt.s32.f32 %v1781
        %v2038 = vcvt.s32.f32 %v1782
        %v2039 = vcvt.s32.f32 %v1783
        %v2040 = vcvt.s32.f32 %v1784
        %v2041 = vcvt.s32.f32 %v1785
        %v2042 = vcvt.s32.f32 %v1786
        %v2043 = vcvt.s32.f32 %v1787
        %v2044 = vcvt.s32.f32 %v1788
        %v2045 = vcvt.s32.f32 %v1789
        %v2046 = vcvt.s32.f32 %v1790
        %v2047 = vcvt.s32.f32 %v1791
        %v2048 = vcvt.s32.f32 %v1792
        %v2049 = vcvt.s32.f32 %v1793
        %v2050 = vcvt.s32.f32 %v1794
        %v2051 = vcvt.s32.f32 %v1795
        %v2052 = vcvt.s32.f32 %v1796
        %v2053 = vcvt.s32.f32 %v1797
        %v2054 = vcvt.s32.f32 %v1798
        %v2055 = vcvt.s32.f32 %v1799
        %v2056 = vcvt.s32.f32 %v1800
        %v2057 = vcvt.s32.f32 %v1801
        %v2058 = vcvt.s32.f32 %v1802
        %v2059 = vcvt.s32.f32 %v1803
        %v2060 = vcvt.s32.f32 %v1804
        %v2061 = vcvt.s32.f32 %v1805
        %v2062 = vcvt.s32.f32 %v1806
        %v2063 = vcvt.s32.f32 %v1807
        %v2064 = vcvt.s32.f32 %v1808
        %v2065 = vcvt.s32.f32 %v1809
        %v2066 = vcvt.s32.f32 %v1810
        %v2067 = vcvt.s32.f32 %v1811
        %v2068 = vcvt.s32.f32 %v1812
        %v2069 = vcvt.s32.f32 %v1813
        %v2070 = vcvt.s32.f32 %v1814
        %v2071 = vcvt.s32.f32 %v1815
        %v2072 = vcvt.s32.f32 %v1816
        %v2073 = vcvt.s32.f32 %v1817
        %v2074 = vcvt.s32.f32 %v1818
        %v2075 = vpack.c.bf16 %v1820, %v1819
        %v2076 = vpack.c.bf16 %v1822, %v1821
        %v2077 = vpack.c.bf16 %v1824, %v1823
        %v2078 = vpack.c.bf16 %v1826, %v1825
        %v2079 = vpack.c.bf16 %v1828, %v1827
        %v2080 = vpack.c.bf16 %v1830, %v1829
        %v2081 = vpack.c.bf16 %v1832, %v1831
        %v2082 = vpack.c.bf16 %v1834, %v1833
        %v2083 = vpack.c.bf16 %v1836, %v1835
        %v2084 = vpack.c.bf16 %v1838, %v1837
        %v2085 = vpack.c.bf16 %v1840, %v1839
        %v2086 = vpack.c.bf16 %v1842, %v1841
        %v2087 = vpack.c.bf16 %v1844, %v1843
        %v2088 = vpack.c.bf16 %v1846, %v1845
        %v2089 = vpack.c.bf16 %v1848, %v1847
        %v2090 = vpack.c.bf16 %v1850, %v1849
        %v2091 = vpack.c.bf16 %v1852, %v1851
        %v2092 = vpack.c.bf16 %v1854, %v1853
        %v2093 = vpack.c.bf16 %v1856, %v1855
        %v2094 = vpack.c.bf16 %v1858, %v1857
        %v2095 = vpack.c.bf16 %v1860, %v1859
        %v2096 = vpack.c.bf16 %v1862, %v1861
        %v2097 = vpack.c.bf16 %v1864, %v1863
        %v2098 = vpack.c.bf16 %v1866, %v1865
        %v2099 = vpack.c.bf16 %v1868, %v1867
        %v2100 = vpack.c.bf16 %v1870, %v1869
        %v2101 = vpack.c.bf16 %v1872, %v1871
        %v2102 = vpack.c.bf16 %v1874, %v1873
        %v2103 = vpack.c.bf16 %v1876, %v1875
        %v2104 = vpack.c.bf16 %v1878, %v1877
        %v2105 = vpack.c.bf16 %v1880, %v1879
        %v2106 = vpack.c.bf16 %v1882, %v1881
        %v2107 = vpack.c.bf16 %v1884, %v1883
        %v2108 = vpack.c.bf16 %v1886, %v1885
        %v2109 = vpack.c.bf16 %v1888, %v1887
        %v2110 = vpack.c.bf16 %v1890, %v1889
        %v2111 = vpack.c.bf16 %v1892, %v1891
        %v2112 = vpack.c.bf16 %v1894, %v1893
        %v2113 = vpack.c.bf16 %v1896, %v1895
        %v2114 = vpack.c.bf16 %v1898, %v1897
        %v2115 = vpack.c.bf16 %v1900, %v1899
        %v2116 = vpack.c.bf16 %v1902, %v1901
        %v2117 = vpack.c.bf16 %v1904, %v1903
        %v2118 = vpack.c.bf16 %v1906, %v1905
        %v2119 = vpack.c.bf16 %v1908, %v1907
        %v2120 = vpack.c.bf16 %v1910, %v1909
        %v2121 = vpack.c.bf16 %v1912, %v1911
        %v2122 = vpack.c.bf16 %v1914, %v1913
        %v2123 = vpack.c.bf16 %v1916, %v1915
        %v2124 = vpack.c.bf16 %v1918, %v1917
        %v2125 = vpack.c.bf16 %v1920, %v1919
        %v2126 = vpack.c.bf16 %v1922, %v1921
        %v2127 = vpack.c.bf16 %v1924, %v1923
        %v2128 = vpack.c.bf16 %v1926, %v1925
        %v2129 = vpack.c.bf16 %v1928, %v1927
        %v2130 = vpack.c.bf16 %v1930, %v1929
        %v2131 = vpack.c.bf16 %v1932, %v1931
        %v2132 = vpack.c.bf16 %v1934, %v1933
        %v2133 = vpack.c.bf16 %v1936, %v1935
        %v2134 = vpack.c.bf16 %v1938, %v1937
        %v2135 = vpack.c.bf16 %v1940, %v1939
        %v2136 = vpack.c.bf16 %v1942, %v1941
        %v2137 = vpack.c.bf16 %v1944, %v1943
        %v2138 = vpack.c.bf16 %v1946, %v1945
        %v2139 = vpack.c.bf16 %v1948, %v1947
        %v2140 = vpack.c.bf16 %v1950, %v1949
        %v2141 = vpack.c.bf16 %v1952, %v1951
        %v2142 = vpack.c.bf16 %v1954, %v1953
        %v2143 = vpack.c.bf16 %v1956, %v1955
        %v2144 = vpack.c.bf16 %v1958, %v1957
        %v2145 = vpack.c.bf16 %v1960, %v1959
        %v2146 = vpack.c.bf16 %v1962, %v1961
        %v2147 = vpack.c.bf16 %v1964, %v1963
        %v2148 = vpack.c.bf16 %v1966, %v1965
        %v2149 = vpack.c.bf16 %v1968, %v1967
        %v2150 = vpack.c.bf16 %v1970, %v1969
        %v2151 = vpack.c.bf16 %v1972, %v1971
        %v2152 = vpack.c.bf16 %v1974, %v1973
        %v2153 = vpack.c.bf16 %v1976, %v1975
        %v2154 = vpack.c.bf16 %v1978, %v1977
        %v2155 = vpack.c.bf16 %v1980, %v1979
        %v2156 = vpack.c.bf16 %v1982, %v1981
        %v2157 = vpack.c.bf16 %v1984, %v1983
        %v2158 = vpack.c.bf16 %v1986, %v1985
        %v2159 = vpack.c.bf16 %v1988, %v1987
        %v2160 = vpack.c.bf16 %v1990, %v1989
        %v2161 = vpack.c.bf16 %v1992, %v1991
        %v2162 = vpack.c.bf16 %v1994, %v1993
        %v2163 = vpack.c.bf16 %v1996, %v1995
        %v2164 = vpack.c.bf16 %v1998, %v1997
        %v2165 = vpack.c.bf16 %v2000, %v1999
        %v2166 = vpack.c.bf16 %v2002, %v2001
        %v2167 = vpack.c.bf16 %v2004, %v2003
        %v2168 = vpack.c.bf16 %v2006, %v2005
        %v2169 = vpack.c.bf16 %v2008, %v2007
        %v2170 = vpack.c.bf16 %v2010, %v2009
        %v2171 = vpack.c.bf16 %v2012, %v2011
        %v2172 = vpack.c.bf16 %v2014, %v2013
        %v2173 = vpack.c.bf16 %v2016, %v2015
        %v2174 = vpack.c.bf16 %v2018, %v2017
        %v2175 = vpack.c.bf16 %v2020, %v2019
        %v2176 = vpack.c.bf16 %v2022, %v2021
        %v2177 = vpack.c.bf16 %v2024, %v2023
        %v2178 = vpack.c.bf16 %v2026, %v2025
        %v2179 = vpack.c.bf16 %v2028, %v2027
        %v2180 = vpack.c.bf16 %v2030, %v2029
        %v2181 = vpack.c.bf16 %v2032, %v2031
        %v2182 = vpack.c.bf16 %v2034, %v2033
        %v2183 = vpack.c.bf16 %v2036, %v2035
        %v2184 = vpack.c.bf16 %v2038, %v2037
        %v2185 = vpack.c.bf16 %v2040, %v2039
        %v2186 = vpack.c.bf16 %v2042, %v2041
        %v2187 = vpack.c.bf16 %v2044, %v2043
        %v2188 = vpack.c.bf16 %v2046, %v2045
        %v2189 = vpack.c.bf16 %v2048, %v2047
        %v2190 = vpack.c.bf16 %v2050, %v2049
        %v2191 = vpack.c.bf16 %v2052, %v2051
        %v2192 = vpack.c.bf16 %v2054, %v2053
        %v2193 = vpack.c.bf16 %v2056, %v2055
        %v2194 = vpack.c.bf16 %v2058, %v2057
        %v2195 = vpack.c.bf16 %v2060, %v2059
        %v2196 = vpack.c.bf16 %v2062, %v2061
        %v2197 = vpack.c.bf16 %v2064, %v2063
        %v2198 = vpack.c.bf16 %v2066, %v2065
        %v2199 = vpack.c.bf16 %v2068, %v2067
        %v2200 = vpack.c.bf16 %v2070, %v2069
        %v2201 = vpack.c.bf16 %v2072, %v2071
        %v2202 = vpack.c.bf16 %v2074, %v2073
        %v2203 = vunpack.c.l.bf16 %v2075
        %v2204 = vunpack.c.h.bf16 %v2075
        %v2205 = vunpack.c.l.bf16 %v2076
        %v2206 = vunpack.c.h.bf16 %v2076
        %v2207 = vunpack.c.l.bf16 %v2077
        %v2208 = vunpack.c.h.bf16 %v2077
        %v2209 = vunpack.c.l.bf16 %v2078
        %v2210 = vunpack.c.h.bf16 %v2078
        %v2211 = vunpack.c.l.bf16 %v2079
        %v2212 = vunpack.c.h.bf16 %v2079
        %v2213 = vunpack.c.l.bf16 %v2080
        %v2214 = vunpack.c.h.bf16 %v2080
        %v2215 = vunpack.c.l.bf16 %v2081
        %v2216 = vunpack.c.h.bf16 %v2081
        %v2217 = vunpack.c.l.bf16 %v2082
        %v2218 = vunpack.c.h.bf16 %v2082
        %v2219 = vunpack.c.l.bf16 %v2083
        %v2220 = vunpack.c.h.bf16 %v2083
        %v2221 = vunpack.c.l.bf16 %v2084
        %v2222 = vunpack.c.h.bf16 %v2084
        %v2223 = vunpack.c.l.bf16 %v2085
        %v2224 = vunpack.c.h.bf16 %v2085
        %v2225 = vunpack.c.l.bf16 %v2086
        %v2226 = vunpack.c.h.bf16 %v2086
        %v2227 = vunpack.c.l.bf16 %v2087
        %v2228 = vunpack.c.h.bf16 %v2087
        %v2229 = vunpack.c.l.bf16 %v2088
        %v2230 = vunpack.c.h.bf16 %v2088
        %v2231 = vunpack.c.l.bf16 %v2089
        %v2232 = vunpack.c.h.bf16 %v2089
        %v2233 = vunpack.c.l.bf16 %v2090
        %v2234 = vunpack.c.h.bf16 %v2090
        %v2235 = vunpack.c.l.bf16 %v2091
        %v2236 = vunpack.c.h.bf16 %v2091
        %v2237 = vunpack.c.l.bf16 %v2092
        %v2238 = vunpack.c.h.bf16 %v2092
        %v2239 = vunpack.c.l.bf16 %v2093
        %v2240 = vunpack.c.h.bf16 %v2093
        %v2241 = vunpack.c.l.bf16 %v2094
        %v2242 = vunpack.c.h.bf16 %v2094
        %v2243 = vunpack.c.l.bf16 %v2095
        %v2244 = vunpack.c.h.bf16 %v2095
        %v2245 = vunpack.c.l.bf16 %v2096
        %v2246 = vunpack.c.h.bf16 %v2096
        %v2247 = vunpack.c.l.bf16 %v2097
        %v2248 = vunpack.c.h.bf16 %v2097
        %v2249 = vunpack.c.l.bf16 %v2098
        %v2250 = vunpack.c.h.bf16 %v2098
        %v2251 = vunpack.c.l.bf16 %v2099
        %v2252 = vunpack.c.h.bf16 %v2099
        %v2253 = vunpack.c.l.bf16 %v2100
        %v2254 = vunpack.c.h.bf16 %v2100
        %v2255 = vunpack.c.l.bf16 %v2101
        %v2256 = vunpack.c.h.bf16 %v2101
        %v2257 = vunpack.c.l.bf16 %v2102
        %v2258 = vunpack.c.h.bf16 %v2102
        %v2259 = vunpack.c.l.bf16 %v2103
        %v2260 = vunpack.c.h.bf16 %v2103
        %v2261 = vunpack.c.l.bf16 %v2104
        %v2262 = vunpack.c.h.bf16 %v2104
        %v2263 = vunpack.c.l.bf16 %v2105
        %v2264 = vunpack.c.h.bf16 %v2105
        %v2265 = vunpack.c.l.bf16 %v2106
        %v2266 = vunpack.c.h.bf16 %v2106
        %v2267 = vunpack.c.l.bf16 %v2107
        %v2268 = vunpack.c.h.bf16 %v2107
        %v2269 = vunpack.c.l.bf16 %v2108
        %v2270 = vunpack.c.h.bf16 %v2108
        %v2271 = vunpack.c.l.bf16 %v2109
        %v2272 = vunpack.c.h.bf16 %v2109
        %v2273 = vunpack.c.l.bf16 %v2110
        %v2274 = vunpack.c.h.bf16 %v2110
        %v2275 = vunpack.c.l.bf16 %v2111
        %v2276 = vunpack.c.h.bf16 %v2111
        %v2277 = vunpack.c.l.bf16 %v2112
        %v2278 = vunpack.c.h.bf16 %v2112
        %v2279 = vunpack.c.l.bf16 %v2113
        %v2280 = vunpack.c.h.bf16 %v2113
        %v2281 = vunpack.c.l.bf16 %v2114
        %v2282 = vunpack.c.h.bf16 %v2114
        %v2283 = vunpack.c.l.bf16 %v2115
        %v2284 = vunpack.c.h.bf16 %v2115
        %v2285 = vunpack.c.l.bf16 %v2116
        %v2286 = vunpack.c.h.bf16 %v2116
        %v2287 = vunpack.c.l.bf16 %v2117
        %v2288 = vunpack.c.h.bf16 %v2117
        %v2289 = vunpack.c.l.bf16 %v2118
        %v2290 = vunpack.c.h.bf16 %v2118
        %v2291 = vunpack.c.l.bf16 %v2119
        %v2292 = vunpack.c.h.bf16 %v2119
        %v2293 = vunpack.c.l.bf16 %v2120
        %v2294 = vunpack.c.h.bf16 %v2120
        %v2295 = vunpack.c.l.bf16 %v2121
        %v2296 = vunpack.c.h.bf16 %v2121
        %v2297 = vunpack.c.l.bf16 %v2122
        %v2298 = vunpack.c.h.bf16 %v2122
        %v2299 = vunpack.c.l.bf16 %v2123
        %v2300 = vunpack.c.h.bf16 %v2123
        %v2301 = vunpack.c.l.bf16 %v2124
        %v2302 = vunpack.c.h.bf16 %v2124
        %v2303 = vunpack.c.l.bf16 %v2125
        %v2304 = vunpack.c.h.bf16 %v2125
        %v2305 = vunpack.c.l.bf16 %v2126
        %v2306 = vunpack.c.h.bf16 %v2126
        %v2307 = vunpack.c.l.bf16 %v2127
        %v2308 = vunpack.c.h.bf16 %v2127
        %v2309 = vunpack.c.l.bf16 %v2128
        %v2310 = vunpack.c.h.bf16 %v2128
        %v2311 = vunpack.c.l.bf16 %v2129
        %v2312 = vunpack.c.h.bf16 %v2129
        %v2313 = vunpack.c.l.bf16 %v2130
        %v2314 = vunpack.c.h.bf16 %v2130
        %v2315 = vunpack.c.l.bf16 %v2131
        %v2316 = vunpack.c.h.bf16 %v2131
        %v2317 = vunpack.c.l.bf16 %v2132
        %v2318 = vunpack.c.h.bf16 %v2132
        %v2319 = vunpack.c.l.bf16 %v2133
        %v2320 = vunpack.c.h.bf16 %v2133
        %v2321 = vunpack.c.l.bf16 %v2134
        %v2322 = vunpack.c.h.bf16 %v2134
        %v2323 = vunpack.c.l.bf16 %v2135
        %v2324 = vunpack.c.h.bf16 %v2135
        %v2325 = vunpack.c.l.bf16 %v2136
        %v2326 = vunpack.c.h.bf16 %v2136
        %v2327 = vunpack.c.l.bf16 %v2137
        %v2328 = vunpack.c.h.bf16 %v2137
        %v2329 = vunpack.c.l.bf16 %v2138
        %v2330 = vunpack.c.h.bf16 %v2138
        %v2331 = vunpack.c.l.bf16 %v2139
        %v2332 = vunpack.c.h.bf16 %v2139
        %v2333 = vunpack.c.l.bf16 %v2140
        %v2334 = vunpack.c.h.bf16 %v2140
        %v2335 = vunpack.c.l.bf16 %v2141
        %v2336 = vunpack.c.h.bf16 %v2141
        %v2337 = vunpack.c.l.bf16 %v2142
        %v2338 = vunpack.c.h.bf16 %v2142
        %v2339 = vunpack.c.l.bf16 %v2143
        %v2340 = vunpack.c.h.bf16 %v2143
        %v2341 = vunpack.c.l.bf16 %v2144
        %v2342 = vunpack.c.h.bf16 %v2144
        %v2343 = vunpack.c.l.bf16 %v2145
        %v2344 = vunpack.c.h.bf16 %v2145
        %v2345 = vunpack.c.l.bf16 %v2146
        %v2346 = vunpack.c.h.bf16 %v2146
        %v2347 = vunpack.c.l.bf16 %v2147
        %v2348 = vunpack.c.h.bf16 %v2147
        %v2349 = vunpack.c.l.bf16 %v2148
        %v2350 = vunpack.c.h.bf16 %v2148
        %v2351 = vunpack.c.l.bf16 %v2149
        %v2352 = vunpack.c.h.bf16 %v2149
        %v2353 = vunpack.c.l.bf16 %v2150
        %v2354 = vunpack.c.h.bf16 %v2150
        %v2355 = vunpack.c.l.bf16 %v2151
        %v2356 = vunpack.c.h.bf16 %v2151
        %v2357 = vunpack.c.l.bf16 %v2152
        %v2358 = vunpack.c.h.bf16 %v2152
        %v2359 = vunpack.c.l.bf16 %v2153
        %v2360 = vunpack.c.h.bf16 %v2153
        %v2361 = vunpack.c.l.bf16 %v2154
        %v2362 = vunpack.c.h.bf16 %v2154
        %v2363 = vunpack.c.l.bf16 %v2155
        %v2364 = vunpack.c.h.bf16 %v2155
        %v2365 = vunpack.c.l.bf16 %v2156
        %v2366 = vunpack.c.h.bf16 %v2156
        %v2367 = vunpack.c.l.bf16 %v2157
        %v2368 = vunpack.c.h.bf16 %v2157
        %v2369 = vunpack.c.l.bf16 %v2158
        %v2370 = vunpack.c.h.bf16 %v2158
        %v2371 = vunpack.c.l.bf16 %v2159
        %v2372 = vunpack.c.h.bf16 %v2159
        %v2373 = vunpack.c.l.bf16 %v2160
        %v2374 = vunpack.c.h.bf16 %v2160
        %v2375 = vunpack.c.l.bf16 %v2161
        %v2376 = vunpack.c.h.bf16 %v2161
        %v2377 = vunpack.c.l.bf16 %v2162
        %v2378 = vunpack.c.h.bf16 %v2162
        %v2379 = vunpack.c.l.bf16 %v2163
        %v2380 = vunpack.c.h.bf16 %v2163
        %v2381 = vunpack.c.l.bf16 %v2164
        %v2382 = vunpack.c.h.bf16 %v2164
        %v2383 = vunpack.c.l.bf16 %v2165
        %v2384 = vunpack.c.h.bf16 %v2165
        %v2385 = vunpack.c.l.bf16 %v2166
        %v2386 = vunpack.c.h.bf16 %v2166
        %v2387 = vunpack.c.l.bf16 %v2167
        %v2388 = vunpack.c.h.bf16 %v2167
        %v2389 = vunpack.c.l.bf16 %v2168
        %v2390 = vunpack.c.h.bf16 %v2168
        %v2391 = vunpack.c.l.bf16 %v2169
        %v2392 = vunpack.c.h.bf16 %v2169
        %v2393 = vunpack.c.l.bf16 %v2170
        %v2394 = vunpack.c.h.bf16 %v2170
        %v2395 = vunpack.c.l.bf16 %v2171
        %v2396 = vunpack.c.h.bf16 %v2171
        %v2397 = vunpack.c.l.bf16 %v2172
        %v2398 = vunpack.c.h.bf16 %v2172
        %v2399 = vunpack.c.l.bf16 %v2173
        %v2400 = vunpack.c.h.bf16 %v2173
        %v2401 = vunpack.c.l.bf16 %v2174
        %v2402 = vunpack.c.h.bf16 %v2174
        %v2403 = vunpack.c.l.bf16 %v2175
        %v2404 = vunpack.c.h.bf16 %v2175
        %v2405 = vunpack.c.l.bf16 %v2176
        %v2406 = vunpack.c.h.bf16 %v2176
        %v2407 = vunpack.c.l.bf16 %v2177
        %v2408 = vunpack.c.h.bf16 %v2177
        %v2409 = vunpack.c.l.bf16 %v2178
        %v2410 = vunpack.c.h.bf16 %v2178
        %v2411 = vunpack.c.l.bf16 %v2179
        %v2412 = vunpack.c.h.bf16 %v2179
        %v2413 = vunpack.c.l.bf16 %v2180
        %v2414 = vunpack.c.h.bf16 %v2180
        %v2415 = vunpack.c.l.bf16 %v2181
        %v2416 = vunpack.c.h.bf16 %v2181
        %v2417 = vunpack.c.l.bf16 %v2182
        %v2418 = vunpack.c.h.bf16 %v2182
        %v2419 = vunpack.c.l.bf16 %v2183
        %v2420 = vunpack.c.h.bf16 %v2183
        %v2421 = vunpack.c.l.bf16 %v2184
        %v2422 = vunpack.c.h.bf16 %v2184
        %v2423 = vunpack.c.l.bf16 %v2185
        %v2424 = vunpack.c.h.bf16 %v2185
        %v2425 = vunpack.c.l.bf16 %v2186
        %v2426 = vunpack.c.h.bf16 %v2186
        %v2427 = vunpack.c.l.bf16 %v2187
        %v2428 = vunpack.c.h.bf16 %v2187
        %v2429 = vunpack.c.l.bf16 %v2188
        %v2430 = vunpack.c.h.bf16 %v2188
        %v2431 = vunpack.c.l.bf16 %v2189
        %v2432 = vunpack.c.h.bf16 %v2189
        %v2433 = vunpack.c.l.bf16 %v2190
        %v2434 = vunpack.c.h.bf16 %v2190
        %v2435 = vunpack.c.l.bf16 %v2191
        %v2436 = vunpack.c.h.bf16 %v2191
        %v2437 = vunpack.c.l.bf16 %v2192
        %v2438 = vunpack.c.h.bf16 %v2192
        %v2439 = vunpack.c.l.bf16 %v2193
        %v2440 = vunpack.c.h.bf16 %v2193
        %v2441 = vunpack.c.l.bf16 %v2194
        %v2442 = vunpack.c.h.bf16 %v2194
        %v2443 = vunpack.c.l.bf16 %v2195
        %v2444 = vunpack.c.h.bf16 %v2195
        %v2445 = vunpack.c.l.bf16 %v2196
        %v2446 = vunpack.c.h.bf16 %v2196
        %v2447 = vunpack.c.l.bf16 %v2197
        %v2448 = vunpack.c.h.bf16 %v2197
        %v2449 = vunpack.c.l.bf16 %v2198
        %v2450 = vunpack.c.h.bf16 %v2198
        %v2451 = vunpack.c.l.bf16 %v2199
        %v2452 = vunpack.c.h.bf16 %v2199
        %v2453 = vunpack.c.l.bf16 %v2200
        %v2454 = vunpack.c.h.bf16 %v2200
        %v2455 = vunpack.c.l.bf16 %v2201
        %v2456 = vunpack.c.h.bf16 %v2201
        %v2457 = vunpack.c.l.bf16 %v2202
        %v2458 = vunpack.c.h.bf16 %v2202
        %v2459 = vadd.f32 %v2203, %v2204
        %v2460 = vadd.f32 %v2459, %v2205
        %v2461 = vadd.f32 %v2460, %v2206
        %v2462 = vadd.f32 %v2461, %v2207
        %v2463 = vadd.f32 %v2462, %v2208
        %v2464 = vadd.f32 %v2463, %v2209
        %v2465 = vadd.f32 %v2464, %v2210
        %v2466 = vadd.f32 %v2465, %v2211
        %v2467 = vadd.f32 %v2466, %v2212
        %v2468 = vadd.f32 %v2467, %v2213
        %v2469 = vadd.f32 %v2468, %v2214
        %v2470 = vadd.f32 %v2469, %v2215
        %v2471 = vadd.f32 %v2470, %v2216
        %v2472 = vadd.f32 %v2471, %v2217
        %v2473 = vadd.f32 %v2472, %v2218
        %v2474 = vrot.slane %v2473, 4
        %v2475 = vadd.f32 %v2473, %v2474
        %v2476 = vrot.slane %v2475, 2
        %v2477 = vadd.f32 %v2475, %v2476
        %v2478 = vrot.slane %v2477, 1
        %v2479 = vadd.f32 %v2477, %v2478
        %v2480 = vadd.f32 %v2219, %v2220
        %v2481 = vadd.f32 %v2480, %v2221
        %v2482 = vadd.f32 %v2481, %v2222
        %v2483 = vadd.f32 %v2482, %v2223
        %v2484 = vadd.f32 %v2483, %v2224
        %v2485 = vadd.f32 %v2484, %v2225
        %v2486 = vadd.f32 %v2485, %v2226
        %v2487 = vadd.f32 %v2486, %v2227
        %v2488 = vadd.f32 %v2487, %v2228
        %v2489 = vadd.f32 %v2488, %v2229
        %v2490 = vadd.f32 %v2489, %v2230
        %v2491 = vadd.f32 %v2490, %v2231
        %v2492 = vadd.f32 %v2491, %v2232
        %v2493 = vadd.f32 %v2492, %v2233
        %v2494 = vadd.f32 %v2493, %v2234
        %v2495 = vrot.slane %v2494, 4
        %v2496 = vadd.f32 %v2494, %v2495
        %v2497 = vrot.slane %v2496, 2
        %v2498 = vadd.f32 %v2496, %v2497
        %v2499 = vrot.slane %v2498, 1
        %v2500 = vadd.f32 %v2498, %v2499
        %v2501 = vadd.f32 %v2235, %v2236
        %v2502 = vadd.f32 %v2501, %v2237
        %v2503 = vadd.f32 %v2502, %v2238
        %v2504 = vadd.f32 %v2503, %v2239
        %v2505 = vadd.f32 %v2504, %v2240
        %v2506 = vadd.f32 %v2505, %v2241
        %v2507 = vadd.f32 %v2506, %v2242
        %v2508 = vadd.f32 %v2507, %v2243
        %v2509 = vadd.f32 %v2508, %v2244
        %v2510 = vadd.f32 %v2509, %v2245
        %v2511 = vadd.f32 %v2510, %v2246
        %v2512 = vadd.f32 %v2511, %v2247
        %v2513 = vadd.f32 %v2512, %v2248
        %v2514 = vadd.f32 %v2513, %v2249
        %v2515 = vadd.f32 %v2514, %v2250
        %v2516 = vrot.slane %v2515, 4
        %v2517 = vadd.f32 %v2515, %v2516
        %v2518 = vrot.slane %v2517, 2
        %v2519 = vadd.f32 %v2517, %v2518
        %v2520 = vrot.slane %v2519, 1
        %v2521 = vadd.f32 %v2519, %v2520
        %v2522 = vadd.f32 %v2251, %v2252
        %v2523 = vadd.f32 %v2522, %v2253
        %v2524 = vadd.f32 %v2523, %v2254
        %v2525 = vadd.f32 %v2524, %v2255
        %v2526 = vadd.f32 %v2525, %v2256
        %v2527 = vadd.f32 %v2526, %v2257
        %v2528 = vadd.f32 %v2527, %v2258
        %v2529 = vadd.f32 %v2528, %v2259
        %v2530 = vadd.f32 %v2529, %v2260
        %v2531 = vadd.f32 %v2530, %v2261
        %v2532 = vadd.f32 %v2531, %v2262
        %v2533 = vadd.f32 %v2532, %v2263
        %v2534 = vadd.f32 %v2533, %v2264
        %v2535 = vadd.f32 %v2534, %v2265
        %v2536 = vadd.f32 %v2535, %v2266
        %v2537 = vrot.slane %v2536, 4
        %v2538 = vadd.f32 %v2536, %v2537
        %v2539 = vrot.slane %v2538, 2
        %v2540 = vadd.f32 %v2538, %v2539
        %v2541 = vrot.slane %v2540, 1
        %v2542 = vadd.f32 %v2540, %v2541
        %v2543 = vadd.f32 %v2267, %v2268
        %v2544 = vadd.f32 %v2543, %v2269
        %v2545 = vadd.f32 %v2544, %v2270
        %v2546 = vadd.f32 %v2545, %v2271
        %v2547 = vadd.f32 %v2546, %v2272
        %v2548 = vadd.f32 %v2547, %v2273
        %v2549 = vadd.f32 %v2548, %v2274
        %v2550 = vadd.f32 %v2549, %v2275
        %v2551 = vadd.f32 %v2550, %v2276
        %v2552 = vadd.f32 %v2551, %v2277
        %v2553 = vadd.f32 %v2552, %v2278
        %v2554 = vadd.f32 %v2553, %v2279
        %v2555 = vadd.f32 %v2554, %v2280
        %v2556 = vadd.f32 %v2555, %v2281
        %v2557 = vadd.f32 %v2556, %v2282
        %v2558 = vrot.slane %v2557, 4
        %v2559 = vadd.f32 %v2557, %v2558
        %v2560 = vrot.slane %v2559, 2
        %v2561 = vadd.f32 %v2559, %v2560
        %v2562 = vrot.slane %v2561, 1
        %v2563 = vadd.f32 %v2561, %v2562
        %v2564 = vadd.f32 %v2283, %v2284
        %v2565 = vadd.f32 %v2564, %v2285
        %v2566 = vadd.f32 %v2565, %v2286
        %v2567 = vadd.f32 %v2566, %v2287
        %v2568 = vadd.f32 %v2567, %v2288
        %v2569 = vadd.f32 %v2568, %v2289
        %v2570 = vadd.f32 %v2569, %v2290
        %v2571 = vadd.f32 %v2570, %v2291
        %v2572 = vadd.f32 %v2571, %v2292
        %v2573 = vadd.f32 %v2572, %v2293
        %v2574 = vadd.f32 %v2573, %v2294
        %v2575 = vadd.f32 %v2574, %v2295
        %v2576 = vadd.f32 %v2575, %v2296
        %v2577 = vadd.f32 %v2576, %v2297
        %v2578 = vadd.f32 %v2577, %v2298
        %v2579 = vrot.slane %v2578, 4
        %v2580 = vadd.f32 %v2578, %v2579
        %v2581 = vrot.slane %v2580, 2
        %v2582 = vadd.f32 %v2580, %v2581
        %v2583 = vrot.slane %v2582, 1
        %v2584 = vadd.f32 %v2582, %v2583
        %v2585 = vadd.f32 %v2299, %v2300
        %v2586 = vadd.f32 %v2585, %v2301
        %v2587 = vadd.f32 %v2586, %v2302
        %v2588 = vadd.f32 %v2587, %v2303
        %v2589 = vadd.f32 %v2588, %v2304
        %v2590 = vadd.f32 %v2589, %v2305
        %v2591 = vadd.f32 %v2590, %v2306
        %v2592 = vadd.f32 %v2591, %v2307
        %v2593 = vadd.f32 %v2592, %v2308
        %v2594 = vadd.f32 %v2593, %v2309
        %v2595 = vadd.f32 %v2594, %v2310
        %v2596 = vadd.f32 %v2595, %v2311
        %v2597 = vadd.f32 %v2596, %v2312
        %v2598 = vadd.f32 %v2597, %v2313
        %v2599 = vadd.f32 %v2598, %v2314
        %v2600 = vrot.slane %v2599, 4
        %v2601 = vadd.f32 %v2599, %v2600
        %v2602 = vrot.slane %v2601, 2
        %v2603 = vadd.f32 %v2601, %v2602
        %v2604 = vrot.slane %v2603, 1
        %v2605 = vadd.f32 %v2603, %v2604
        %v2606 = vadd.f32 %v2315, %v2316
        %v2607 = vadd.f32 %v2606, %v2317
        %v2608 = vadd.f32 %v2607, %v2318
        %v2609 = vadd.f32 %v2608, %v2319
        %v2610 = vadd.f32 %v2609, %v2320
        %v2611 = vadd.f32 %v2610, %v2321
        %v2612 = vadd.f32 %v2611, %v2322
        %v2613 = vadd.f32 %v2612, %v2323
        %v2614 = vadd.f32 %v2613, %v2324
        %v2615 = vadd.f32 %v2614, %v2325
        %v2616 = vadd.f32 %v2615, %v2326
        %v2617 = vadd.f32 %v2616, %v2327
        %v2618 = vadd.f32 %v2617, %v2328
        %v2619 = vadd.f32 %v2618, %v2329
        %v2620 = vadd.f32 %v2619, %v2330
        %v2621 = vrot.slane %v2620, 4
        %v2622 = vadd.f32 %v2620, %v2621
        %v2623 = vrot.slane %v2622, 2
        %v2624 = vadd.f32 %v2622, %v2623
        %v2625 = vrot.slane %v2624, 1
        %v2626 = vadd.f32 %v2624, %v2625
        %v2627 = vadd.f32 %v2331, %v2332
        %v2628 = vadd.f32 %v2627, %v2333
        %v2629 = vadd.f32 %v2628, %v2334
        %v2630 = vadd.f32 %v2629, %v2335
        %v2631 = vadd.f32 %v2630, %v2336
        %v2632 = vadd.f32 %v2631, %v2337
        %v2633 = vadd.f32 %v2632, %v2338
        %v2634 = vadd.f32 %v2633, %v2339
        %v2635 = vadd.f32 %v2634, %v2340
        %v2636 = vadd.f32 %v2635, %v2341
        %v2637 = vadd.f32 %v2636, %v2342
        %v2638 = vadd.f32 %v2637, %v2343
        %v2639 = vadd.f32 %v2638, %v2344
        %v2640 = vadd.f32 %v2639, %v2345
        %v2641 = vadd.f32 %v2640, %v2346
        %v2642 = vrot.slane %v2641, 4
        %v2643 = vadd.f32 %v2641, %v2642
        %v2644 = vrot.slane %v2643, 2
        %v2645 = vadd.f32 %v2643, %v2644
        %v2646 = vrot.slane %v2645, 1
        %v2647 = vadd.f32 %v2645, %v2646
        %v2648 = vadd.f32 %v2347, %v2348
        %v2649 = vadd.f32 %v2648, %v2349
        %v2650 = vadd.f32 %v2649, %v2350
        %v2651 = vadd.f32 %v2650, %v2351
        %v2652 = vadd.f32 %v2651, %v2352
        %v2653 = vadd.f32 %v2652, %v2353
        %v2654 = vadd.f32 %v2653, %v2354
        %v2655 = vadd.f32 %v2654, %v2355
        %v2656 = vadd.f32 %v2655, %v2356
        %v2657 = vadd.f32 %v2656, %v2357
        %v2658 = vadd.f32 %v2657, %v2358
        %v2659 = vadd.f32 %v2658, %v2359
        %v2660 = vadd.f32 %v2659, %v2360
        %v2661 = vadd.f32 %v2660, %v2361
        %v2662 = vadd.f32 %v2661, %v2362
        %v2663 = vrot.slane %v2662, 4
        %v2664 = vadd.f32 %v2662, %v2663
        %v2665 = vrot.slane %v2664, 2
        %v2666 = vadd.f32 %v2664, %v2665
        %v2667 = vrot.slane %v2666, 1
        %v2668 = vadd.f32 %v2666, %v2667
        %v2669 = vadd.f32 %v2363, %v2364
        %v2670 = vadd.f32 %v2669, %v2365
        %v2671 = vadd.f32 %v2670, %v2366
        %v2672 = vadd.f32 %v2671, %v2367
        %v2673 = vadd.f32 %v2672, %v2368
        %v2674 = vadd.f32 %v2673, %v2369
        %v2675 = vadd.f32 %v2674, %v2370
        %v2676 = vadd.f32 %v2675, %v2371
        %v2677 = vadd.f32 %v2676, %v2372
        %v2678 = vadd.f32 %v2677, %v2373
        %v2679 = vadd.f32 %v2678, %v2374
        %v2680 = vadd.f32 %v2679, %v2375
        %v2681 = vadd.f32 %v2680, %v2376
        %v2682 = vadd.f32 %v2681, %v2377
        %v2683 = vadd.f32 %v2682, %v2378
        %v2684 = vrot.slane %v2683, 4
        %v2685 = vadd.f32 %v2683, %v2684
        %v2686 = vrot.slane %v2685, 2
        %v2687 = vadd.f32 %v2685, %v2686
        %v2688 = vrot.slane %v2687, 1
        %v2689 = vadd.f32 %v2687, %v2688
        %v2690 = vadd.f32 %v2379, %v2380
        %v2691 = vadd.f32 %v2690, %v2381
        %v2692 = vadd.f32 %v2691, %v2382
        %v2693 = vadd.f32 %v2692, %v2383
        %v2694 = vadd.f32 %v2693, %v2384
        %v2695 = vadd.f32 %v2694, %v2385
        %v2696 = vadd.f32 %v2695, %v2386
        %v2697 = vadd.f32 %v2696, %v2387
        %v2698 = vadd.f32 %v2697, %v2388
        %v2699 = vadd.f32 %v2698, %v2389
        %v2700 = vadd.f32 %v2699, %v2390
        %v2701 = vadd.f32 %v2700, %v2391
        %v2702 = vadd.f32 %v2701, %v2392
        %v2703 = vadd.f32 %v2702, %v2393
        %v2704 = vadd.f32 %v2703, %v2394
        %v2705 = vrot.slane %v2704, 4
        %v2706 = vadd.f32 %v2704, %v2705
        %v2707 = vrot.slane %v2706, 2
        %v2708 = vadd.f32 %v2706, %v2707
        %v2709 = vrot.slane %v2708, 1
        %v2710 = vadd.f32 %v2708, %v2709
        %v2711 = vadd.f32 %v2395, %v2396
        %v2712 = vadd.f32 %v2711, %v2397
        %v2713 = vadd.f32 %v2712, %v2398
        %v2714 = vadd.f32 %v2713, %v2399
        %v2715 = vadd.f32 %v2714, %v2400
        %v2716 = vadd.f32 %v2715, %v2401
        %v2717 = vadd.f32 %v2716, %v2402
        %v2718 = vadd.f32 %v2717, %v2403
        %v2719 = vadd.f32 %v2718, %v2404
        %v2720 = vadd.f32 %v2719, %v2405
        %v2721 = vadd.f32 %v2720, %v2406
        %v2722 = vadd.f32 %v2721, %v2407
        %v2723 = vadd.f32 %v2722, %v2408
        %v2724 = vadd.f32 %v2723, %v2409
        %v2725 = vadd.f32 %v2724, %v2410
        %v2726 = vrot.slane %v2725, 4
        %v2727 = vadd.f32 %v2725, %v2726
        %v2728 = vrot.slane %v2727, 2
        %v2729 = vadd.f32 %v2727, %v2728
        %v2730 = vrot.slane %v2729, 1
        %v2731 = vadd.f32 %v2729, %v2730
        %v2732 = vadd.f32 %v2411, %v2412
        %v2733 = vadd.f32 %v2732, %v2413
        %v2734 = vadd.f32 %v2733, %v2414
        %v2735 = vadd.f32 %v2734, %v2415
        %v2736 = vadd.f32 %v2735, %v2416
        %v2737 = vadd.f32 %v2736, %v2417
        %v2738 = vadd.f32 %v2737, %v2418
        %v2739 = vadd.f32 %v2738, %v2419
        %v2740 = vadd.f32 %v2739, %v2420
        %v2741 = vadd.f32 %v2740, %v2421
        %v2742 = vadd.f32 %v2741, %v2422
        %v2743 = vadd.f32 %v2742, %v2423
        %v2744 = vadd.f32 %v2743, %v2424
        %v2745 = vadd.f32 %v2744, %v2425
        %v2746 = vadd.f32 %v2745, %v2426
        %v2747 = vrot.slane %v2746, 4
        %v2748 = vadd.f32 %v2746, %v2747
        %v2749 = vrot.slane %v2748, 2
        %v2750 = vadd.f32 %v2748, %v2749
        %v2751 = vrot.slane %v2750, 1
        %v2752 = vadd.f32 %v2750, %v2751
        %v2753 = vadd.f32 %v2427, %v2428
        %v2754 = vadd.f32 %v2753, %v2429
        %v2755 = vadd.f32 %v2754, %v2430
        %v2756 = vadd.f32 %v2755, %v2431
        %v2757 = vadd.f32 %v2756, %v2432
        %v2758 = vadd.f32 %v2757, %v2433
        %v2759 = vadd.f32 %v2758, %v2434
        %v2760 = vadd.f32 %v2759, %v2435
        %v2761 = vadd.f32 %v2760, %v2436
        %v2762 = vadd.f32 %v2761, %v2437
        %v2763 = vadd.f32 %v2762, %v2438
        %v2764 = vadd.f32 %v2763, %v2439
        %v2765 = vadd.f32 %v2764, %v2440
        %v2766 = vadd.f32 %v2765, %v2441
        %v2767 = vadd.f32 %v2766, %v2442
        %v2768 = vrot.slane %v2767, 4
        %v2769 = vadd.f32 %v2767, %v2768
        %v2770 = vrot.slane %v2769, 2
        %v2771 = vadd.f32 %v2769, %v2770
        %v2772 = vrot.slane %v2771, 1
        %v2773 = vadd.f32 %v2771, %v2772
        %v2774 = vadd.f32 %v2443, %v2444
        %v2775 = vadd.f32 %v2774, %v2445
        %v2776 = vadd.f32 %v2775, %v2446
        %v2777 = vadd.f32 %v2776, %v2447
        %v2778 = vadd.f32 %v2777, %v2448
        %v2779 = vadd.f32 %v2778, %v2449
        %v2780 = vadd.f32 %v2779, %v2450
        %v2781 = vadd.f32 %v2780, %v2451
        %v2782 = vadd.f32 %v2781, %v2452
        %v2783 = vadd.f32 %v2782, %v2453
        %v2784 = vadd.f32 %v2783, %v2454
        %v2785 = vadd.f32 %v2784, %v2455
        %v2786 = vadd.f32 %v2785, %v2456
        %v2787 = vadd.f32 %v2786, %v2457
        %v2788 = vadd.f32 %v2787, %v2458
        %v2789 = vrot.slane %v2788, 4
        %v2790 = vadd.f32 %v2788, %v2789
        %v2791 = vrot.slane %v2790, 2
        %v2792 = vadd.f32 %v2790, %v2791
        %v2793 = vrot.slane %v2792, 1
        %v2794 = vadd.f32 %v2792, %v2793
        %v2795 = vpack.c.bf16 %v2479, %v2479
        %v2796 = vpack.c.bf16 %v2500, %v2500
        %v2797 = vpack.c.bf16 %v2521, %v2521
        %v2798 = vpack.c.bf16 %v2542, %v2542
        %v2799 = vpack.c.bf16 %v2563, %v2563
        %v2800 = vpack.c.bf16 %v2584, %v2584
        %v2801 = vpack.c.bf16 %v2605, %v2605
        %v2802 = vpack.c.bf16 %v2626, %v2626
        %v2803 = vpack.c.bf16 %v2647, %v2647
        %v2804 = vpack.c.bf16 %v2668, %v2668
        %v2805 = vpack.c.bf16 %v2689, %v2689
        %v2806 = vpack.c.bf16 %v2710, %v2710
        %v2807 = vpack.c.bf16 %v2731, %v2731
        %v2808 = vpack.c.bf16 %v2752, %v2752
        %v2809 = vpack.c.bf16 %v2773, %v2773
        %v2810 = vpack.c.bf16 %v2794, %v2794
        %v2811 = vld [vmem:[#allocation2] sm:$0xff]
        %v2812 = vld [vmem:[#allocation2 + $0x8] sm:$0xff]
        %v2813 = vunpack.c.l.bf16 %v2795
        %v2814 = vunpack.c.l.bf16 %v2796
        %v2815 = vunpack.c.l.bf16 %v2797
        %v2816 = vunpack.c.l.bf16 %v2798
        %v2817 = vunpack.c.l.bf16 %v2799
        %v2818 = vunpack.c.l.bf16 %v2800
        %v2819 = vunpack.c.l.bf16 %v2801
        %v2820 = vunpack.c.l.bf16 %v2802
        %v2821 = vunpack.c.l.bf16 %v2803
        %v2822 = vunpack.c.l.bf16 %v2804
        %v2823 = vunpack.c.l.bf16 %v2805
        %v2824 = vunpack.c.l.bf16 %v2806
        %v2825 = vunpack.c.l.bf16 %v2807
        %v2826 = vunpack.c.l.bf16 %v2808
        %v2827 = vunpack.c.l.bf16 %v2809
        %v2828 = vunpack.c.l.bf16 %v2810
        %vm2845 = vcmask 1041409
        %v2846 = vsel %vm2845, %v2814, %v2813
        %vm2847 = vcmask 1042434
        %v2848 = vsel %vm2847, %v2815, %v2846
        %vm2849 = vcmask 1043459
        %v2850 = vsel %vm2849, %v2816, %v2848
        %vm2851 = vcmask 1044484
        %v2852 = vsel %vm2851, %v2817, %v2850
        %vm2853 = vcmask 1045509
        %v2854 = vsel %vm2853, %v2818, %v2852
        %vm2855 = vcmask 1046534
        %v2856 = vsel %vm2855, %v2819, %v2854
        %vm2857 = vcmask 1047559
        %v2858 = vsel %vm2857, %v2820, %v2856
        %v2859 = vsel %vm2845, %v2822, %v2821
        %v2860 = vsel %vm2847, %v2823, %v2859
        %v2861 = vsel %vm2849, %v2824, %v2860
        %v2862 = vsel %vm2851, %v2825, %v2861
        %v2863 = vsel %vm2853, %v2826, %v2862
        %v2864 = vsel %vm2855, %v2827, %v2863
        %v2865 = vsel %vm2857, %v2828, %v2864
        %v2868 = vadd.f32 %v2811, %v2858
        %v2869 = vadd.f32 %v2812, %v2865
        %2870 = vst [vmem:[#allocation2] sm:$0xff] %v2868
        %2871 = vst [vmem:[#allocation2 + $0x8] sm:$0xff] %v2869
        %s2872 = scalar_lea.vmem %s226, 8
        %v2873 = vld [vmem:[%s2872] sm:$0xff]
        %v2874 = vld [vmem:[%s2872 + $0x10] sm:$0xff]
        %v2875 = vlaneseq
        %v2876 = vshrl.u32 %v2875, 7
        %v2877 = vsub.s32 0, %v2876
        %v2878 = vrot.slane %v2873, %v2877
        %2880 = vbcast.lane.b32.xlu0 %v2878, 256
        %v2881 = vpop.permute.xlu0 %2880
        %s2883 = sor.u32 256, 8
        %2884 = vbcast.lane.b32.xlu0 %v2878, %s2883
        %v2885 = vpop.permute.xlu0 %2884
        %s2887 = sor.u32 256, 16
        %2888 = vbcast.lane.b32.xlu0 %v2878, %s2887
        %v2889 = vpop.permute.xlu0 %2888
        %s2891 = sor.u32 256, 24
        %2892 = vbcast.lane.b32.xlu0 %v2878, %s2891
        %v2893 = vpop.permute.xlu0 %2892
        %s2895 = sor.u32 256, 32
        %2896 = vbcast.lane.b32.xlu0 %v2878, %s2895
        %v2897 = vpop.permute.xlu0 %2896
        %s2899 = sor.u32 256, 40
        %2900 = vbcast.lane.b32.xlu0 %v2878, %s2899
        %v2901 = vpop.permute.xlu0 %2900
        %s2903 = sor.u32 256, 48
        %2904 = vbcast.lane.b32.xlu0 %v2878, %s2903
        %v2905 = vpop.permute.xlu0 %2904
        %s2907 = sor.u32 256, 56
        %2908 = vbcast.lane.b32.xlu0 %v2878, %s2907
        %v2909 = vpop.permute.xlu0 %2908
        %s2911 = sor.u32 256, 64
        %2912 = vbcast.lane.b32.xlu0 %v2878, %s2911
        %v2913 = vpop.permute.xlu0 %2912
        %s2915 = sor.u32 256, 72
        %2916 = vbcast.lane.b32.xlu0 %v2878, %s2915
        %v2917 = vpop.permute.xlu0 %2916
        %s2919 = sor.u32 256, 80
        %2920 = vbcast.lane.b32.xlu0 %v2878, %s2919
        %v2921 = vpop.permute.xlu0 %2920
        %s2923 = sor.u32 256, 88
        %2924 = vbcast.lane.b32.xlu0 %v2878, %s2923
        %v2925 = vpop.permute.xlu0 %2924
        %s2927 = sor.u32 256, 96
        %2928 = vbcast.lane.b32.xlu0 %v2878, %s2927
        %v2929 = vpop.permute.xlu0 %2928
        %s2931 = sor.u32 256, 104
        %2932 = vbcast.lane.b32.xlu0 %v2878, %s2931
        %v2933 = vpop.permute.xlu0 %2932
        %s2935 = sor.u32 256, 112
        %2936 = vbcast.lane.b32.xlu0 %v2878, %s2935
        %v2937 = vpop.permute.xlu0 %2936
        %s2939 = sor.u32 256, 120
        %2940 = vbcast.lane.b32.xlu0 %v2878, %s2939
        %v2941 = vpop.permute.xlu0 %2940
        %v2942 = vlaneseq
        %v2943 = vshrl.u32 %v2942, 7
        %v2944 = vsub.s32 1, %v2943
        %v2945 = vrot.slane %v2873, %v2944
        %2947 = vbcast.lane.b32.xlu0 %v2945, 256
        %v2948 = vpop.permute.xlu0 %2947
        %s2950 = sor.u32 256, 8
        %2951 = vbcast.lane.b32.xlu0 %v2945, %s2950
        %v2952 = vpop.permute.xlu0 %2951
        %s2954 = sor.u32 256, 16
        %2955 = vbcast.lane.b32.xlu0 %v2945, %s2954
        %v2956 = vpop.permute.xlu0 %2955
        %s2958 = sor.u32 256, 24
        %2959 = vbcast.lane.b32.xlu0 %v2945, %s2958
        %v2960 = vpop.permute.xlu0 %2959
        %s2962 = sor.u32 256, 32
        %2963 = vbcast.lane.b32.xlu0 %v2945, %s2962
        %v2964 = vpop.permute.xlu0 %2963
        %s2966 = sor.u32 256, 40
        %2967 = vbcast.lane.b32.xlu0 %v2945, %s2966
        %v2968 = vpop.permute.xlu0 %2967
        %s2970 = sor.u32 256, 48
        %2971 = vbcast.lane.b32.xlu0 %v2945, %s2970
        %v2972 = vpop.permute.xlu0 %2971
        %s2974 = sor.u32 256, 56
        %2975 = vbcast.lane.b32.xlu0 %v2945, %s2974
        %v2976 = vpop.permute.xlu0 %2975
        %s2978 = sor.u32 256, 64
        %2979 = vbcast.lane.b32.xlu0 %v2945, %s2978
        %v2980 = vpop.permute.xlu0 %2979
        %s2982 = sor.u32 256, 72
        %2983 = vbcast.lane.b32.xlu0 %v2945, %s2982
        %v2984 = vpop.permute.xlu0 %2983
        %s2986 = sor.u32 256, 80
        %2987 = vbcast.lane.b32.xlu0 %v2945, %s2986
        %v2988 = vpop.permute.xlu0 %2987
        %s2990 = sor.u32 256, 88
        %2991 = vbcast.lane.b32.xlu0 %v2945, %s2990
        %v2992 = vpop.permute.xlu0 %2991
        %s2994 = sor.u32 256, 96
        %2995 = vbcast.lane.b32.xlu0 %v2945, %s2994
        %v2996 = vpop.permute.xlu0 %2995
        %s2998 = sor.u32 256, 104
        %2999 = vbcast.lane.b32.xlu0 %v2945, %s2998
        %v3000 = vpop.permute.xlu0 %2999
        %s3002 = sor.u32 256, 112
        %3003 = vbcast.lane.b32.xlu0 %v2945, %s3002
        %v3004 = vpop.permute.xlu0 %3003
        %s3006 = sor.u32 256, 120
        %3007 = vbcast.lane.b32.xlu0 %v2945, %s3006
        %v3008 = vpop.permute.xlu0 %3007
        %v3009 = vlaneseq
        %v3010 = vshrl.u32 %v3009, 7
        %v3011 = vsub.s32 2, %v3010
        %v3012 = vrot.slane %v2873, %v3011
        %3014 = vbcast.lane.b32.xlu0 %v3012, 256
        %v3015 = vpop.permute.xlu0 %3014
        %s3017 = sor.u32 256, 8
        %3018 = vbcast.lane.b32.xlu0 %v3012, %s3017
        %v3019 = vpop.permute.xlu0 %3018
        %s3021 = sor.u32 256, 16
        %3022 = vbcast.lane.b32.xlu0 %v3012, %s3021
        %v3023 = vpop.permute.xlu0 %3022
        %s3025 = sor.u32 256, 24
        %3026 = vbcast.lane.b32.xlu0 %v3012, %s3025
        %v3027 = vpop.permute.xlu0 %3026
        %s3029 = sor.u32 256, 32
        %3030 = vbcast.lane.b32.xlu0 %v3012, %s3029
        %v3031 = vpop.permute.xlu0 %3030
        %s3033 = sor.u32 256, 40
        %3034 = vbcast.lane.b32.xlu0 %v3012, %s3033
        %v3035 = vpop.permute.xlu0 %3034
        %s3037 = sor.u32 256, 48
        %3038 = vbcast.lane.b32.xlu0 %v3012, %s3037
        %v3039 = vpop.permute.xlu0 %3038
        %s3041 = sor.u32 256, 56
        %3042 = vbcast.lane.b32.xlu0 %v3012, %s3041
        %v3043 = vpop.permute.xlu0 %3042
        %s3045 = sor.u32 256, 64
        %3046 = vbcast.lane.b32.xlu0 %v3012, %s3045
        %v3047 = vpop.permute.xlu0 %3046
        %s3049 = sor.u32 256, 72
        %3050 = vbcast.lane.b32.xlu0 %v3012, %s3049
        %v3051 = vpop.permute.xlu0 %3050
        %s3053 = sor.u32 256, 80
        %3054 = vbcast.lane.b32.xlu0 %v3012, %s3053
        %v3055 = vpop.permute.xlu0 %3054
        %s3057 = sor.u32 256, 88
        %3058 = vbcast.lane.b32.xlu0 %v3012, %s3057
        %v3059 = vpop.permute.xlu0 %3058
        %s3061 = sor.u32 256, 96
        %3062 = vbcast.lane.b32.xlu0 %v3012, %s3061
        %v3063 = vpop.permute.xlu0 %3062
        %s3065 = sor.u32 256, 104
        %3066 = vbcast.lane.b32.xlu0 %v3012, %s3065
        %v3067 = vpop.permute.xlu0 %3066
        %s3069 = sor.u32 256, 112
        %3070 = vbcast.lane.b32.xlu0 %v3012, %s3069
        %v3071 = vpop.permute.xlu0 %3070
        %s3073 = sor.u32 256, 120
        %3074 = vbcast.lane.b32.xlu0 %v3012, %s3073
        %v3075 = vpop.permute.xlu0 %3074
        %v3076 = vlaneseq
        %v3077 = vshrl.u32 %v3076, 7
        %v3078 = vsub.s32 3, %v3077
        %v3079 = vrot.slane %v2873, %v3078
        %3081 = vbcast.lane.b32.xlu0 %v3079, 256
        %v3082 = vpop.permute.xlu0 %3081
        %s3084 = sor.u32 256, 8
        %3085 = vbcast.lane.b32.xlu0 %v3079, %s3084
        %v3086 = vpop.permute.xlu0 %3085
        %s3088 = sor.u32 256, 16
        %3089 = vbcast.lane.b32.xlu0 %v3079, %s3088
        %v3090 = vpop.permute.xlu0 %3089
        %s3092 = sor.u32 256, 24
        %3093 = vbcast.lane.b32.xlu0 %v3079, %s3092
        %v3094 = vpop.permute.xlu0 %3093
        %s3096 = sor.u32 256, 32
        %3097 = vbcast.lane.b32.xlu0 %v3079, %s3096
        %v3098 = vpop.permute.xlu0 %3097
        %s3100 = sor.u32 256, 40
        %3101 = vbcast.lane.b32.xlu0 %v3079, %s3100
        %v3102 = vpop.permute.xlu0 %3101
        %s3104 = sor.u32 256, 48
        %3105 = vbcast.lane.b32.xlu0 %v3079, %s3104
        %v3106 = vpop.permute.xlu0 %3105
        %s3108 = sor.u32 256, 56
        %3109 = vbcast.lane.b32.xlu0 %v3079, %s3108
        %v3110 = vpop.permute.xlu0 %3109
        %s3112 = sor.u32 256, 64
        %3113 = vbcast.lane.b32.xlu0 %v3079, %s3112
        %v3114 = vpop.permute.xlu0 %3113
        %s3116 = sor.u32 256, 72
        %3117 = vbcast.lane.b32.xlu0 %v3079, %s3116
        %v3118 = vpop.permute.xlu0 %3117
        %s3120 = sor.u32 256, 80
        %3121 = vbcast.lane.b32.xlu0 %v3079, %s3120
        %v3122 = vpop.permute.xlu0 %3121
        %s3124 = sor.u32 256, 88
        %3125 = vbcast.lane.b32.xlu0 %v3079, %s3124
        %v3126 = vpop.permute.xlu0 %3125
        %s3128 = sor.u32 256, 96
        %3129 = vbcast.lane.b32.xlu0 %v3079, %s3128
        %v3130 = vpop.permute.xlu0 %3129
        %s3132 = sor.u32 256, 104
        %3133 = vbcast.lane.b32.xlu0 %v3079, %s3132
        %v3134 = vpop.permute.xlu0 %3133
        %s3136 = sor.u32 256, 112
        %3137 = vbcast.lane.b32.xlu0 %v3079, %s3136
        %v3138 = vpop.permute.xlu0 %3137
        %s3140 = sor.u32 256, 120
        %3141 = vbcast.lane.b32.xlu0 %v3079, %s3140
        %v3142 = vpop.permute.xlu0 %3141
        %v3143 = vlaneseq
        %v3144 = vshrl.u32 %v3143, 7
        %v3145 = vsub.s32 4, %v3144
        %v3146 = vrot.slane %v2873, %v3145
        %3148 = vbcast.lane.b32.xlu0 %v3146, 256
        %v3149 = vpop.permute.xlu0 %3148
        %s3151 = sor.u32 256, 8
        %3152 = vbcast.lane.b32.xlu0 %v3146, %s3151
        %v3153 = vpop.permute.xlu0 %3152
        %s3155 = sor.u32 256, 16
        %3156 = vbcast.lane.b32.xlu0 %v3146, %s3155
        %v3157 = vpop.permute.xlu0 %3156
        %s3159 = sor.u32 256, 24
        %3160 = vbcast.lane.b32.xlu0 %v3146, %s3159
        %v3161 = vpop.permute.xlu0 %3160
        %s3163 = sor.u32 256, 32
        %3164 = vbcast.lane.b32.xlu0 %v3146, %s3163
        %v3165 = vpop.permute.xlu0 %3164
        %s3167 = sor.u32 256, 40
        %3168 = vbcast.lane.b32.xlu0 %v3146, %s3167
        %v3169 = vpop.permute.xlu0 %3168
        %s3171 = sor.u32 256, 48
        %3172 = vbcast.lane.b32.xlu0 %v3146, %s3171
        %v3173 = vpop.permute.xlu0 %3172
        %s3175 = sor.u32 256, 56
        %3176 = vbcast.lane.b32.xlu0 %v3146, %s3175
        %v3177 = vpop.permute.xlu0 %3176
        %s3179 = sor.u32 256, 64
        %3180 = vbcast.lane.b32.xlu0 %v3146, %s3179
        %v3181 = vpop.permute.xlu0 %3180
        %s3183 = sor.u32 256, 72
        %3184 = vbcast.lane.b32.xlu0 %v3146, %s3183
        %v3185 = vpop.permute.xlu0 %3184
        %s3187 = sor.u32 256, 80
        %3188 = vbcast.lane.b32.xlu0 %v3146, %s3187
        %v3189 = vpop.permute.xlu0 %3188
        %s3191 = sor.u32 256, 88
        %3192 = vbcast.lane.b32.xlu0 %v3146, %s3191
        %v3193 = vpop.permute.xlu0 %3192
        %s3195 = sor.u32 256, 96
        %3196 = vbcast.lane.b32.xlu0 %v3146, %s3195
        %v3197 = vpop.permute.xlu0 %3196
        %s3199 = sor.u32 256, 104
        %3200 = vbcast.lane.b32.xlu0 %v3146, %s3199
        %v3201 = vpop.permute.xlu0 %3200
        %s3203 = sor.u32 256, 112
        %3204 = vbcast.lane.b32.xlu0 %v3146, %s3203
        %v3205 = vpop.permute.xlu0 %3204
        %s3207 = sor.u32 256, 120
        %3208 = vbcast.lane.b32.xlu0 %v3146, %s3207
        %v3209 = vpop.permute.xlu0 %3208
        %v3210 = vlaneseq
        %v3211 = vshrl.u32 %v3210, 7
        %v3212 = vsub.s32 5, %v3211
        %v3213 = vrot.slane %v2873, %v3212
        %3215 = vbcast.lane.b32.xlu0 %v3213, 256
        %v3216 = vpop.permute.xlu0 %3215
        %s3218 = sor.u32 256, 8
        %3219 = vbcast.lane.b32.xlu0 %v3213, %s3218
        %v3220 = vpop.permute.xlu0 %3219
        %s3222 = sor.u32 256, 16
        %3223 = vbcast.lane.b32.xlu0 %v3213, %s3222
        %v3224 = vpop.permute.xlu0 %3223
        %s3226 = sor.u32 256, 24
        %3227 = vbcast.lane.b32.xlu0 %v3213, %s3226
        %v3228 = vpop.permute.xlu0 %3227
        %s3230 = sor.u32 256, 32
        %3231 = vbcast.lane.b32.xlu0 %v3213, %s3230
        %v3232 = vpop.permute.xlu0 %3231
        %s3234 = sor.u32 256, 40
        %3235 = vbcast.lane.b32.xlu0 %v3213, %s3234
        %v3236 = vpop.permute.xlu0 %3235
        %s3238 = sor.u32 256, 48
        %3239 = vbcast.lane.b32.xlu0 %v3213, %s3238
        %v3240 = vpop.permute.xlu0 %3239
        %s3242 = sor.u32 256, 56
        %3243 = vbcast.lane.b32.xlu0 %v3213, %s3242
        %v3244 = vpop.permute.xlu0 %3243
        %s3246 = sor.u32 256, 64
        %3247 = vbcast.lane.b32.xlu0 %v3213, %s3246
        %v3248 = vpop.permute.xlu0 %3247
        %s3250 = sor.u32 256, 72
        %3251 = vbcast.lane.b32.xlu0 %v3213, %s3250
        %v3252 = vpop.permute.xlu0 %3251
        %s3254 = sor.u32 256, 80
        %3255 = vbcast.lane.b32.xlu0 %v3213, %s3254
        %v3256 = vpop.permute.xlu0 %3255
        %s3258 = sor.u32 256, 88
        %3259 = vbcast.lane.b32.xlu0 %v3213, %s3258
        %v3260 = vpop.permute.xlu0 %3259
        %s3262 = sor.u32 256, 96
        %3263 = vbcast.lane.b32.xlu0 %v3213, %s3262
        %v3264 = vpop.permute.xlu0 %3263
        %s3266 = sor.u32 256, 104
        %3267 = vbcast.lane.b32.xlu0 %v3213, %s3266
        %v3268 = vpop.permute.xlu0 %3267
        %s3270 = sor.u32 256, 112
        %3271 = vbcast.lane.b32.xlu0 %v3213, %s3270
        %v3272 = vpop.permute.xlu0 %3271
        %s3274 = sor.u32 256, 120
        %3275 = vbcast.lane.b32.xlu0 %v3213, %s3274
        %v3276 = vpop.permute.xlu0 %3275
        %v3277 = vlaneseq
        %v3278 = vshrl.u32 %v3277, 7
        %v3279 = vsub.s32 6, %v3278
        %v3280 = vrot.slane %v2873, %v3279
        %3282 = vbcast.lane.b32.xlu0 %v3280, 256
        %v3283 = vpop.permute.xlu0 %3282
        %s3285 = sor.u32 256, 8
        %3286 = vbcast.lane.b32.xlu0 %v3280, %s3285
        %v3287 = vpop.permute.xlu0 %3286
        %s3289 = sor.u32 256, 16
        %3290 = vbcast.lane.b32.xlu0 %v3280, %s3289
        %v3291 = vpop.permute.xlu0 %3290
        %s3293 = sor.u32 256, 24
        %3294 = vbcast.lane.b32.xlu0 %v3280, %s3293
        %v3295 = vpop.permute.xlu0 %3294
        %s3297 = sor.u32 256, 32
        %3298 = vbcast.lane.b32.xlu0 %v3280, %s3297
        %v3299 = vpop.permute.xlu0 %3298
        %s3301 = sor.u32 256, 40
        %3302 = vbcast.lane.b32.xlu0 %v3280, %s3301
        %v3303 = vpop.permute.xlu0 %3302
        %s3305 = sor.u32 256, 48
        %3306 = vbcast.lane.b32.xlu0 %v3280, %s3305
        %v3307 = vpop.permute.xlu0 %3306
        %s3309 = sor.u32 256, 56
        %3310 = vbcast.lane.b32.xlu0 %v3280, %s3309
        %v3311 = vpop.permute.xlu0 %3310
        %s3313 = sor.u32 256, 64
        %3314 = vbcast.lane.b32.xlu0 %v3280, %s3313
        %v3315 = vpop.permute.xlu0 %3314
        %s3317 = sor.u32 256, 72
        %3318 = vbcast.lane.b32.xlu0 %v3280, %s3317
        %v3319 = vpop.permute.xlu0 %3318
        %s3321 = sor.u32 256, 80
        %3322 = vbcast.lane.b32.xlu0 %v3280, %s3321
        %v3323 = vpop.permute.xlu0 %3322
        %s3325 = sor.u32 256, 88
        %3326 = vbcast.lane.b32.xlu0 %v3280, %s3325
        %v3327 = vpop.permute.xlu0 %3326
        %s3329 = sor.u32 256, 96
        %3330 = vbcast.lane.b32.xlu0 %v3280, %s3329
        %v3331 = vpop.permute.xlu0 %3330
        %s3333 = sor.u32 256, 104
        %3334 = vbcast.lane.b32.xlu0 %v3280, %s3333
        %v3335 = vpop.permute.xlu0 %3334
        %s3337 = sor.u32 256, 112
        %3338 = vbcast.lane.b32.xlu0 %v3280, %s3337
        %v3339 = vpop.permute.xlu0 %3338
        %s3341 = sor.u32 256, 120
        %3342 = vbcast.lane.b32.xlu0 %v3280, %s3341
        %v3343 = vpop.permute.xlu0 %3342
        %v3344 = vlaneseq
        %v3345 = vshrl.u32 %v3344, 7
        %v3346 = vsub.s32 7, %v3345
        %v3347 = vrot.slane %v2873, %v3346
        %3349 = vbcast.lane.b32.xlu0 %v3347, 256
        %v3350 = vpop.permute.xlu0 %3349
        %s3352 = sor.u32 256, 8
        %3353 = vbcast.lane.b32.xlu0 %v3347, %s3352
        %v3354 = vpop.permute.xlu0 %3353
        %s3356 = sor.u32 256, 16
        %3357 = vbcast.lane.b32.xlu0 %v3347, %s3356
        %v3358 = vpop.permute.xlu0 %3357
        %s3360 = sor.u32 256, 24
        %3361 = vbcast.lane.b32.xlu0 %v3347, %s3360
        %v3362 = vpop.permute.xlu0 %3361
        %s3364 = sor.u32 256, 32
        %3365 = vbcast.lane.b32.xlu0 %v3347, %s3364
        %v3366 = vpop.permute.xlu0 %3365
        %s3368 = sor.u32 256, 40
        %3369 = vbcast.lane.b32.xlu0 %v3347, %s3368
        %v3370 = vpop.permute.xlu0 %3369
        %s3372 = sor.u32 256, 48
        %3373 = vbcast.lane.b32.xlu0 %v3347, %s3372
        %v3374 = vpop.permute.xlu0 %3373
        %s3376 = sor.u32 256, 56
        %3377 = vbcast.lane.b32.xlu0 %v3347, %s3376
        %v3378 = vpop.permute.xlu0 %3377
        %s3380 = sor.u32 256, 64
        %3381 = vbcast.lane.b32.xlu0 %v3347, %s3380
        %v3382 = vpop.permute.xlu0 %3381
        %s3384 = sor.u32 256, 72
        %3385 = vbcast.lane.b32.xlu0 %v3347, %s3384
        %v3386 = vpop.permute.xlu0 %3385
        %s3388 = sor.u32 256, 80
        %3389 = vbcast.lane.b32.xlu0 %v3347, %s3388
        %v3390 = vpop.permute.xlu0 %3389
        %s3392 = sor.u32 256, 88
        %3393 = vbcast.lane.b32.xlu0 %v3347, %s3392
        %v3394 = vpop.permute.xlu0 %3393
        %s3396 = sor.u32 256, 96
        %3397 = vbcast.lane.b32.xlu0 %v3347, %s3396
        %v3398 = vpop.permute.xlu0 %3397
        %s3400 = sor.u32 256, 104
        %3401 = vbcast.lane.b32.xlu0 %v3347, %s3400
        %v3402 = vpop.permute.xlu0 %3401
        %s3404 = sor.u32 256, 112
        %3405 = vbcast.lane.b32.xlu0 %v3347, %s3404
        %v3406 = vpop.permute.xlu0 %3405
        %s3408 = sor.u32 256, 120
        %3409 = vbcast.lane.b32.xlu0 %v3347, %s3408
        %v3410 = vpop.permute.xlu0 %3409
        %v3411 = vlaneseq
        %v3412 = vshrl.u32 %v3411, 7
        %v3413 = vsub.s32 0, %v3412
        %v3414 = vrot.slane %v2874, %v3413
        %3416 = vbcast.lane.b32.xlu0 %v3414, 256
        %v3417 = vpop.permute.xlu0 %3416
        %s3419 = sor.u32 256, 8
        %3420 = vbcast.lane.b32.xlu0 %v3414, %s3419
        %v3421 = vpop.permute.xlu0 %3420
        %s3423 = sor.u32 256, 16
        %3424 = vbcast.lane.b32.xlu0 %v3414, %s3423
        %v3425 = vpop.permute.xlu0 %3424
        %s3427 = sor.u32 256, 24
        %3428 = vbcast.lane.b32.xlu0 %v3414, %s3427
        %v3429 = vpop.permute.xlu0 %3428
        %s3431 = sor.u32 256, 32
        %3432 = vbcast.lane.b32.xlu0 %v3414, %s3431
        %v3433 = vpop.permute.xlu0 %3432
        %s3435 = sor.u32 256, 40
        %3436 = vbcast.lane.b32.xlu0 %v3414, %s3435
        %v3437 = vpop.permute.xlu0 %3436
        %s3439 = sor.u32 256, 48
        %3440 = vbcast.lane.b32.xlu0 %v3414, %s3439
        %v3441 = vpop.permute.xlu0 %3440
        %s3443 = sor.u32 256, 56
        %3444 = vbcast.lane.b32.xlu0 %v3414, %s3443
        %v3445 = vpop.permute.xlu0 %3444
        %s3447 = sor.u32 256, 64
        %3448 = vbcast.lane.b32.xlu0 %v3414, %s3447
        %v3449 = vpop.permute.xlu0 %3448
        %s3451 = sor.u32 256, 72
        %3452 = vbcast.lane.b32.xlu0 %v3414, %s3451
        %v3453 = vpop.permute.xlu0 %3452
        %s3455 = sor.u32 256, 80
        %3456 = vbcast.lane.b32.xlu0 %v3414, %s3455
        %v3457 = vpop.permute.xlu0 %3456
        %s3459 = sor.u32 256, 88
        %3460 = vbcast.lane.b32.xlu0 %v3414, %s3459
        %v3461 = vpop.permute.xlu0 %3460
        %s3463 = sor.u32 256, 96
        %3464 = vbcast.lane.b32.xlu0 %v3414, %s3463
        %v3465 = vpop.permute.xlu0 %3464
        %s3467 = sor.u32 256, 104
        %3468 = vbcast.lane.b32.xlu0 %v3414, %s3467
        %v3469 = vpop.permute.xlu0 %3468
        %s3471 = sor.u32 256, 112
        %3472 = vbcast.lane.b32.xlu0 %v3414, %s3471
        %v3473 = vpop.permute.xlu0 %3472
        %s3475 = sor.u32 256, 120
        %3476 = vbcast.lane.b32.xlu0 %v3414, %s3475
        %v3477 = vpop.permute.xlu0 %3476
        %v3478 = vlaneseq
        %v3479 = vshrl.u32 %v3478, 7
        %v3480 = vsub.s32 1, %v3479
        %v3481 = vrot.slane %v2874, %v3480
        %3483 = vbcast.lane.b32.xlu0 %v3481, 256
        %v3484 = vpop.permute.xlu0 %3483
        %s3486 = sor.u32 256, 8
        %3487 = vbcast.lane.b32.xlu0 %v3481, %s3486
        %v3488 = vpop.permute.xlu0 %3487
        %s3490 = sor.u32 256, 16
        %3491 = vbcast.lane.b32.xlu0 %v3481, %s3490
        %v3492 = vpop.permute.xlu0 %3491
        %s3494 = sor.u32 256, 24
        %3495 = vbcast.lane.b32.xlu0 %v3481, %s3494
        %v3496 = vpop.permute.xlu0 %3495
        %s3498 = sor.u32 256, 32
        %3499 = vbcast.lane.b32.xlu0 %v3481, %s3498
        %v3500 = vpop.permute.xlu0 %3499
        %s3502 = sor.u32 256, 40
        %3503 = vbcast.lane.b32.xlu0 %v3481, %s3502
        %v3504 = vpop.permute.xlu0 %3503
        %s3506 = sor.u32 256, 48
        %3507 = vbcast.lane.b32.xlu0 %v3481, %s3506
        %v3508 = vpop.permute.xlu0 %3507
        %s3510 = sor.u32 256, 56
        %3511 = vbcast.lane.b32.xlu0 %v3481, %s3510
        %v3512 = vpop.permute.xlu0 %3511
        %s3514 = sor.u32 256, 64
        %3515 = vbcast.lane.b32.xlu0 %v3481, %s3514
        %v3516 = vpop.permute.xlu0 %3515
        %s3518 = sor.u32 256, 72
        %3519 = vbcast.lane.b32.xlu0 %v3481, %s3518
        %v3520 = vpop.permute.xlu0 %3519
        %s3522 = sor.u32 256, 80
        %3523 = vbcast.lane.b32.xlu0 %v3481, %s3522
        %v3524 = vpop.permute.xlu0 %3523
        %s3526 = sor.u32 256, 88
        %3527 = vbcast.lane.b32.xlu0 %v3481, %s3526
        %v3528 = vpop.permute.xlu0 %3527
        %s3530 = sor.u32 256, 96
        %3531 = vbcast.lane.b32.xlu0 %v3481, %s3530
        %v3532 = vpop.permute.xlu0 %3531
        %s3534 = sor.u32 256, 104
        %3535 = vbcast.lane.b32.xlu0 %v3481, %s3534
        %v3536 = vpop.permute.xlu0 %3535
        %s3538 = sor.u32 256, 112
        %3539 = vbcast.lane.b32.xlu0 %v3481, %s3538
        %v3540 = vpop.permute.xlu0 %3539
        %s3542 = sor.u32 256, 120
        %3543 = vbcast.lane.b32.xlu0 %v3481, %s3542
        %v3544 = vpop.permute.xlu0 %3543
        %v3545 = vlaneseq
        %v3546 = vshrl.u32 %v3545, 7
        %v3547 = vsub.s32 2, %v3546
        %v3548 = vrot.slane %v2874, %v3547
        %3550 = vbcast.lane.b32.xlu0 %v3548, 256
        %v3551 = vpop.permute.xlu0 %3550
        %s3553 = sor.u32 256, 8
        %3554 = vbcast.lane.b32.xlu0 %v3548, %s3553
        %v3555 = vpop.permute.xlu0 %3554
        %s3557 = sor.u32 256, 16
        %3558 = vbcast.lane.b32.xlu0 %v3548, %s3557
        %v3559 = vpop.permute.xlu0 %3558
        %s3561 = sor.u32 256, 24
        %3562 = vbcast.lane.b32.xlu0 %v3548, %s3561
        %v3563 = vpop.permute.xlu0 %3562
        %s3565 = sor.u32 256, 32
        %3566 = vbcast.lane.b32.xlu0 %v3548, %s3565
        %v3567 = vpop.permute.xlu0 %3566
        %s3569 = sor.u32 256, 40
        %3570 = vbcast.lane.b32.xlu0 %v3548, %s3569
        %v3571 = vpop.permute.xlu0 %3570
        %s3573 = sor.u32 256, 48
        %3574 = vbcast.lane.b32.xlu0 %v3548, %s3573
        %v3575 = vpop.permute.xlu0 %3574
        %s3577 = sor.u32 256, 56
        %3578 = vbcast.lane.b32.xlu0 %v3548, %s3577
        %v3579 = vpop.permute.xlu0 %3578
        %s3581 = sor.u32 256, 64
        %3582 = vbcast.lane.b32.xlu0 %v3548, %s3581
        %v3583 = vpop.permute.xlu0 %3582
        %s3585 = sor.u32 256, 72
        %3586 = vbcast.lane.b32.xlu0 %v3548, %s3585
        %v3587 = vpop.permute.xlu0 %3586
        %s3589 = sor.u32 256, 80
        %3590 = vbcast.lane.b32.xlu0 %v3548, %s3589
        %v3591 = vpop.permute.xlu0 %3590
        %s3593 = sor.u32 256, 88
        %3594 = vbcast.lane.b32.xlu0 %v3548, %s3593
        %v3595 = vpop.permute.xlu0 %3594
        %s3597 = sor.u32 256, 96
        %3598 = vbcast.lane.b32.xlu0 %v3548, %s3597
        %v3599 = vpop.permute.xlu0 %3598
        %s3601 = sor.u32 256, 104
        %3602 = vbcast.lane.b32.xlu0 %v3548, %s3601
        %v3603 = vpop.permute.xlu0 %3602
        %s3605 = sor.u32 256, 112
        %3606 = vbcast.lane.b32.xlu0 %v3548, %s3605
        %v3607 = vpop.permute.xlu0 %3606
        %s3609 = sor.u32 256, 120
        %3610 = vbcast.lane.b32.xlu0 %v3548, %s3609
        %v3611 = vpop.permute.xlu0 %3610
        %v3612 = vlaneseq
        %v3613 = vshrl.u32 %v3612, 7
        %v3614 = vsub.s32 3, %v3613
        %v3615 = vrot.slane %v2874, %v3614
        %3617 = vbcast.lane.b32.xlu0 %v3615, 256
        %v3618 = vpop.permute.xlu0 %3617
        %s3620 = sor.u32 256, 8
        %3621 = vbcast.lane.b32.xlu0 %v3615, %s3620
        %v3622 = vpop.permute.xlu0 %3621
        %s3624 = sor.u32 256, 16
        %3625 = vbcast.lane.b32.xlu0 %v3615, %s3624
        %v3626 = vpop.permute.xlu0 %3625
        %s3628 = sor.u32 256, 24
        %3629 = vbcast.lane.b32.xlu0 %v3615, %s3628
        %v3630 = vpop.permute.xlu0 %3629
        %s3632 = sor.u32 256, 32
        %3633 = vbcast.lane.b32.xlu0 %v3615, %s3632
        %v3634 = vpop.permute.xlu0 %3633
        %s3636 = sor.u32 256, 40
        %3637 = vbcast.lane.b32.xlu0 %v3615, %s3636
        %v3638 = vpop.permute.xlu0 %3637
        %s3640 = sor.u32 256, 48
        %3641 = vbcast.lane.b32.xlu0 %v3615, %s3640
        %v3642 = vpop.permute.xlu0 %3641
        %s3644 = sor.u32 256, 56
        %3645 = vbcast.lane.b32.xlu0 %v3615, %s3644
        %v3646 = vpop.permute.xlu0 %3645
        %s3648 = sor.u32 256, 64
        %3649 = vbcast.lane.b32.xlu0 %v3615, %s3648
        %v3650 = vpop.permute.xlu0 %3649
        %s3652 = sor.u32 256, 72
        %3653 = vbcast.lane.b32.xlu0 %v3615, %s3652
        %v3654 = vpop.permute.xlu0 %3653
        %s3656 = sor.u32 256, 80
        %3657 = vbcast.lane.b32.xlu0 %v3615, %s3656
        %v3658 = vpop.permute.xlu0 %3657
        %s3660 = sor.u32 256, 88
        %3661 = vbcast.lane.b32.xlu0 %v3615, %s3660
        %v3662 = vpop.permute.xlu0 %3661
        %s3664 = sor.u32 256, 96
        %3665 = vbcast.lane.b32.xlu0 %v3615, %s3664
        %v3666 = vpop.permute.xlu0 %3665
        %s3668 = sor.u32 256, 104
        %3669 = vbcast.lane.b32.xlu0 %v3615, %s3668
        %v3670 = vpop.permute.xlu0 %3669
        %s3672 = sor.u32 256, 112
        %3673 = vbcast.lane.b32.xlu0 %v3615, %s3672
        %v3674 = vpop.permute.xlu0 %3673
        %s3676 = sor.u32 256, 120
        %3677 = vbcast.lane.b32.xlu0 %v3615, %s3676
        %v3678 = vpop.permute.xlu0 %3677
        %v3679 = vlaneseq
        %v3680 = vshrl.u32 %v3679, 7
        %v3681 = vsub.s32 4, %v3680
        %v3682 = vrot.slane %v2874, %v3681
        %3684 = vbcast.lane.b32.xlu0 %v3682, 256
        %v3685 = vpop.permute.xlu0 %3684
        %s3687 = sor.u32 256, 8
        %3688 = vbcast.lane.b32.xlu0 %v3682, %s3687
        %v3689 = vpop.permute.xlu0 %3688
        %s3691 = sor.u32 256, 16
        %3692 = vbcast.lane.b32.xlu0 %v3682, %s3691
        %v3693 = vpop.permute.xlu0 %3692
        %s3695 = sor.u32 256, 24
        %3696 = vbcast.lane.b32.xlu0 %v3682, %s3695
        %v3697 = vpop.permute.xlu0 %3696
        %s3699 = sor.u32 256, 32
        %3700 = vbcast.lane.b32.xlu0 %v3682, %s3699
        %v3701 = vpop.permute.xlu0 %3700
        %s3703 = sor.u32 256, 40
        %3704 = vbcast.lane.b32.xlu0 %v3682, %s3703
        %v3705 = vpop.permute.xlu0 %3704
        %s3707 = sor.u32 256, 48
        %3708 = vbcast.lane.b32.xlu0 %v3682, %s3707
        %v3709 = vpop.permute.xlu0 %3708
        %s3711 = sor.u32 256, 56
        %3712 = vbcast.lane.b32.xlu0 %v3682, %s3711
        %v3713 = vpop.permute.xlu0 %3712
        %s3715 = sor.u32 256, 64
        %3716 = vbcast.lane.b32.xlu0 %v3682, %s3715
        %v3717 = vpop.permute.xlu0 %3716
        %s3719 = sor.u32 256, 72
        %3720 = vbcast.lane.b32.xlu0 %v3682, %s3719
        %v3721 = vpop.permute.xlu0 %3720
        %s3723 = sor.u32 256, 80
        %3724 = vbcast.lane.b32.xlu0 %v3682, %s3723
        %v3725 = vpop.permute.xlu0 %3724
        %s3727 = sor.u32 256, 88
        %3728 = vbcast.lane.b32.xlu0 %v3682, %s3727
        %v3729 = vpop.permute.xlu0 %3728
        %s3731 = sor.u32 256, 96
        %3732 = vbcast.lane.b32.xlu0 %v3682, %s3731
        %v3733 = vpop.permute.xlu0 %3732
        %s3735 = sor.u32 256, 104
        %3736 = vbcast.lane.b32.xlu0 %v3682, %s3735
        %v3737 = vpop.permute.xlu0 %3736
        %s3739 = sor.u32 256, 112
        %3740 = vbcast.lane.b32.xlu0 %v3682, %s3739
        %v3741 = vpop.permute.xlu0 %3740
        %s3743 = sor.u32 256, 120
        %3744 = vbcast.lane.b32.xlu0 %v3682, %s3743
        %v3745 = vpop.permute.xlu0 %3744
        %v3746 = vlaneseq
        %v3747 = vshrl.u32 %v3746, 7
        %v3748 = vsub.s32 5, %v3747
        %v3749 = vrot.slane %v2874, %v3748
        %3751 = vbcast.lane.b32.xlu0 %v3749, 256
        %v3752 = vpop.permute.xlu0 %3751
        %s3754 = sor.u32 256, 8
        %3755 = vbcast.lane.b32.xlu0 %v3749, %s3754
        %v3756 = vpop.permute.xlu0 %3755
        %s3758 = sor.u32 256, 16
        %3759 = vbcast.lane.b32.xlu0 %v3749, %s3758
        %v3760 = vpop.permute.xlu0 %3759
        %s3762 = sor.u32 256, 24
        %3763 = vbcast.lane.b32.xlu0 %v3749, %s3762
        %v3764 = vpop.permute.xlu0 %3763
        %s3766 = sor.u32 256, 32
        %3767 = vbcast.lane.b32.xlu0 %v3749, %s3766
        %v3768 = vpop.permute.xlu0 %3767
        %s3770 = sor.u32 256, 40
        %3771 = vbcast.lane.b32.xlu0 %v3749, %s3770
        %v3772 = vpop.permute.xlu0 %3771
        %s3774 = sor.u32 256, 48
        %3775 = vbcast.lane.b32.xlu0 %v3749, %s3774
        %v3776 = vpop.permute.xlu0 %3775
        %s3778 = sor.u32 256, 56
        %3779 = vbcast.lane.b32.xlu0 %v3749, %s3778
        %v3780 = vpop.permute.xlu0 %3779
        %s3782 = sor.u32 256, 64
        %3783 = vbcast.lane.b32.xlu0 %v3749, %s3782
        %v3784 = vpop.permute.xlu0 %3783
        %s3786 = sor.u32 256, 72
        %3787 = vbcast.lane.b32.xlu0 %v3749, %s3786
        %v3788 = vpop.permute.xlu0 %3787
        %s3790 = sor.u32 256, 80
        %3791 = vbcast.lane.b32.xlu0 %v3749, %s3790
        %v3792 = vpop.permute.xlu0 %3791
        %s3794 = sor.u32 256, 88
        %3795 = vbcast.lane.b32.xlu0 %v3749, %s3794
        %v3796 = vpop.permute.xlu0 %3795
        %s3798 = sor.u32 256, 96
        %3799 = vbcast.lane.b32.xlu0 %v3749, %s3798
        %v3800 = vpop.permute.xlu0 %3799
        %s3802 = sor.u32 256, 104
        %3803 = vbcast.lane.b32.xlu0 %v3749, %s3802
        %v3804 = vpop.permute.xlu0 %3803
        %s3806 = sor.u32 256, 112
        %3807 = vbcast.lane.b32.xlu0 %v3749, %s3806
        %v3808 = vpop.permute.xlu0 %3807
        %s3810 = sor.u32 256, 120
        %3811 = vbcast.lane.b32.xlu0 %v3749, %s3810
        %v3812 = vpop.permute.xlu0 %3811
        %v3813 = vlaneseq
        %v3814 = vshrl.u32 %v3813, 7
        %v3815 = vsub.s32 6, %v3814
        %v3816 = vrot.slane %v2874, %v3815
        %3818 = vbcast.lane.b32.xlu0 %v3816, 256
        %v3819 = vpop.permute.xlu0 %3818
        %s3821 = sor.u32 256, 8
        %3822 = vbcast.lane.b32.xlu0 %v3816, %s3821
        %v3823 = vpop.permute.xlu0 %3822
        %s3825 = sor.u32 256, 16
        %3826 = vbcast.lane.b32.xlu0 %v3816, %s3825
        %v3827 = vpop.permute.xlu0 %3826
        %s3829 = sor.u32 256, 24
        %3830 = vbcast.lane.b32.xlu0 %v3816, %s3829
        %v3831 = vpop.permute.xlu0 %3830
        %s3833 = sor.u32 256, 32
        %3834 = vbcast.lane.b32.xlu0 %v3816, %s3833
        %v3835 = vpop.permute.xlu0 %3834
        %s3837 = sor.u32 256, 40
        %3838 = vbcast.lane.b32.xlu0 %v3816, %s3837
        %v3839 = vpop.permute.xlu0 %3838
        %s3841 = sor.u32 256, 48
        %3842 = vbcast.lane.b32.xlu0 %v3816, %s3841
        %v3843 = vpop.permute.xlu0 %3842
        %s3845 = sor.u32 256, 56
        %3846 = vbcast.lane.b32.xlu0 %v3816, %s3845
        %v3847 = vpop.permute.xlu0 %3846
        %s3849 = sor.u32 256, 64
        %3850 = vbcast.lane.b32.xlu0 %v3816, %s3849
        %v3851 = vpop.permute.xlu0 %3850
        %s3853 = sor.u32 256, 72
        %3854 = vbcast.lane.b32.xlu0 %v3816, %s3853
        %v3855 = vpop.permute.xlu0 %3854
        %s3857 = sor.u32 256, 80
        %3858 = vbcast.lane.b32.xlu0 %v3816, %s3857
        %v3859 = vpop.permute.xlu0 %3858
        %s3861 = sor.u32 256, 88
        %3862 = vbcast.lane.b32.xlu0 %v3816, %s3861
        %v3863 = vpop.permute.xlu0 %3862
        %s3865 = sor.u32 256, 96
        %3866 = vbcast.lane.b32.xlu0 %v3816, %s3865
        %v3867 = vpop.permute.xlu0 %3866
        %s3869 = sor.u32 256, 104
        %3870 = vbcast.lane.b32.xlu0 %v3816, %s3869
        %v3871 = vpop.permute.xlu0 %3870
        %s3873 = sor.u32 256, 112
        %3874 = vbcast.lane.b32.xlu0 %v3816, %s3873
        %v3875 = vpop.permute.xlu0 %3874
        %s3877 = sor.u32 256, 120
        %3878 = vbcast.lane.b32.xlu0 %v3816, %s3877
        %v3879 = vpop.permute.xlu0 %3878
        %v3880 = vlaneseq
        %v3881 = vshrl.u32 %v3880, 7
        %v3882 = vsub.s32 7, %v3881
        %v3883 = vrot.slane %v2874, %v3882
        %3885 = vbcast.lane.b32.xlu0 %v3883, 256
        %v3886 = vpop.permute.xlu0 %3885
        %s3888 = sor.u32 256, 8
        %3889 = vbcast.lane.b32.xlu0 %v3883, %s3888
        %v3890 = vpop.permute.xlu0 %3889
        %s3892 = sor.u32 256, 16
        %3893 = vbcast.lane.b32.xlu0 %v3883, %s3892
        %v3894 = vpop.permute.xlu0 %3893
        %s3896 = sor.u32 256, 24
        %3897 = vbcast.lane.b32.xlu0 %v3883, %s3896
        %v3898 = vpop.permute.xlu0 %3897
        %s3900 = sor.u32 256, 32
        %3901 = vbcast.lane.b32.xlu0 %v3883, %s3900
        %v3902 = vpop.permute.xlu0 %3901
        %s3904 = sor.u32 256, 40
        %3905 = vbcast.lane.b32.xlu0 %v3883, %s3904
        %v3906 = vpop.permute.xlu0 %3905
        %s3908 = sor.u32 256, 48
        %3909 = vbcast.lane.b32.xlu0 %v3883, %s3908
        %v3910 = vpop.permute.xlu0 %3909
        %s3912 = sor.u32 256, 56
        %3913 = vbcast.lane.b32.xlu0 %v3883, %s3912
        %v3914 = vpop.permute.xlu0 %3913
        %s3916 = sor.u32 256, 64
        %3917 = vbcast.lane.b32.xlu0 %v3883, %s3916
        %v3918 = vpop.permute.xlu0 %3917
        %s3920 = sor.u32 256, 72
        %3921 = vbcast.lane.b32.xlu0 %v3883, %s3920
        %v3922 = vpop.permute.xlu0 %3921
        %s3924 = sor.u32 256, 80
        %3925 = vbcast.lane.b32.xlu0 %v3883, %s3924
        %v3926 = vpop.permute.xlu0 %3925
        %s3928 = sor.u32 256, 88
        %3929 = vbcast.lane.b32.xlu0 %v3883, %s3928
        %v3930 = vpop.permute.xlu0 %3929
        %s3932 = sor.u32 256, 96
        %3933 = vbcast.lane.b32.xlu0 %v3883, %s3932
        %v3934 = vpop.permute.xlu0 %3933
        %s3936 = sor.u32 256, 104
        %3937 = vbcast.lane.b32.xlu0 %v3883, %s3936
        %v3938 = vpop.permute.xlu0 %3937
        %s3940 = sor.u32 256, 112
        %3941 = vbcast.lane.b32.xlu0 %v3883, %s3940
        %v3942 = vpop.permute.xlu0 %3941
        %s3944 = sor.u32 256, 120
        %3945 = vbcast.lane.b32.xlu0 %v3883, %s3944
        %v3946 = vpop.permute.xlu0 %3945
        %vm3947 = vcmp.eq.s32.totalorder %v2881, %v234
        %vm3948 = vcmp.eq.s32.totalorder %v2885, %v234
        %vm3949 = vcmp.eq.s32.totalorder %v2889, %v234
        %vm3950 = vcmp.eq.s32.totalorder %v2893, %v234
        %vm3951 = vcmp.eq.s32.totalorder %v2897, %v234
        %vm3952 = vcmp.eq.s32.totalorder %v2901, %v234
        %vm3953 = vcmp.eq.s32.totalorder %v2905, %v234
        %vm3954 = vcmp.eq.s32.totalorder %v2909, %v234
        %vm3955 = vcmp.eq.s32.totalorder %v2913, %v234
        %vm3956 = vcmp.eq.s32.totalorder %v2917, %v234
        %vm3957 = vcmp.eq.s32.totalorder %v2921, %v234
        %vm3958 = vcmp.eq.s32.totalorder %v2925, %v234
        %vm3959 = vcmp.eq.s32.totalorder %v2929, %v234
        %vm3960 = vcmp.eq.s32.totalorder %v2933, %v234
        %vm3961 = vcmp.eq.s32.totalorder %v2937, %v234
        %vm3962 = vcmp.eq.s32.totalorder %v2941, %v234
        %vm3963 = vcmp.eq.s32.totalorder %v2948, %v234
        %vm3964 = vcmp.eq.s32.totalorder %v2952, %v234
        %vm3965 = vcmp.eq.s32.totalorder %v2956, %v234
        %vm3966 = vcmp.eq.s32.totalorder %v2960, %v234
        %vm3967 = vcmp.eq.s32.totalorder %v2964, %v234
        %vm3968 = vcmp.eq.s32.totalorder %v2968, %v234
        %vm3969 = vcmp.eq.s32.totalorder %v2972, %v234
        %vm3970 = vcmp.eq.s32.totalorder %v2976, %v234
        %vm3971 = vcmp.eq.s32.totalorder %v2980, %v234
        %vm3972 = vcmp.eq.s32.totalorder %v2984, %v234
        %vm3973 = vcmp.eq.s32.totalorder %v2988, %v234
        %vm3974 = vcmp.eq.s32.totalorder %v2992, %v234
        %vm3975 = vcmp.eq.s32.totalorder %v2996, %v234
        %vm3976 = vcmp.eq.s32.totalorder %v3000, %v234
        %vm3977 = vcmp.eq.s32.totalorder %v3004, %v234
        %vm3978 = vcmp.eq.s32.totalorder %v3008, %v234
        %vm3979 = vcmp.eq.s32.totalorder %v3015, %v234
        %vm3980 = vcmp.eq.s32.totalorder %v3019, %v234
        %vm3981 = vcmp.eq.s32.totalorder %v3023, %v234
        %vm3982 = vcmp.eq.s32.totalorder %v3027, %v234
        %vm3983 = vcmp.eq.s32.totalorder %v3031, %v234
        %vm3984 = vcmp.eq.s32.totalorder %v3035, %v234
        %vm3985 = vcmp.eq.s32.totalorder %v3039, %v234
        %vm3986 = vcmp.eq.s32.totalorder %v3043, %v234
        %vm3987 = vcmp.eq.s32.totalorder %v3047, %v234
        %vm3988 = vcmp.eq.s32.totalorder %v3051, %v234
        %vm3989 = vcmp.eq.s32.totalorder %v3055, %v234
        %vm3990 = vcmp.eq.s32.totalorder %v3059, %v234
        %vm3991 = vcmp.eq.s32.totalorder %v3063, %v234
        %vm3992 = vcmp.eq.s32.totalorder %v3067, %v234
        %vm3993 = vcmp.eq.s32.totalorder %v3071, %v234
        %vm3994 = vcmp.eq.s32.totalorder %v3075, %v234
        %vm3995 = vcmp.eq.s32.totalorder %v3082, %v234
        %vm3996 = vcmp.eq.s32.totalorder %v3086, %v234
        %vm3997 = vcmp.eq.s32.totalorder %v3090, %v234
        %vm3998 = vcmp.eq.s32.totalorder %v3094, %v234
        %vm3999 = vcmp.eq.s32.totalorder %v3098, %v234
        %vm4000 = vcmp.eq.s32.totalorder %v3102, %v234
        %vm4001 = vcmp.eq.s32.totalorder %v3106, %v234
        %vm4002 = vcmp.eq.s32.totalorder %v3110, %v234
        %vm4003 = vcmp.eq.s32.totalorder %v3114, %v234
        %vm4004 = vcmp.eq.s32.totalorder %v3118, %v234
        %vm4005 = vcmp.eq.s32.totalorder %v3122, %v234
        %vm4006 = vcmp.eq.s32.totalorder %v3126, %v234
        %vm4007 = vcmp.eq.s32.totalorder %v3130, %v234
        %vm4008 = vcmp.eq.s32.totalorder %v3134, %v234
        %vm4009 = vcmp.eq.s32.totalorder %v3138, %v234
        %vm4010 = vcmp.eq.s32.totalorder %v3142, %v234
        %vm4011 = vcmp.eq.s32.totalorder %v3149, %v234
        %vm4012 = vcmp.eq.s32.totalorder %v3153, %v234
        %vm4013 = vcmp.eq.s32.totalorder %v3157, %v234
        %vm4014 = vcmp.eq.s32.totalorder %v3161, %v234
        %vm4015 = vcmp.eq.s32.totalorder %v3165, %v234
        %vm4016 = vcmp.eq.s32.totalorder %v3169, %v234
        %vm4017 = vcmp.eq.s32.totalorder %v3173, %v234
        %vm4018 = vcmp.eq.s32.totalorder %v3177, %v234
        %vm4019 = vcmp.eq.s32.totalorder %v3181, %v234
        %vm4020 = vcmp.eq.s32.totalorder %v3185, %v234
        %vm4021 = vcmp.eq.s32.totalorder %v3189, %v234
        %vm4022 = vcmp.eq.s32.totalorder %v3193, %v234
        %vm4023 = vcmp.eq.s32.totalorder %v3197, %v234
        %vm4024 = vcmp.eq.s32.totalorder %v3201, %v234
        %vm4025 = vcmp.eq.s32.totalorder %v3205, %v234
        %vm4026 = vcmp.eq.s32.totalorder %v3209, %v234
        %vm4027 = vcmp.eq.s32.totalorder %v3216, %v234
        %vm4028 = vcmp.eq.s32.totalorder %v3220, %v234
        %vm4029 = vcmp.eq.s32.totalorder %v3224, %v234
        %vm4030 = vcmp.eq.s32.totalorder %v3228, %v234
        %vm4031 = vcmp.eq.s32.totalorder %v3232, %v234
        %vm4032 = vcmp.eq.s32.totalorder %v3236, %v234
        %vm4033 = vcmp.eq.s32.totalorder %v3240, %v234
        %vm4034 = vcmp.eq.s32.totalorder %v3244, %v234
        %vm4035 = vcmp.eq.s32.totalorder %v3248, %v234
        %vm4036 = vcmp.eq.s32.totalorder %v3252, %v234
        %vm4037 = vcmp.eq.s32.totalorder %v3256, %v234
        %vm4038 = vcmp.eq.s32.totalorder %v3260, %v234
        %vm4039 = vcmp.eq.s32.totalorder %v3264, %v234
        %vm4040 = vcmp.eq.s32.totalorder %v3268, %v234
        %vm4041 = vcmp.eq.s32.totalorder %v3272, %v234
        %vm4042 = vcmp.eq.s32.totalorder %v3276, %v234
        %vm4043 = vcmp.eq.s32.totalorder %v3283, %v234
        %vm4044 = vcmp.eq.s32.totalorder %v3287, %v234
        %vm4045 = vcmp.eq.s32.totalorder %v3291, %v234
        %vm4046 = vcmp.eq.s32.totalorder %v3295, %v234
        %vm4047 = vcmp.eq.s32.totalorder %v3299, %v234
        %vm4048 = vcmp.eq.s32.totalorder %v3303, %v234
        %vm4049 = vcmp.eq.s32.totalorder %v3307, %v234
        %vm4050 = vcmp.eq.s32.totalorder %v3311, %v234
        %vm4051 = vcmp.eq.s32.totalorder %v3315, %v234
        %vm4052 = vcmp.eq.s32.totalorder %v3319, %v234
        %vm4053 = vcmp.eq.s32.totalorder %v3323, %v234
        %vm4054 = vcmp.eq.s32.totalorder %v3327, %v234
        %vm4055 = vcmp.eq.s32.totalorder %v3331, %v234
        %vm4056 = vcmp.eq.s32.totalorder %v3335, %v234
        %vm4057 = vcmp.eq.s32.totalorder %v3339, %v234
        %vm4058 = vcmp.eq.s32.totalorder %v3343, %v234
        %vm4059 = vcmp.eq.s32.totalorder %v3350, %v234
        %vm4060 = vcmp.eq.s32.totalorder %v3354, %v234
        %vm4061 = vcmp.eq.s32.totalorder %v3358, %v234
        %vm4062 = vcmp.eq.s32.totalorder %v3362, %v234
        %vm4063 = vcmp.eq.s32.totalorder %v3366, %v234
        %vm4064 = vcmp.eq.s32.totalorder %v3370, %v234
        %vm4065 = vcmp.eq.s32.totalorder %v3374, %v234
        %vm4066 = vcmp.eq.s32.totalorder %v3378, %v234
        %vm4067 = vcmp.eq.s32.totalorder %v3382, %v234
        %vm4068 = vcmp.eq.s32.totalorder %v3386, %v234
        %vm4069 = vcmp.eq.s32.totalorder %v3390, %v234
        %vm4070 = vcmp.eq.s32.totalorder %v3394, %v234
        %vm4071 = vcmp.eq.s32.totalorder %v3398, %v234
        %vm4072 = vcmp.eq.s32.totalorder %v3402, %v234
        %vm4073 = vcmp.eq.s32.totalorder %v3406, %v234
        %vm4074 = vcmp.eq.s32.totalorder %v3410, %v234
        %vm4075 = vcmp.eq.s32.totalorder %v3417, %v234
        %vm4076 = vcmp.eq.s32.totalorder %v3421, %v234
        %vm4077 = vcmp.eq.s32.totalorder %v3425, %v234
        %vm4078 = vcmp.eq.s32.totalorder %v3429, %v234
        %vm4079 = vcmp.eq.s32.totalorder %v3433, %v234
        %vm4080 = vcmp.eq.s32.totalorder %v3437, %v234
        %vm4081 = vcmp.eq.s32.totalorder %v3441, %v234
        %vm4082 = vcmp.eq.s32.totalorder %v3445, %v234
        %vm4083 = vcmp.eq.s32.totalorder %v3449, %v234
        %vm4084 = vcmp.eq.s32.totalorder %v3453, %v234
        %vm4085 = vcmp.eq.s32.totalorder %v3457, %v234
        %vm4086 = vcmp.eq.s32.totalorder %v3461, %v234
        %vm4087 = vcmp.eq.s32.totalorder %v3465, %v234
        %vm4088 = vcmp.eq.s32.totalorder %v3469, %v234
        %vm4089 = vcmp.eq.s32.totalorder %v3473, %v234
        %vm4090 = vcmp.eq.s32.totalorder %v3477, %v234
        %vm4091 = vcmp.eq.s32.totalorder %v3484, %v234
        %vm4092 = vcmp.eq.s32.totalorder %v3488, %v234
        %vm4093 = vcmp.eq.s32.totalorder %v3492, %v234
        %vm4094 = vcmp.eq.s32.totalorder %v3496, %v234
        %vm4095 = vcmp.eq.s32.totalorder %v3500, %v234
        %vm4096 = vcmp.eq.s32.totalorder %v3504, %v234
        %vm4097 = vcmp.eq.s32.totalorder %v3508, %v234
        %vm4098 = vcmp.eq.s32.totalorder %v3512, %v234
        %vm4099 = vcmp.eq.s32.totalorder %v3516, %v234
        %vm4100 = vcmp.eq.s32.totalorder %v3520, %v234
        %vm4101 = vcmp.eq.s32.totalorder %v3524, %v234
        %vm4102 = vcmp.eq.s32.totalorder %v3528, %v234
        %vm4103 = vcmp.eq.s32.totalorder %v3532, %v234
        %vm4104 = vcmp.eq.s32.totalorder %v3536, %v234
        %vm4105 = vcmp.eq.s32.totalorder %v3540, %v234
        %vm4106 = vcmp.eq.s32.totalorder %v3544, %v234
        %vm4107 = vcmp.eq.s32.totalorder %v3551, %v234
        %vm4108 = vcmp.eq.s32.totalorder %v3555, %v234
        %vm4109 = vcmp.eq.s32.totalorder %v3559, %v234
        %vm4110 = vcmp.eq.s32.totalorder %v3563, %v234
        %vm4111 = vcmp.eq.s32.totalorder %v3567, %v234
        %vm4112 = vcmp.eq.s32.totalorder %v3571, %v234
        %vm4113 = vcmp.eq.s32.totalorder %v3575, %v234
        %vm4114 = vcmp.eq.s32.totalorder %v3579, %v234
        %vm4115 = vcmp.eq.s32.totalorder %v3583, %v234
        %vm4116 = vcmp.eq.s32.totalorder %v3587, %v234
        %vm4117 = vcmp.eq.s32.totalorder %v3591, %v234
        %vm4118 = vcmp.eq.s32.totalorder %v3595, %v234
        %vm4119 = vcmp.eq.s32.totalorder %v3599, %v234
        %vm4120 = vcmp.eq.s32.totalorder %v3603, %v234
        %vm4121 = vcmp.eq.s32.totalorder %v3607, %v234
        %vm4122 = vcmp.eq.s32.totalorder %v3611, %v234
        %vm4123 = vcmp.eq.s32.totalorder %v3618, %v234
        %vm4124 = vcmp.eq.s32.totalorder %v3622, %v234
        %vm4125 = vcmp.eq.s32.totalorder %v3626, %v234
        %vm4126 = vcmp.eq.s32.totalorder %v3630, %v234
        %vm4127 = vcmp.eq.s32.totalorder %v3634, %v234
        %vm4128 = vcmp.eq.s32.totalorder %v3638, %v234
        %vm4129 = vcmp.eq.s32.totalorder %v3642, %v234
        %vm4130 = vcmp.eq.s32.totalorder %v3646, %v234
        %vm4131 = vcmp.eq.s32.totalorder %v3650, %v234
        %vm4132 = vcmp.eq.s32.totalorder %v3654, %v234
        %vm4133 = vcmp.eq.s32.totalorder %v3658, %v234
        %vm4134 = vcmp.eq.s32.totalorder %v3662, %v234
        %vm4135 = vcmp.eq.s32.totalorder %v3666, %v234
        %vm4136 = vcmp.eq.s32.totalorder %v3670, %v234
        %vm4137 = vcmp.eq.s32.totalorder %v3674, %v234
        %vm4138 = vcmp.eq.s32.totalorder %v3678, %v234
        %vm4139 = vcmp.eq.s32.totalorder %v3685, %v234
        %vm4140 = vcmp.eq.s32.totalorder %v3689, %v234
        %vm4141 = vcmp.eq.s32.totalorder %v3693, %v234
        %vm4142 = vcmp.eq.s32.totalorder %v3697, %v234
        %vm4143 = vcmp.eq.s32.totalorder %v3701, %v234
        %vm4144 = vcmp.eq.s32.totalorder %v3705, %v234
        %vm4145 = vcmp.eq.s32.totalorder %v3709, %v234
        %vm4146 = vcmp.eq.s32.totalorder %v3713, %v234
        %vm4147 = vcmp.eq.s32.totalorder %v3717, %v234
        %vm4148 = vcmp.eq.s32.totalorder %v3721, %v234
        %vm4149 = vcmp.eq.s32.totalorder %v3725, %v234
        %vm4150 = vcmp.eq.s32.totalorder %v3729, %v234
        %vm4151 = vcmp.eq.s32.totalorder %v3733, %v234
        %vm4152 = vcmp.eq.s32.totalorder %v3737, %v234
        %vm4153 = vcmp.eq.s32.totalorder %v3741, %v234
        %vm4154 = vcmp.eq.s32.totalorder %v3745, %v234
        %vm4155 = vcmp.eq.s32.totalorder %v3752, %v234
        %vm4156 = vcmp.eq.s32.totalorder %v3756, %v234
        %vm4157 = vcmp.eq.s32.totalorder %v3760, %v234
        %vm4158 = vcmp.eq.s32.totalorder %v3764, %v234
        %vm4159 = vcmp.eq.s32.totalorder %v3768, %v234
        %vm4160 = vcmp.eq.s32.totalorder %v3772, %v234
        %vm4161 = vcmp.eq.s32.totalorder %v3776, %v234
        %vm4162 = vcmp.eq.s32.totalorder %v3780, %v234
        %vm4163 = vcmp.eq.s32.totalorder %v3784, %v234
        %vm4164 = vcmp.eq.s32.totalorder %v3788, %v234
        %vm4165 = vcmp.eq.s32.totalorder %v3792, %v234
        %vm4166 = vcmp.eq.s32.totalorder %v3796, %v234
        %vm4167 = vcmp.eq.s32.totalorder %v3800, %v234
        %vm4168 = vcmp.eq.s32.totalorder %v3804, %v234
        %vm4169 = vcmp.eq.s32.totalorder %v3808, %v234
        %vm4170 = vcmp.eq.s32.totalorder %v3812, %v234
        %vm4171 = vcmp.eq.s32.totalorder %v3819, %v234
        %vm4172 = vcmp.eq.s32.totalorder %v3823, %v234
        %vm4173 = vcmp.eq.s32.totalorder %v3827, %v234
        %vm4174 = vcmp.eq.s32.totalorder %v3831, %v234
        %vm4175 = vcmp.eq.s32.totalorder %v3835, %v234
        %vm4176 = vcmp.eq.s32.totalorder %v3839, %v234
        %vm4177 = vcmp.eq.s32.totalorder %v3843, %v234
        %vm4178 = vcmp.eq.s32.totalorder %v3847, %v234
        %vm4179 = vcmp.eq.s32.totalorder %v3851, %v234
        %vm4180 = vcmp.eq.s32.totalorder %v3855, %v234
        %vm4181 = vcmp.eq.s32.totalorder %v3859, %v234
        %vm4182 = vcmp.eq.s32.totalorder %v3863, %v234
        %vm4183 = vcmp.eq.s32.totalorder %v3867, %v234
        %vm4184 = vcmp.eq.s32.totalorder %v3871, %v234
        %vm4185 = vcmp.eq.s32.totalorder %v3875, %v234
        %vm4186 = vcmp.eq.s32.totalorder %v3879, %v234
        %vm4187 = vcmp.eq.s32.totalorder %v3886, %v234
        %vm4188 = vcmp.eq.s32.totalorder %v3890, %v234
        %vm4189 = vcmp.eq.s32.totalorder %v3894, %v234
        %vm4190 = vcmp.eq.s32.totalorder %v3898, %v234
        %vm4191 = vcmp.eq.s32.totalorder %v3902, %v234
        %vm4192 = vcmp.eq.s32.totalorder %v3906, %v234
        %vm4193 = vcmp.eq.s32.totalorder %v3910, %v234
        %vm4194 = vcmp.eq.s32.totalorder %v3914, %v234
        %vm4195 = vcmp.eq.s32.totalorder %v3918, %v234
        %vm4196 = vcmp.eq.s32.totalorder %v3922, %v234
        %vm4197 = vcmp.eq.s32.totalorder %v3926, %v234
        %vm4198 = vcmp.eq.s32.totalorder %v3930, %v234
        %vm4199 = vcmp.eq.s32.totalorder %v3934, %v234
        %vm4200 = vcmp.eq.s32.totalorder %v3938, %v234
        %vm4201 = vcmp.eq.s32.totalorder %v3942, %v234
        %vm4202 = vcmp.eq.s32.totalorder %v3946, %v234
        %v4203 = vsel %vm3947, 1, 0
        %v4204 = vsel %vm3948, 1, 0
        %v4205 = vsel %vm3949, 1, 0
        %v4206 = vsel %vm3950, 1, 0
        %v4207 = vsel %vm3951, 1, 0
        %v4208 = vsel %vm3952, 1, 0
        %v4209 = vsel %vm3953, 1, 0
        %v4210 = vsel %vm3954, 1, 0
        %v4211 = vsel %vm3955, 1, 0
        %v4212 = vsel %vm3956, 1, 0
        %v4213 = vsel %vm3957, 1, 0
        %v4214 = vsel %vm3958, 1, 0
        %v4215 = vsel %vm3959, 1, 0
        %v4216 = vsel %vm3960, 1, 0
        %v4217 = vsel %vm3961, 1, 0
        %v4218 = vsel %vm3962, 1, 0
        %v4219 = vsel %vm3963, 1, 0
        %v4220 = vsel %vm3964, 1, 0
        %v4221 = vsel %vm3965, 1, 0
        %v4222 = vsel %vm3966, 1, 0
        %v4223 = vsel %vm3967, 1, 0
        %v4224 = vsel %vm3968, 1, 0
        %v4225 = vsel %vm3969, 1, 0
        %v4226 = vsel %vm3970, 1, 0
        %v4227 = vsel %vm3971, 1, 0
        %v4228 = vsel %vm3972, 1, 0
        %v4229 = vsel %vm3973, 1, 0
        %v4230 = vsel %vm3974, 1, 0
        %v4231 = vsel %vm3975, 1, 0
        %v4232 = vsel %vm3976, 1, 0
        %v4233 = vsel %vm3977, 1, 0
        %v4234 = vsel %vm3978, 1, 0
        %v4235 = vsel %vm3979, 1, 0
        %v4236 = vsel %vm3980, 1, 0
        %v4237 = vsel %vm3981, 1, 0
        %v4238 = vsel %vm3982, 1, 0
        %v4239 = vsel %vm3983, 1, 0
        %v4240 = vsel %vm3984, 1, 0
        %v4241 = vsel %vm3985, 1, 0
        %v4242 = vsel %vm3986, 1, 0
        %v4243 = vsel %vm3987, 1, 0
        %v4244 = vsel %vm3988, 1, 0
        %v4245 = vsel %vm3989, 1, 0
        %v4246 = vsel %vm3990, 1, 0
        %v4247 = vsel %vm3991, 1, 0
        %v4248 = vsel %vm3992, 1, 0
        %v4249 = vsel %vm3993, 1, 0
        %v4250 = vsel %vm3994, 1, 0
        %v4251 = vsel %vm3995, 1, 0
        %v4252 = vsel %vm3996, 1, 0
        %v4253 = vsel %vm3997, 1, 0
        %v4254 = vsel %vm3998, 1, 0
        %v4255 = vsel %vm3999, 1, 0
        %v4256 = vsel %vm4000, 1, 0
        %v4257 = vsel %vm4001, 1, 0
        %v4258 = vsel %vm4002, 1, 0
        %v4259 = vsel %vm4003, 1, 0
        %v4260 = vsel %vm4004, 1, 0
        %v4261 = vsel %vm4005, 1, 0
        %v4262 = vsel %vm4006, 1, 0
        %v4263 = vsel %vm4007, 1, 0
        %v4264 = vsel %vm4008, 1, 0
        %v4265 = vsel %vm4009, 1, 0
        %v4266 = vsel %vm4010, 1, 0
        %v4267 = vsel %vm4011, 1, 0
        %v4268 = vsel %vm4012, 1, 0
        %v4269 = vsel %vm4013, 1, 0
        %v4270 = vsel %vm4014, 1, 0
        %v4271 = vsel %vm4015, 1, 0
        %v4272 = vsel %vm4016, 1, 0
        %v4273 = vsel %vm4017, 1, 0
        %v4274 = vsel %vm4018, 1, 0
        %v4275 = vsel %vm4019, 1, 0
        %v4276 = vsel %vm4020, 1, 0
        %v4277 = vsel %vm4021, 1, 0
        %v4278 = vsel %vm4022, 1, 0
        %v4279 = vsel %vm4023, 1, 0
        %v4280 = vsel %vm4024, 1, 0
        %v4281 = vsel %vm4025, 1, 0
        %v4282 = vsel %vm4026, 1, 0
        %v4283 = vsel %vm4027, 1, 0
        %v4284 = vsel %vm4028, 1, 0
        %v4285 = vsel %vm4029, 1, 0
        %v4286 = vsel %vm4030, 1, 0
        %v4287 = vsel %vm4031, 1, 0
        %v4288 = vsel %vm4032, 1, 0
        %v4289 = vsel %vm4033, 1, 0
        %v4290 = vsel %vm4034, 1, 0
        %v4291 = vsel %vm4035, 1, 0
        %v4292 = vsel %vm4036, 1, 0
        %v4293 = vsel %vm4037, 1, 0
        %v4294 = vsel %vm4038, 1, 0
        %v4295 = vsel %vm4039, 1, 0
        %v4296 = vsel %vm4040, 1, 0
        %v4297 = vsel %vm4041, 1, 0
        %v4298 = vsel %vm4042, 1, 0
        %v4299 = vsel %vm4043, 1, 0
        %v4300 = vsel %vm4044, 1, 0
        %v4301 = vsel %vm4045, 1, 0
        %v4302 = vsel %vm4046, 1, 0
        %v4303 = vsel %vm4047, 1, 0
        %v4304 = vsel %vm4048, 1, 0
        %v4305 = vsel %vm4049, 1, 0
        %v4306 = vsel %vm4050, 1, 0
        %v4307 = vsel %vm4051, 1, 0
        %v4308 = vsel %vm4052, 1, 0
        %v4309 = vsel %vm4053, 1, 0
        %v4310 = vsel %vm4054, 1, 0
        %v4311 = vsel %vm4055, 1, 0
        %v4312 = vsel %vm4056, 1, 0
        %v4313 = vsel %vm4057, 1, 0
        %v4314 = vsel %vm4058, 1, 0
        %v4315 = vsel %vm4059, 1, 0
        %v4316 = vsel %vm4060, 1, 0
        %v4317 = vsel %vm4061, 1, 0
        %v4318 = vsel %vm4062, 1, 0
        %v4319 = vsel %vm4063, 1, 0
        %v4320 = vsel %vm4064, 1, 0
        %v4321 = vsel %vm4065, 1, 0
        %v4322 = vsel %vm4066, 1, 0
        %v4323 = vsel %vm4067, 1, 0
        %v4324 = vsel %vm4068, 1, 0
        %v4325 = vsel %vm4069, 1, 0
        %v4326 = vsel %vm4070, 1, 0
        %v4327 = vsel %vm4071, 1, 0
        %v4328 = vsel %vm4072, 1, 0
        %v4329 = vsel %vm4073, 1, 0
        %v4330 = vsel %vm4074, 1, 0
        %v4331 = vsel %vm4075, 1, 0
        %v4332 = vsel %vm4076, 1, 0
        %v4333 = vsel %vm4077, 1, 0
        %v4334 = vsel %vm4078, 1, 0
        %v4335 = vsel %vm4079, 1, 0
        %v4336 = vsel %vm4080, 1, 0
        %v4337 = vsel %vm4081, 1, 0
        %v4338 = vsel %vm4082, 1, 0
        %v4339 = vsel %vm4083, 1, 0
        %v4340 = vsel %vm4084, 1, 0
        %v4341 = vsel %vm4085, 1, 0
        %v4342 = vsel %vm4086, 1, 0
        %v4343 = vsel %vm4087, 1, 0
        %v4344 = vsel %vm4088, 1, 0
        %v4345 = vsel %vm4089, 1, 0
        %v4346 = vsel %vm4090, 1, 0
        %v4347 = vsel %vm4091, 1, 0
        %v4348 = vsel %vm4092, 1, 0
        %v4349 = vsel %vm4093, 1, 0
        %v4350 = vsel %vm4094, 1, 0
        %v4351 = vsel %vm4095, 1, 0
        %v4352 = vsel %vm4096, 1, 0
        %v4353 = vsel %vm4097, 1, 0
        %v4354 = vsel %vm4098, 1, 0
        %v4355 = vsel %vm4099, 1, 0
        %v4356 = vsel %vm4100, 1, 0
        %v4357 = vsel %vm4101, 1, 0
        %v4358 = vsel %vm4102, 1, 0
        %v4359 = vsel %vm4103, 1, 0
        %v4360 = vsel %vm4104, 1, 0
        %v4361 = vsel %vm4105, 1, 0
        %v4362 = vsel %vm4106, 1, 0
        %v4363 = vsel %vm4107, 1, 0
        %v4364 = vsel %vm4108, 1, 0
        %v4365 = vsel %vm4109, 1, 0
        %v4366 = vsel %vm4110, 1, 0
        %v4367 = vsel %vm4111, 1, 0
        %v4368 = vsel %vm4112, 1, 0
        %v4369 = vsel %vm4113, 1, 0
        %v4370 = vsel %vm4114, 1, 0
        %v4371 = vsel %vm4115, 1, 0
        %v4372 = vsel %vm4116, 1, 0
        %v4373 = vsel %vm4117, 1, 0
        %v4374 = vsel %vm4118, 1, 0
        %v4375 = vsel %vm4119, 1, 0
        %v4376 = vsel %vm4120, 1, 0
        %v4377 = vsel %vm4121, 1, 0
        %v4378 = vsel %vm4122, 1, 0
        %v4379 = vsel %vm4123, 1, 0
        %v4380 = vsel %vm4124, 1, 0
        %v4381 = vsel %vm4125, 1, 0
        %v4382 = vsel %vm4126, 1, 0
        %v4383 = vsel %vm4127, 1, 0
        %v4384 = vsel %vm4128, 1, 0
        %v4385 = vsel %vm4129, 1, 0
        %v4386 = vsel %vm4130, 1, 0
        %v4387 = vsel %vm4131, 1, 0
        %v4388 = vsel %vm4132, 1, 0
        %v4389 = vsel %vm4133, 1, 0
        %v4390 = vsel %vm4134, 1, 0
        %v4391 = vsel %vm4135, 1, 0
        %v4392 = vsel %vm4136, 1, 0
        %v4393 = vsel %vm4137, 1, 0
        %v4394 = vsel %vm4138, 1, 0
        %v4395 = vsel %vm4139, 1, 0
        %v4396 = vsel %vm4140, 1, 0
        %v4397 = vsel %vm4141, 1, 0
        %v4398 = vsel %vm4142, 1, 0
        %v4399 = vsel %vm4143, 1, 0
        %v4400 = vsel %vm4144, 1, 0
        %v4401 = vsel %vm4145, 1, 0
        %v4402 = vsel %vm4146, 1, 0
        %v4403 = vsel %vm4147, 1, 0
        %v4404 = vsel %vm4148, 1, 0
        %v4405 = vsel %vm4149, 1, 0
        %v4406 = vsel %vm4150, 1, 0
        %v4407 = vsel %vm4151, 1, 0
        %v4408 = vsel %vm4152, 1, 0
        %v4409 = vsel %vm4153, 1, 0
        %v4410 = vsel %vm4154, 1, 0
        %v4411 = vsel %vm4155, 1, 0
        %v4412 = vsel %vm4156, 1, 0
        %v4413 = vsel %vm4157, 1, 0
        %v4414 = vsel %vm4158, 1, 0
        %v4415 = vsel %vm4159, 1, 0
        %v4416 = vsel %vm4160, 1, 0
        %v4417 = vsel %vm4161, 1, 0
        %v4418 = vsel %vm4162, 1, 0
        %v4419 = vsel %vm4163, 1, 0
        %v4420 = vsel %vm4164, 1, 0
        %v4421 = vsel %vm4165, 1, 0
        %v4422 = vsel %vm4166, 1, 0
        %v4423 = vsel %vm4167, 1, 0
        %v4424 = vsel %vm4168, 1, 0
        %v4425 = vsel %vm4169, 1, 0
        %v4426 = vsel %vm4170, 1, 0
        %v4427 = vsel %vm4171, 1, 0
        %v4428 = vsel %vm4172, 1, 0
        %v4429 = vsel %vm4173, 1, 0
        %v4430 = vsel %vm4174, 1, 0
        %v4431 = vsel %vm4175, 1, 0
        %v4432 = vsel %vm4176, 1, 0
        %v4433 = vsel %vm4177, 1, 0
        %v4434 = vsel %vm4178, 1, 0
        %v4435 = vsel %vm4179, 1, 0
        %v4436 = vsel %vm4180, 1, 0
        %v4437 = vsel %vm4181, 1, 0
        %v4438 = vsel %vm4182, 1, 0
        %v4439 = vsel %vm4183, 1, 0
        %v4440 = vsel %vm4184, 1, 0
        %v4441 = vsel %vm4185, 1, 0
        %v4442 = vsel %vm4186, 1, 0
        %v4443 = vsel %vm4187, 1, 0
        %v4444 = vsel %vm4188, 1, 0
        %v4445 = vsel %vm4189, 1, 0
        %v4446 = vsel %vm4190, 1, 0
        %v4447 = vsel %vm4191, 1, 0
        %v4448 = vsel %vm4192, 1, 0
        %v4449 = vsel %vm4193, 1, 0
        %v4450 = vsel %vm4194, 1, 0
        %v4451 = vsel %vm4195, 1, 0
        %v4452 = vsel %vm4196, 1, 0
        %v4453 = vsel %vm4197, 1, 0
        %v4454 = vsel %vm4198, 1, 0
        %v4455 = vsel %vm4199, 1, 0
        %v4456 = vsel %vm4200, 1, 0
        %v4457 = vsel %vm4201, 1, 0
        %v4458 = vsel %vm4202, 1, 0
        %v4459 = vcvt.s32.f32 %v4203
        %v4460 = vcvt.s32.f32 %v4204
        %v4461 = vcvt.s32.f32 %v4205
        %v4462 = vcvt.s32.f32 %v4206
        %v4463 = vcvt.s32.f32 %v4207
        %v4464 = vcvt.s32.f32 %v4208
        %v4465 = vcvt.s32.f32 %v4209
        %v4466 = vcvt.s32.f32 %v4210
        %v4467 = vcvt.s32.f32 %v4211
        %v4468 = vcvt.s32.f32 %v4212
        %v4469 = vcvt.s32.f32 %v4213
        %v4470 = vcvt.s32.f32 %v4214
        %v4471 = vcvt.s32.f32 %v4215
        %v4472 = vcvt.s32.f32 %v4216
        %v4473 = vcvt.s32.f32 %v4217
        %v4474 = vcvt.s32.f32 %v4218
        %v4475 = vcvt.s32.f32 %v4219
        %v4476 = vcvt.s32.f32 %v4220
        %v4477 = vcvt.s32.f32 %v4221
        %v4478 = vcvt.s32.f32 %v4222
        %v4479 = vcvt.s32.f32 %v4223
        %v4480 = vcvt.s32.f32 %v4224
        %v4481 = vcvt.s32.f32 %v4225
        %v4482 = vcvt.s32.f32 %v4226
        %v4483 = vcvt.s32.f32 %v4227
        %v4484 = vcvt.s32.f32 %v4228
        %v4485 = vcvt.s32.f32 %v4229
        %v4486 = vcvt.s32.f32 %v4230
        %v4487 = vcvt.s32.f32 %v4231
        %v4488 = vcvt.s32.f32 %v4232
        %v4489 = vcvt.s32.f32 %v4233
        %v4490 = vcvt.s32.f32 %v4234
        %v4491 = vcvt.s32.f32 %v4235
        %v4492 = vcvt.s32.f32 %v4236
        %v4493 = vcvt.s32.f32 %v4237
        %v4494 = vcvt.s32.f32 %v4238
        %v4495 = vcvt.s32.f32 %v4239
        %v4496 = vcvt.s32.f32 %v4240
        %v4497 = vcvt.s32.f32 %v4241
        %v4498 = vcvt.s32.f32 %v4242
        %v4499 = vcvt.s32.f32 %v4243
        %v4500 = vcvt.s32.f32 %v4244
        %v4501 = vcvt.s32.f32 %v4245
        %v4502 = vcvt.s32.f32 %v4246
        %v4503 = vcvt.s32.f32 %v4247
        %v4504 = vcvt.s32.f32 %v4248
        %v4505 = vcvt.s32.f32 %v4249
        %v4506 = vcvt.s32.f32 %v4250
        %v4507 = vcvt.s32.f32 %v4251
        %v4508 = vcvt.s32.f32 %v4252
        %v4509 = vcvt.s32.f32 %v4253
        %v4510 = vcvt.s32.f32 %v4254
        %v4511 = vcvt.s32.f32 %v4255
        %v4512 = vcvt.s32.f32 %v4256
        %v4513 = vcvt.s32.f32 %v4257
        %v4514 = vcvt.s32.f32 %v4258
        %v4515 = vcvt.s32.f32 %v4259
        %v4516 = vcvt.s32.f32 %v4260
        %v4517 = vcvt.s32.f32 %v4261
        %v4518 = vcvt.s32.f32 %v4262
        %v4519 = vcvt.s32.f32 %v4263
        %v4520 = vcvt.s32.f32 %v4264
        %v4521 = vcvt.s32.f32 %v4265
        %v4522 = vcvt.s32.f32 %v4266
        %v4523 = vcvt.s32.f32 %v4267
        %v4524 = vcvt.s32.f32 %v4268
        %v4525 = vcvt.s32.f32 %v4269
        %v4526 = vcvt.s32.f32 %v4270
        %v4527 = vcvt.s32.f32 %v4271
        %v4528 = vcvt.s32.f32 %v4272
        %v4529 = vcvt.s32.f32 %v4273
        %v4530 = vcvt.s32.f32 %v4274
        %v4531 = vcvt.s32.f32 %v4275
        %v4532 = vcvt.s32.f32 %v4276
        %v4533 = vcvt.s32.f32 %v4277
        %v4534 = vcvt.s32.f32 %v4278
        %v4535 = vcvt.s32.f32 %v4279
        %v4536 = vcvt.s32.f32 %v4280
        %v4537 = vcvt.s32.f32 %v4281
        %v4538 = vcvt.s32.f32 %v4282
        %v4539 = vcvt.s32.f32 %v4283
        %v4540 = vcvt.s32.f32 %v4284
        %v4541 = vcvt.s32.f32 %v4285
        %v4542 = vcvt.s32.f32 %v4286
        %v4543 = vcvt.s32.f32 %v4287
        %v4544 = vcvt.s32.f32 %v4288
        %v4545 = vcvt.s32.f32 %v4289
        %v4546 = vcvt.s32.f32 %v4290
        %v4547 = vcvt.s32.f32 %v4291
        %v4548 = vcvt.s32.f32 %v4292
        %v4549 = vcvt.s32.f32 %v4293
        %v4550 = vcvt.s32.f32 %v4294
        %v4551 = vcvt.s32.f32 %v4295
        %v4552 = vcvt.s32.f32 %v4296
        %v4553 = vcvt.s32.f32 %v4297
        %v4554 = vcvt.s32.f32 %v4298
        %v4555 = vcvt.s32.f32 %v4299
        %v4556 = vcvt.s32.f32 %v4300
        %v4557 = vcvt.s32.f32 %v4301
        %v4558 = vcvt.s32.f32 %v4302
        %v4559 = vcvt.s32.f32 %v4303
        %v4560 = vcvt.s32.f32 %v4304
        %v4561 = vcvt.s32.f32 %v4305
        %v4562 = vcvt.s32.f32 %v4306
        %v4563 = vcvt.s32.f32 %v4307
        %v4564 = vcvt.s32.f32 %v4308
        %v4565 = vcvt.s32.f32 %v4309
        %v4566 = vcvt.s32.f32 %v4310
        %v4567 = vcvt.s32.f32 %v4311
        %v4568 = vcvt.s32.f32 %v4312
        %v4569 = vcvt.s32.f32 %v4313
        %v4570 = vcvt.s32.f32 %v4314
        %v4571 = vcvt.s32.f32 %v4315
        %v4572 = vcvt.s32.f32 %v4316
        %v4573 = vcvt.s32.f32 %v4317
        %v4574 = vcvt.s32.f32 %v4318
        %v4575 = vcvt.s32.f32 %v4319
        %v4576 = vcvt.s32.f32 %v4320
        %v4577 = vcvt.s32.f32 %v4321
        %v4578 = vcvt.s32.f32 %v4322
        %v4579 = vcvt.s32.f32 %v4323
        %v4580 = vcvt.s32.f32 %v4324
        %v4581 = vcvt.s32.f32 %v4325
        %v4582 = vcvt.s32.f32 %v4326
        %v4583 = vcvt.s32.f32 %v4327
        %v4584 = vcvt.s32.f32 %v4328
        %v4585 = vcvt.s32.f32 %v4329
        %v4586 = vcvt.s32.f32 %v4330
        %v4587 = vcvt.s32.f32 %v4331
        %v4588 = vcvt.s32.f32 %v4332
        %v4589 = vcvt.s32.f32 %v4333
        %v4590 = vcvt.s32.f32 %v4334
        %v4591 = vcvt.s32.f32 %v4335
        %v4592 = vcvt.s32.f32 %v4336
        %v4593 = vcvt.s32.f32 %v4337
        %v4594 = vcvt.s32.f32 %v4338
        %v4595 = vcvt.s32.f32 %v4339
        %v4596 = vcvt.s32.f32 %v4340
        %v4597 = vcvt.s32.f32 %v4341
        %v4598 = vcvt.s32.f32 %v4342
        %v4599 = vcvt.s32.f32 %v4343
        %v4600 = vcvt.s32.f32 %v4344
        %v4601 = vcvt.s32.f32 %v4345
        %v4602 = vcvt.s32.f32 %v4346
        %v4603 = vcvt.s32.f32 %v4347
        %v4604 = vcvt.s32.f32 %v4348
        %v4605 = vcvt.s32.f32 %v4349
        %v4606 = vcvt.s32.f32 %v4350
        %v4607 = vcvt.s32.f32 %v4351
        %v4608 = vcvt.s32.f32 %v4352
        %v4609 = vcvt.s32.f32 %v4353
        %v4610 = vcvt.s32.f32 %v4354
        %v4611 = vcvt.s32.f32 %v4355
        %v4612 = vcvt.s32.f32 %v4356
        %v4613 = vcvt.s32.f32 %v4357
        %v4614 = vcvt.s32.f32 %v4358
        %v4615 = vcvt.s32.f32 %v4359
        %v4616 = vcvt.s32.f32 %v4360
        %v4617 = vcvt.s32.f32 %v4361
        %v4618 = vcvt.s32.f32 %v4362
        %v4619 = vcvt.s32.f32 %v4363
        %v4620 = vcvt.s32.f32 %v4364
        %v4621 = vcvt.s32.f32 %v4365
        %v4622 = vcvt.s32.f32 %v4366
        %v4623 = vcvt.s32.f32 %v4367
        %v4624 = vcvt.s32.f32 %v4368
        %v4625 = vcvt.s32.f32 %v4369
        %v4626 = vcvt.s32.f32 %v4370
        %v4627 = vcvt.s32.f32 %v4371
        %v4628 = vcvt.s32.f32 %v4372
        %v4629 = vcvt.s32.f32 %v4373
        %v4630 = vcvt.s32.f32 %v4374
        %v4631 = vcvt.s32.f32 %v4375
        %v4632 = vcvt.s32.f32 %v4376
        %v4633 = vcvt.s32.f32 %v4377
        %v4634 = vcvt.s32.f32 %v4378
        %v4635 = vcvt.s32.f32 %v4379
        %v4636 = vcvt.s32.f32 %v4380
        %v4637 = vcvt.s32.f32 %v4381
        %v4638 = vcvt.s32.f32 %v4382
        %v4639 = vcvt.s32.f32 %v4383
        %v4640 = vcvt.s32.f32 %v4384
        %v4641 = vcvt.s32.f32 %v4385
        %v4642 = vcvt.s32.f32 %v4386
        %v4643 = vcvt.s32.f32 %v4387
        %v4644 = vcvt.s32.f32 %v4388
        %v4645 = vcvt.s32.f32 %v4389
        %v4646 = vcvt.s32.f32 %v4390
        %v4647 = vcvt.s32.f32 %v4391
        %v4648 = vcvt.s32.f32 %v4392
        %v4649 = vcvt.s32.f32 %v4393
        %v4650 = vcvt.s32.f32 %v4394
        %v4651 = vcvt.s32.f32 %v4395
        %v4652 = vcvt.s32.f32 %v4396
        %v4653 = vcvt.s32.f32 %v4397
        %v4654 = vcvt.s32.f32 %v4398
        %v4655 = vcvt.s32.f32 %v4399
        %v4656 = vcvt.s32.f32 %v4400
        %v4657 = vcvt.s32.f32 %v4401
        %v4658 = vcvt.s32.f32 %v4402
        %v4659 = vcvt.s32.f32 %v4403
        %v4660 = vcvt.s32.f32 %v4404
        %v4661 = vcvt.s32.f32 %v4405
        %v4662 = vcvt.s32.f32 %v4406
        %v4663 = vcvt.s32.f32 %v4407
        %v4664 = vcvt.s32.f32 %v4408
        %v4665 = vcvt.s32.f32 %v4409
        %v4666 = vcvt.s32.f32 %v4410
        %v4667 = vcvt.s32.f32 %v4411
        %v4668 = vcvt.s32.f32 %v4412
        %v4669 = vcvt.s32.f32 %v4413
        %v4670 = vcvt.s32.f32 %v4414
        %v4671 = vcvt.s32.f32 %v4415
        %v4672 = vcvt.s32.f32 %v4416
        %v4673 = vcvt.s32.f32 %v4417
        %v4674 = vcvt.s32.f32 %v4418
        %v4675 = vcvt.s32.f32 %v4419
        %v4676 = vcvt.s32.f32 %v4420
        %v4677 = vcvt.s32.f32 %v4421
        %v4678 = vcvt.s32.f32 %v4422
        %v4679 = vcvt.s32.f32 %v4423
        %v4680 = vcvt.s32.f32 %v4424
        %v4681 = vcvt.s32.f32 %v4425
        %v4682 = vcvt.s32.f32 %v4426
        %v4683 = vcvt.s32.f32 %v4427
        %v4684 = vcvt.s32.f32 %v4428
        %v4685 = vcvt.s32.f32 %v4429
        %v4686 = vcvt.s32.f32 %v4430
        %v4687 = vcvt.s32.f32 %v4431
        %v4688 = vcvt.s32.f32 %v4432
        %v4689 = vcvt.s32.f32 %v4433
        %v4690 = vcvt.s32.f32 %v4434
        %v4691 = vcvt.s32.f32 %v4435
        %v4692 = vcvt.s32.f32 %v4436
        %v4693 = vcvt.s32.f32 %v4437
        %v4694 = vcvt.s32.f32 %v4438
        %v4695 = vcvt.s32.f32 %v4439
        %v4696 = vcvt.s32.f32 %v4440
        %v4697 = vcvt.s32.f32 %v4441
        %v4698 = vcvt.s32.f32 %v4442
        %v4699 = vcvt.s32.f32 %v4443
        %v4700 = vcvt.s32.f32 %v4444
        %v4701 = vcvt.s32.f32 %v4445
        %v4702 = vcvt.s32.f32 %v4446
        %v4703 = vcvt.s32.f32 %v4447
        %v4704 = vcvt.s32.f32 %v4448
        %v4705 = vcvt.s32.f32 %v4449
        %v4706 = vcvt.s32.f32 %v4450
        %v4707 = vcvt.s32.f32 %v4451
        %v4708 = vcvt.s32.f32 %v4452
        %v4709 = vcvt.s32.f32 %v4453
        %v4710 = vcvt.s32.f32 %v4454
        %v4711 = vcvt.s32.f32 %v4455
        %v4712 = vcvt.s32.f32 %v4456
        %v4713 = vcvt.s32.f32 %v4457
        %v4714 = vcvt.s32.f32 %v4458
        %v4715 = vpack.c.bf16 %v4460, %v4459
        %v4716 = vpack.c.bf16 %v4462, %v4461
        %v4717 = vpack.c.bf16 %v4464, %v4463
        %v4718 = vpack.c.bf16 %v4466, %v4465
        %v4719 = vpack.c.bf16 %v4468, %v4467
        %v4720 = vpack.c.bf16 %v4470, %v4469
        %v4721 = vpack.c.bf16 %v4472, %v4471
        %v4722 = vpack.c.bf16 %v4474, %v4473
        %v4723 = vpack.c.bf16 %v4476, %v4475
        %v4724 = vpack.c.bf16 %v4478, %v4477
        %v4725 = vpack.c.bf16 %v4480, %v4479
        %v4726 = vpack.c.bf16 %v4482, %v4481
        %v4727 = vpack.c.bf16 %v4484, %v4483
        %v4728 = vpack.c.bf16 %v4486, %v4485
        %v4729 = vpack.c.bf16 %v4488, %v4487
        %v4730 = vpack.c.bf16 %v4490, %v4489
        %v4731 = vpack.c.bf16 %v4492, %v4491
        %v4732 = vpack.c.bf16 %v4494, %v4493
        %v4733 = vpack.c.bf16 %v4496, %v4495
        %v4734 = vpack.c.bf16 %v4498, %v4497
        %v4735 = vpack.c.bf16 %v4500, %v4499
        %v4736 = vpack.c.bf16 %v4502, %v4501
        %v4737 = vpack.c.bf16 %v4504, %v4503
        %v4738 = vpack.c.bf16 %v4506, %v4505
        %v4739 = vpack.c.bf16 %v4508, %v4507
        %v4740 = vpack.c.bf16 %v4510, %v4509
        %v4741 = vpack.c.bf16 %v4512, %v4511
        %v4742 = vpack.c.bf16 %v4514, %v4513
        %v4743 = vpack.c.bf16 %v4516, %v4515
        %v4744 = vpack.c.bf16 %v4518, %v4517
        %v4745 = vpack.c.bf16 %v4520, %v4519
        %v4746 = vpack.c.bf16 %v4522, %v4521
        %v4747 = vpack.c.bf16 %v4524, %v4523
        %v4748 = vpack.c.bf16 %v4526, %v4525
        %v4749 = vpack.c.bf16 %v4528, %v4527
        %v4750 = vpack.c.bf16 %v4530, %v4529
        %v4751 = vpack.c.bf16 %v4532, %v4531
        %v4752 = vpack.c.bf16 %v4534, %v4533
        %v4753 = vpack.c.bf16 %v4536, %v4535
        %v4754 = vpack.c.bf16 %v4538, %v4537
        %v4755 = vpack.c.bf16 %v4540, %v4539
        %v4756 = vpack.c.bf16 %v4542, %v4541
        %v4757 = vpack.c.bf16 %v4544, %v4543
        %v4758 = vpack.c.bf16 %v4546, %v4545
        %v4759 = vpack.c.bf16 %v4548, %v4547
        %v4760 = vpack.c.bf16 %v4550, %v4549
        %v4761 = vpack.c.bf16 %v4552, %v4551
        %v4762 = vpack.c.bf16 %v4554, %v4553
        %v4763 = vpack.c.bf16 %v4556, %v4555
        %v4764 = vpack.c.bf16 %v4558, %v4557
        %v4765 = vpack.c.bf16 %v4560, %v4559
        %v4766 = vpack.c.bf16 %v4562, %v4561
        %v4767 = vpack.c.bf16 %v4564, %v4563
        %v4768 = vpack.c.bf16 %v4566, %v4565
        %v4769 = vpack.c.bf16 %v4568, %v4567
        %v4770 = vpack.c.bf16 %v4570, %v4569
        %v4771 = vpack.c.bf16 %v4572, %v4571
        %v4772 = vpack.c.bf16 %v4574, %v4573
        %v4773 = vpack.c.bf16 %v4576, %v4575
        %v4774 = vpack.c.bf16 %v4578, %v4577
        %v4775 = vpack.c.bf16 %v4580, %v4579
        %v4776 = vpack.c.bf16 %v4582, %v4581
        %v4777 = vpack.c.bf16 %v4584, %v4583
        %v4778 = vpack.c.bf16 %v4586, %v4585
        %v4779 = vpack.c.bf16 %v4588, %v4587
        %v4780 = vpack.c.bf16 %v4590, %v4589
        %v4781 = vpack.c.bf16 %v4592, %v4591
        %v4782 = vpack.c.bf16 %v4594, %v4593
        %v4783 = vpack.c.bf16 %v4596, %v4595
        %v4784 = vpack.c.bf16 %v4598, %v4597
        %v4785 = vpack.c.bf16 %v4600, %v4599
        %v4786 = vpack.c.bf16 %v4602, %v4601
        %v4787 = vpack.c.bf16 %v4604, %v4603
        %v4788 = vpack.c.bf16 %v4606, %v4605
        %v4789 = vpack.c.bf16 %v4608, %v4607
        %v4790 = vpack.c.bf16 %v4610, %v4609
        %v4791 = vpack.c.bf16 %v4612, %v4611
        %v4792 = vpack.c.bf16 %v4614, %v4613
        %v4793 = vpack.c.bf16 %v4616, %v4615
        %v4794 = vpack.c.bf16 %v4618, %v4617
        %v4795 = vpack.c.bf16 %v4620, %v4619
        %v4796 = vpack.c.bf16 %v4622, %v4621
        %v4797 = vpack.c.bf16 %v4624, %v4623
        %v4798 = vpack.c.bf16 %v4626, %v4625
        %v4799 = vpack.c.bf16 %v4628, %v4627
        %v4800 = vpack.c.bf16 %v4630, %v4629
        %v4801 = vpack.c.bf16 %v4632, %v4631
        %v4802 = vpack.c.bf16 %v4634, %v4633
        %v4803 = vpack.c.bf16 %v4636, %v4635
        %v4804 = vpack.c.bf16 %v4638, %v4637
        %v4805 = vpack.c.bf16 %v4640, %v4639
        %v4806 = vpack.c.bf16 %v4642, %v4641
        %v4807 = vpack.c.bf16 %v4644, %v4643
        %v4808 = vpack.c.bf16 %v4646, %v4645
        %v4809 = vpack.c.bf16 %v4648, %v4647
        %v4810 = vpack.c.bf16 %v4650, %v4649
        %v4811 = vpack.c.bf16 %v4652, %v4651
        %v4812 = vpack.c.bf16 %v4654, %v4653
        %v4813 = vpack.c.bf16 %v4656, %v4655
        %v4814 = vpack.c.bf16 %v4658, %v4657
        %v4815 = vpack.c.bf16 %v4660, %v4659
        %v4816 = vpack.c.bf16 %v4662, %v4661
        %v4817 = vpack.c.bf16 %v4664, %v4663
        %v4818 = vpack.c.bf16 %v4666, %v4665
        %v4819 = vpack.c.bf16 %v4668, %v4667
        %v4820 = vpack.c.bf16 %v4670, %v4669
        %v4821 = vpack.c.bf16 %v4672, %v4671
        %v4822 = vpack.c.bf16 %v4674, %v4673
        %v4823 = vpack.c.bf16 %v4676, %v4675
        %v4824 = vpack.c.bf16 %v4678, %v4677
        %v4825 = vpack.c.bf16 %v4680, %v4679
        %v4826 = vpack.c.bf16 %v4682, %v4681
        %v4827 = vpack.c.bf16 %v4684, %v4683
        %v4828 = vpack.c.bf16 %v4686, %v4685
        %v4829 = vpack.c.bf16 %v4688, %v4687
        %v4830 = vpack.c.bf16 %v4690, %v4689
        %v4831 = vpack.c.bf16 %v4692, %v4691
        %v4832 = vpack.c.bf16 %v4694, %v4693
        %v4833 = vpack.c.bf16 %v4696, %v4695
        %v4834 = vpack.c.bf16 %v4698, %v4697
        %v4835 = vpack.c.bf16 %v4700, %v4699
        %v4836 = vpack.c.bf16 %v4702, %v4701
        %v4837 = vpack.c.bf16 %v4704, %v4703
        %v4838 = vpack.c.bf16 %v4706, %v4705
        %v4839 = vpack.c.bf16 %v4708, %v4707
        %v4840 = vpack.c.bf16 %v4710, %v4709
        %v4841 = vpack.c.bf16 %v4712, %v4711
        %v4842 = vpack.c.bf16 %v4714, %v4713
        %v4843 = vunpack.c.l.bf16 %v4715
        %v4844 = vunpack.c.h.bf16 %v4715
        %v4845 = vunpack.c.l.bf16 %v4716
        %v4846 = vunpack.c.h.bf16 %v4716
        %v4847 = vunpack.c.l.bf16 %v4717
        %v4848 = vunpack.c.h.bf16 %v4717
        %v4849 = vunpack.c.l.bf16 %v4718
        %v4850 = vunpack.c.h.bf16 %v4718
        %v4851 = vunpack.c.l.bf16 %v4719
        %v4852 = vunpack.c.h.bf16 %v4719
        %v4853 = vunpack.c.l.bf16 %v4720
        %v4854 = vunpack.c.h.bf16 %v4720
        %v4855 = vunpack.c.l.bf16 %v4721
        %v4856 = vunpack.c.h.bf16 %v4721
        %v4857 = vunpack.c.l.bf16 %v4722
        %v4858 = vunpack.c.h.bf16 %v4722
        %v4859 = vunpack.c.l.bf16 %v4723
        %v4860 = vunpack.c.h.bf16 %v4723
        %v4861 = vunpack.c.l.bf16 %v4724
        %v4862 = vunpack.c.h.bf16 %v4724
        %v4863 = vunpack.c.l.bf16 %v4725
        %v4864 = vunpack.c.h.bf16 %v4725
        %v4865 = vunpack.c.l.bf16 %v4726
        %v4866 = vunpack.c.h.bf16 %v4726
        %v4867 = vunpack.c.l.bf16 %v4727
        %v4868 = vunpack.c.h.bf16 %v4727
        %v4869 = vunpack.c.l.bf16 %v4728
        %v4870 = vunpack.c.h.bf16 %v4728
        %v4871 = vunpack.c.l.bf16 %v4729
        %v4872 = vunpack.c.h.bf16 %v4729
        %v4873 = vunpack.c.l.bf16 %v4730
        %v4874 = vunpack.c.h.bf16 %v4730
        %v4875 = vunpack.c.l.bf16 %v4731
        %v4876 = vunpack.c.h.bf16 %v4731
        %v4877 = vunpack.c.l.bf16 %v4732
        %v4878 = vunpack.c.h.bf16 %v4732
        %v4879 = vunpack.c.l.bf16 %v4733
        %v4880 = vunpack.c.h.bf16 %v4733
        %v4881 = vunpack.c.l.bf16 %v4734
        %v4882 = vunpack.c.h.bf16 %v4734
        %v4883 = vunpack.c.l.bf16 %v4735
        %v4884 = vunpack.c.h.bf16 %v4735
        %v4885 = vunpack.c.l.bf16 %v4736
        %v4886 = vunpack.c.h.bf16 %v4736
        %v4887 = vunpack.c.l.bf16 %v4737
        %v4888 = vunpack.c.h.bf16 %v4737
        %v4889 = vunpack.c.l.bf16 %v4738
        %v4890 = vunpack.c.h.bf16 %v4738
        %v4891 = vunpack.c.l.bf16 %v4739
        %v4892 = vunpack.c.h.bf16 %v4739
        %v4893 = vunpack.c.l.bf16 %v4740
        %v4894 = vunpack.c.h.bf16 %v4740
        %v4895 = vunpack.c.l.bf16 %v4741
        %v4896 = vunpack.c.h.bf16 %v4741
        %v4897 = vunpack.c.l.bf16 %v4742
        %v4898 = vunpack.c.h.bf16 %v4742
        %v4899 = vunpack.c.l.bf16 %v4743
        %v4900 = vunpack.c.h.bf16 %v4743
        %v4901 = vunpack.c.l.bf16 %v4744
        %v4902 = vunpack.c.h.bf16 %v4744
        %v4903 = vunpack.c.l.bf16 %v4745
        %v4904 = vunpack.c.h.bf16 %v4745
        %v4905 = vunpack.c.l.bf16 %v4746
        %v4906 = vunpack.c.h.bf16 %v4746
        %v4907 = vunpack.c.l.bf16 %v4747
        %v4908 = vunpack.c.h.bf16 %v4747
        %v4909 = vunpack.c.l.bf16 %v4748
        %v4910 = vunpack.c.h.bf16 %v4748
        %v4911 = vunpack.c.l.bf16 %v4749
        %v4912 = vunpack.c.h.bf16 %v4749
        %v4913 = vunpack.c.l.bf16 %v4750
        %v4914 = vunpack.c.h.bf16 %v4750
        %v4915 = vunpack.c.l.bf16 %v4751
        %v4916 = vunpack.c.h.bf16 %v4751
        %v4917 = vunpack.c.l.bf16 %v4752
        %v4918 = vunpack.c.h.bf16 %v4752
        %v4919 = vunpack.c.l.bf16 %v4753
        %v4920 = vunpack.c.h.bf16 %v4753
        %v4921 = vunpack.c.l.bf16 %v4754
        %v4922 = vunpack.c.h.bf16 %v4754
        %v4923 = vunpack.c.l.bf16 %v4755
        %v4924 = vunpack.c.h.bf16 %v4755
        %v4925 = vunpack.c.l.bf16 %v4756
        %v4926 = vunpack.c.h.bf16 %v4756
        %v4927 = vunpack.c.l.bf16 %v4757
        %v4928 = vunpack.c.h.bf16 %v4757
        %v4929 = vunpack.c.l.bf16 %v4758
        %v4930 = vunpack.c.h.bf16 %v4758
        %v4931 = vunpack.c.l.bf16 %v4759
        %v4932 = vunpack.c.h.bf16 %v4759
        %v4933 = vunpack.c.l.bf16 %v4760
        %v4934 = vunpack.c.h.bf16 %v4760
        %v4935 = vunpack.c.l.bf16 %v4761
        %v4936 = vunpack.c.h.bf16 %v4761
        %v4937 = vunpack.c.l.bf16 %v4762
        %v4938 = vunpack.c.h.bf16 %v4762
        %v4939 = vunpack.c.l.bf16 %v4763
        %v4940 = vunpack.c.h.bf16 %v4763
        %v4941 = vunpack.c.l.bf16 %v4764
        %v4942 = vunpack.c.h.bf16 %v4764
        %v4943 = vunpack.c.l.bf16 %v4765
        %v4944 = vunpack.c.h.bf16 %v4765
        %v4945 = vunpack.c.l.bf16 %v4766
        %v4946 = vunpack.c.h.bf16 %v4766
        %v4947 = vunpack.c.l.bf16 %v4767
        %v4948 = vunpack.c.h.bf16 %v4767
        %v4949 = vunpack.c.l.bf16 %v4768
        %v4950 = vunpack.c.h.bf16 %v4768
        %v4951 = vunpack.c.l.bf16 %v4769
        %v4952 = vunpack.c.h.bf16 %v4769
        %v4953 = vunpack.c.l.bf16 %v4770
        %v4954 = vunpack.c.h.bf16 %v4770
        %v4955 = vunpack.c.l.bf16 %v4771
        %v4956 = vunpack.c.h.bf16 %v4771
        %v4957 = vunpack.c.l.bf16 %v4772
        %v4958 = vunpack.c.h.bf16 %v4772
        %v4959 = vunpack.c.l.bf16 %v4773
        %v4960 = vunpack.c.h.bf16 %v4773
        %v4961 = vunpack.c.l.bf16 %v4774
        %v4962 = vunpack.c.h.bf16 %v4774
        %v4963 = vunpack.c.l.bf16 %v4775
        %v4964 = vunpack.c.h.bf16 %v4775
        %v4965 = vunpack.c.l.bf16 %v4776
        %v4966 = vunpack.c.h.bf16 %v4776
        %v4967 = vunpack.c.l.bf16 %v4777
        %v4968 = vunpack.c.h.bf16 %v4777
        %v4969 = vunpack.c.l.bf16 %v4778
        %v4970 = vunpack.c.h.bf16 %v4778
        %v4971 = vunpack.c.l.bf16 %v4779
        %v4972 = vunpack.c.h.bf16 %v4779
        %v4973 = vunpack.c.l.bf16 %v4780
        %v4974 = vunpack.c.h.bf16 %v4780
        %v4975 = vunpack.c.l.bf16 %v4781
        %v4976 = vunpack.c.h.bf16 %v4781
        %v4977 = vunpack.c.l.bf16 %v4782
        %v4978 = vunpack.c.h.bf16 %v4782
        %v4979 = vunpack.c.l.bf16 %v4783
        %v4980 = vunpack.c.h.bf16 %v4783
        %v4981 = vunpack.c.l.bf16 %v4784
        %v4982 = vunpack.c.h.bf16 %v4784
        %v4983 = vunpack.c.l.bf16 %v4785
        %v4984 = vunpack.c.h.bf16 %v4785
        %v4985 = vunpack.c.l.bf16 %v4786
        %v4986 = vunpack.c.h.bf16 %v4786
        %v4987 = vunpack.c.l.bf16 %v4787
        %v4988 = vunpack.c.h.bf16 %v4787
        %v4989 = vunpack.c.l.bf16 %v4788
        %v4990 = vunpack.c.h.bf16 %v4788
        %v4991 = vunpack.c.l.bf16 %v4789
        %v4992 = vunpack.c.h.bf16 %v4789
        %v4993 = vunpack.c.l.bf16 %v4790
        %v4994 = vunpack.c.h.bf16 %v4790
        %v4995 = vunpack.c.l.bf16 %v4791
        %v4996 = vunpack.c.h.bf16 %v4791
        %v4997 = vunpack.c.l.bf16 %v4792
        %v4998 = vunpack.c.h.bf16 %v4792
        %v4999 = vunpack.c.l.bf16 %v4793
        %v5000 = vunpack.c.h.bf16 %v4793
        %v5001 = vunpack.c.l.bf16 %v4794
        %v5002 = vunpack.c.h.bf16 %v4794
        %v5003 = vunpack.c.l.bf16 %v4795
        %v5004 = vunpack.c.h.bf16 %v4795
        %v5005 = vunpack.c.l.bf16 %v4796
        %v5006 = vunpack.c.h.bf16 %v4796
        %v5007 = vunpack.c.l.bf16 %v4797
        %v5008 = vunpack.c.h.bf16 %v4797
        %v5009 = vunpack.c.l.bf16 %v4798
        %v5010 = vunpack.c.h.bf16 %v4798
        %v5011 = vunpack.c.l.bf16 %v4799
        %v5012 = vunpack.c.h.bf16 %v4799
        %v5013 = vunpack.c.l.bf16 %v4800
        %v5014 = vunpack.c.h.bf16 %v4800
        %v5015 = vunpack.c.l.bf16 %v4801
        %v5016 = vunpack.c.h.bf16 %v4801
        %v5017 = vunpack.c.l.bf16 %v4802
        %v5018 = vunpack.c.h.bf16 %v4802
        %v5019 = vunpack.c.l.bf16 %v4803
        %v5020 = vunpack.c.h.bf16 %v4803
        %v5021 = vunpack.c.l.bf16 %v4804
        %v5022 = vunpack.c.h.bf16 %v4804
        %v5023 = vunpack.c.l.bf16 %v4805
        %v5024 = vunpack.c.h.bf16 %v4805
        %v5025 = vunpack.c.l.bf16 %v4806
        %v5026 = vunpack.c.h.bf16 %v4806
        %v5027 = vunpack.c.l.bf16 %v4807
        %v5028 = vunpack.c.h.bf16 %v4807
        %v5029 = vunpack.c.l.bf16 %v4808
        %v5030 = vunpack.c.h.bf16 %v4808
        %v5031 = vunpack.c.l.bf16 %v4809
        %v5032 = vunpack.c.h.bf16 %v4809
        %v5033 = vunpack.c.l.bf16 %v4810
        %v5034 = vunpack.c.h.bf16 %v4810
        %v5035 = vunpack.c.l.bf16 %v4811
        %v5036 = vunpack.c.h.bf16 %v4811
        %v5037 = vunpack.c.l.bf16 %v4812
        %v5038 = vunpack.c.h.bf16 %v4812
        %v5039 = vunpack.c.l.bf16 %v4813
        %v5040 = vunpack.c.h.bf16 %v4813
        %v5041 = vunpack.c.l.bf16 %v4814
        %v5042 = vunpack.c.h.bf16 %v4814
        %v5043 = vunpack.c.l.bf16 %v4815
        %v5044 = vunpack.c.h.bf16 %v4815
        %v5045 = vunpack.c.l.bf16 %v4816
        %v5046 = vunpack.c.h.bf16 %v4816
        %v5047 = vunpack.c.l.bf16 %v4817
        %v5048 = vunpack.c.h.bf16 %v4817
        %v5049 = vunpack.c.l.bf16 %v4818
        %v5050 = vunpack.c.h.bf16 %v4818
        %v5051 = vunpack.c.l.bf16 %v4819
        %v5052 = vunpack.c.h.bf16 %v4819
        %v5053 = vunpack.c.l.bf16 %v4820
        %v5054 = vunpack.c.h.bf16 %v4820
        %v5055 = vunpack.c.l.bf16 %v4821
        %v5056 = vunpack.c.h.bf16 %v4821
        %v5057 = vunpack.c.l.bf16 %v4822
        %v5058 = vunpack.c.h.bf16 %v4822
        %v5059 = vunpack.c.l.bf16 %v4823
        %v5060 = vunpack.c.h.bf16 %v4823
        %v5061 = vunpack.c.l.bf16 %v4824
        %v5062 = vunpack.c.h.bf16 %v4824
        %v5063 = vunpack.c.l.bf16 %v4825
        %v5064 = vunpack.c.h.bf16 %v4825
        %v5065 = vunpack.c.l.bf16 %v4826
        %v5066 = vunpack.c.h.bf16 %v4826
        %v5067 = vunpack.c.l.bf16 %v4827
        %v5068 = vunpack.c.h.bf16 %v4827
        %v5069 = vunpack.c.l.bf16 %v4828
        %v5070 = vunpack.c.h.bf16 %v4828
        %v5071 = vunpack.c.l.bf16 %v4829
        %v5072 = vunpack.c.h.bf16 %v4829
        %v5073 = vunpack.c.l.bf16 %v4830
        %v5074 = vunpack.c.h.bf16 %v4830
        %v5075 = vunpack.c.l.bf16 %v4831
        %v5076 = vunpack.c.h.bf16 %v4831
        %v5077 = vunpack.c.l.bf16 %v4832
        %v5078 = vunpack.c.h.bf16 %v4832
        %v5079 = vunpack.c.l.bf16 %v4833
        %v5080 = vunpack.c.h.bf16 %v4833
        %v5081 = vunpack.c.l.bf16 %v4834
        %v5082 = vunpack.c.h.bf16 %v4834
        %v5083 = vunpack.c.l.bf16 %v4835
        %v5084 = vunpack.c.h.bf16 %v4835
        %v5085 = vunpack.c.l.bf16 %v4836
        %v5086 = vunpack.c.h.bf16 %v4836
        %v5087 = vunpack.c.l.bf16 %v4837
        %v5088 = vunpack.c.h.bf16 %v4837
        %v5089 = vunpack.c.l.bf16 %v4838
        %v5090 = vunpack.c.h.bf16 %v4838
        %v5091 = vunpack.c.l.bf16 %v4839
        %v5092 = vunpack.c.h.bf16 %v4839
        %v5093 = vunpack.c.l.bf16 %v4840
        %v5094 = vunpack.c.h.bf16 %v4840
        %v5095 = vunpack.c.l.bf16 %v4841
        %v5096 = vunpack.c.h.bf16 %v4841
        %v5097 = vunpack.c.l.bf16 %v4842
        %v5098 = vunpack.c.h.bf16 %v4842
        %v5099 = vadd.f32 %v4843, %v4844
        %v5100 = vadd.f32 %v5099, %v4845
        %v5101 = vadd.f32 %v5100, %v4846
        %v5102 = vadd.f32 %v5101, %v4847
        %v5103 = vadd.f32 %v5102, %v4848
        %v5104 = vadd.f32 %v5103, %v4849
        %v5105 = vadd.f32 %v5104, %v4850
        %v5106 = vadd.f32 %v5105, %v4851
        %v5107 = vadd.f32 %v5106, %v4852
        %v5108 = vadd.f32 %v5107, %v4853
        %v5109 = vadd.f32 %v5108, %v4854
        %v5110 = vadd.f32 %v5109, %v4855
        %v5111 = vadd.f32 %v5110, %v4856
        %v5112 = vadd.f32 %v5111, %v4857
        %v5113 = vadd.f32 %v5112, %v4858
        %v5114 = vrot.slane %v5113, 4
        %v5115 = vadd.f32 %v5113, %v5114
        %v5116 = vrot.slane %v5115, 2
        %v5117 = vadd.f32 %v5115, %v5116
        %v5118 = vrot.slane %v5117, 1
        %v5119 = vadd.f32 %v5117, %v5118
        %v5120 = vadd.f32 %v4859, %v4860
        %v5121 = vadd.f32 %v5120, %v4861
        %v5122 = vadd.f32 %v5121, %v4862
        %v5123 = vadd.f32 %v5122, %v4863
        %v5124 = vadd.f32 %v5123, %v4864
        %v5125 = vadd.f32 %v5124, %v4865
        %v5126 = vadd.f32 %v5125, %v4866
        %v5127 = vadd.f32 %v5126, %v4867
        %v5128 = vadd.f32 %v5127, %v4868
        %v5129 = vadd.f32 %v5128, %v4869
        %v5130 = vadd.f32 %v5129, %v4870
        %v5131 = vadd.f32 %v5130, %v4871
        %v5132 = vadd.f32 %v5131, %v4872
        %v5133 = vadd.f32 %v5132, %v4873
        %v5134 = vadd.f32 %v5133, %v4874
        %v5135 = vrot.slane %v5134, 4
        %v5136 = vadd.f32 %v5134, %v5135
        %v5137 = vrot.slane %v5136, 2
        %v5138 = vadd.f32 %v5136, %v5137
        %v5139 = vrot.slane %v5138, 1
        %v5140 = vadd.f32 %v5138, %v5139
        %v5141 = vadd.f32 %v4875, %v4876
        %v5142 = vadd.f32 %v5141, %v4877
        %v5143 = vadd.f32 %v5142, %v4878
        %v5144 = vadd.f32 %v5143, %v4879
        %v5145 = vadd.f32 %v5144, %v4880
        %v5146 = vadd.f32 %v5145, %v4881
        %v5147 = vadd.f32 %v5146, %v4882
        %v5148 = vadd.f32 %v5147, %v4883
        %v5149 = vadd.f32 %v5148, %v4884
        %v5150 = vadd.f32 %v5149, %v4885
        %v5151 = vadd.f32 %v5150, %v4886
        %v5152 = vadd.f32 %v5151, %v4887
        %v5153 = vadd.f32 %v5152, %v4888
        %v5154 = vadd.f32 %v5153, %v4889
        %v5155 = vadd.f32 %v5154, %v4890
        %v5156 = vrot.slane %v5155, 4
        %v5157 = vadd.f32 %v5155, %v5156
        %v5158 = vrot.slane %v5157, 2
        %v5159 = vadd.f32 %v5157, %v5158
        %v5160 = vrot.slane %v5159, 1
        %v5161 = vadd.f32 %v5159, %v5160
        %v5162 = vadd.f32 %v4891, %v4892
        %v5163 = vadd.f32 %v5162, %v4893
        %v5164 = vadd.f32 %v5163, %v4894
        %v5165 = vadd.f32 %v5164, %v4895
        %v5166 = vadd.f32 %v5165, %v4896
        %v5167 = vadd.f32 %v5166, %v4897
        %v5168 = vadd.f32 %v5167, %v4898
        %v5169 = vadd.f32 %v5168, %v4899
        %v5170 = vadd.f32 %v5169, %v4900
        %v5171 = vadd.f32 %v5170, %v4901
        %v5172 = vadd.f32 %v5171, %v4902
        %v5173 = vadd.f32 %v5172, %v4903
        %v5174 = vadd.f32 %v5173, %v4904
        %v5175 = vadd.f32 %v5174, %v4905
        %v5176 = vadd.f32 %v5175, %v4906
        %v5177 = vrot.slane %v5176, 4
        %v5178 = vadd.f32 %v5176, %v5177
        %v5179 = vrot.slane %v5178, 2
        %v5180 = vadd.f32 %v5178, %v5179
        %v5181 = vrot.slane %v5180, 1
        %v5182 = vadd.f32 %v5180, %v5181
        %v5183 = vadd.f32 %v4907, %v4908
        %v5184 = vadd.f32 %v5183, %v4909
        %v5185 = vadd.f32 %v5184, %v4910
        %v5186 = vadd.f32 %v5185, %v4911
        %v5187 = vadd.f32 %v5186, %v4912
        %v5188 = vadd.f32 %v5187, %v4913
        %v5189 = vadd.f32 %v5188, %v4914
        %v5190 = vadd.f32 %v5189, %v4915
        %v5191 = vadd.f32 %v5190, %v4916
        %v5192 = vadd.f32 %v5191, %v4917
        %v5193 = vadd.f32 %v5192, %v4918
        %v5194 = vadd.f32 %v5193, %v4919
        %v5195 = vadd.f32 %v5194, %v4920
        %v5196 = vadd.f32 %v5195, %v4921
        %v5197 = vadd.f32 %v5196, %v4922
        %v5198 = vrot.slane %v5197, 4
        %v5199 = vadd.f32 %v5197, %v5198
        %v5200 = vrot.slane %v5199, 2
        %v5201 = vadd.f32 %v5199, %v5200
        %v5202 = vrot.slane %v5201, 1
        %v5203 = vadd.f32 %v5201, %v5202
        %v5204 = vadd.f32 %v4923, %v4924
        %v5205 = vadd.f32 %v5204, %v4925
        %v5206 = vadd.f32 %v5205, %v4926
        %v5207 = vadd.f32 %v5206, %v4927
        %v5208 = vadd.f32 %v5207, %v4928
        %v5209 = vadd.f32 %v5208, %v4929
        %v5210 = vadd.f32 %v5209, %v4930
        %v5211 = vadd.f32 %v5210, %v4931
        %v5212 = vadd.f32 %v5211, %v4932
        %v5213 = vadd.f32 %v5212, %v4933
        %v5214 = vadd.f32 %v5213, %v4934
        %v5215 = vadd.f32 %v5214, %v4935
        %v5216 = vadd.f32 %v5215, %v4936
        %v5217 = vadd.f32 %v5216, %v4937
        %v5218 = vadd.f32 %v5217, %v4938
        %v5219 = vrot.slane %v5218, 4
        %v5220 = vadd.f32 %v5218, %v5219
        %v5221 = vrot.slane %v5220, 2
        %v5222 = vadd.f32 %v5220, %v5221
        %v5223 = vrot.slane %v5222, 1
        %v5224 = vadd.f32 %v5222, %v5223
        %v5225 = vadd.f32 %v4939, %v4940
        %v5226 = vadd.f32 %v5225, %v4941
        %v5227 = vadd.f32 %v5226, %v4942
        %v5228 = vadd.f32 %v5227, %v4943
        %v5229 = vadd.f32 %v5228, %v4944
        %v5230 = vadd.f32 %v5229, %v4945
        %v5231 = vadd.f32 %v5230, %v4946
        %v5232 = vadd.f32 %v5231, %v4947
        %v5233 = vadd.f32 %v5232, %v4948
        %v5234 = vadd.f32 %v5233, %v4949
        %v5235 = vadd.f32 %v5234, %v4950
        %v5236 = vadd.f32 %v5235, %v4951
        %v5237 = vadd.f32 %v5236, %v4952
        %v5238 = vadd.f32 %v5237, %v4953
        %v5239 = vadd.f32 %v5238, %v4954
        %v5240 = vrot.slane %v5239, 4
        %v5241 = vadd.f32 %v5239, %v5240
        %v5242 = vrot.slane %v5241, 2
        %v5243 = vadd.f32 %v5241, %v5242
        %v5244 = vrot.slane %v5243, 1
        %v5245 = vadd.f32 %v5243, %v5244
        %v5246 = vadd.f32 %v4955, %v4956
        %v5247 = vadd.f32 %v5246, %v4957
        %v5248 = vadd.f32 %v5247, %v4958
        %v5249 = vadd.f32 %v5248, %v4959
        %v5250 = vadd.f32 %v5249, %v4960
        %v5251 = vadd.f32 %v5250, %v4961
        %v5252 = vadd.f32 %v5251, %v4962
        %v5253 = vadd.f32 %v5252, %v4963
        %v5254 = vadd.f32 %v5253, %v4964
        %v5255 = vadd.f32 %v5254, %v4965
        %v5256 = vadd.f32 %v5255, %v4966
        %v5257 = vadd.f32 %v5256, %v4967
        %v5258 = vadd.f32 %v5257, %v4968
        %v5259 = vadd.f32 %v5258, %v4969
        %v5260 = vadd.f32 %v5259, %v4970
        %v5261 = vrot.slane %v5260, 4
        %v5262 = vadd.f32 %v5260, %v5261
        %v5263 = vrot.slane %v5262, 2
        %v5264 = vadd.f32 %v5262, %v5263
        %v5265 = vrot.slane %v5264, 1
        %v5266 = vadd.f32 %v5264, %v5265
        %v5267 = vadd.f32 %v4971, %v4972
        %v5268 = vadd.f32 %v5267, %v4973
        %v5269 = vadd.f32 %v5268, %v4974
        %v5270 = vadd.f32 %v5269, %v4975
        %v5271 = vadd.f32 %v5270, %v4976
        %v5272 = vadd.f32 %v5271, %v4977
        %v5273 = vadd.f32 %v5272, %v4978
        %v5274 = vadd.f32 %v5273, %v4979
        %v5275 = vadd.f32 %v5274, %v4980
        %v5276 = vadd.f32 %v5275, %v4981
        %v5277 = vadd.f32 %v5276, %v4982
        %v5278 = vadd.f32 %v5277, %v4983
        %v5279 = vadd.f32 %v5278, %v4984
        %v5280 = vadd.f32 %v5279, %v4985
        %v5281 = vadd.f32 %v5280, %v4986
        %v5282 = vrot.slane %v5281, 4
        %v5283 = vadd.f32 %v5281, %v5282
        %v5284 = vrot.slane %v5283, 2
        %v5285 = vadd.f32 %v5283, %v5284
        %v5286 = vrot.slane %v5285, 1
        %v5287 = vadd.f32 %v5285, %v5286
        %v5288 = vadd.f32 %v4987, %v4988
        %v5289 = vadd.f32 %v5288, %v4989
        %v5290 = vadd.f32 %v5289, %v4990
        %v5291 = vadd.f32 %v5290, %v4991
        %v5292 = vadd.f32 %v5291, %v4992
        %v5293 = vadd.f32 %v5292, %v4993
        %v5294 = vadd.f32 %v5293, %v4994
        %v5295 = vadd.f32 %v5294, %v4995
        %v5296 = vadd.f32 %v5295, %v4996
        %v5297 = vadd.f32 %v5296, %v4997
        %v5298 = vadd.f32 %v5297, %v4998
        %v5299 = vadd.f32 %v5298, %v4999
        %v5300 = vadd.f32 %v5299, %v5000
        %v5301 = vadd.f32 %v5300, %v5001
        %v5302 = vadd.f32 %v5301, %v5002
        %v5303 = vrot.slane %v5302, 4
        %v5304 = vadd.f32 %v5302, %v5303
        %v5305 = vrot.slane %v5304, 2
        %v5306 = vadd.f32 %v5304, %v5305
        %v5307 = vrot.slane %v5306, 1
        %v5308 = vadd.f32 %v5306, %v5307
        %v5309 = vadd.f32 %v5003, %v5004
        %v5310 = vadd.f32 %v5309, %v5005
        %v5311 = vadd.f32 %v5310, %v5006
        %v5312 = vadd.f32 %v5311, %v5007
        %v5313 = vadd.f32 %v5312, %v5008
        %v5314 = vadd.f32 %v5313, %v5009
        %v5315 = vadd.f32 %v5314, %v5010
        %v5316 = vadd.f32 %v5315, %v5011
        %v5317 = vadd.f32 %v5316, %v5012
        %v5318 = vadd.f32 %v5317, %v5013
        %v5319 = vadd.f32 %v5318, %v5014
        %v5320 = vadd.f32 %v5319, %v5015
        %v5321 = vadd.f32 %v5320, %v5016
        %v5322 = vadd.f32 %v5321, %v5017
        %v5323 = vadd.f32 %v5322, %v5018
        %v5324 = vrot.slane %v5323, 4
        %v5325 = vadd.f32 %v5323, %v5324
        %v5326 = vrot.slane %v5325, 2
        %v5327 = vadd.f32 %v5325, %v5326
        %v5328 = vrot.slane %v5327, 1
        %v5329 = vadd.f32 %v5327, %v5328
        %v5330 = vadd.f32 %v5019, %v5020
        %v5331 = vadd.f32 %v5330, %v5021
        %v5332 = vadd.f32 %v5331, %v5022
        %v5333 = vadd.f32 %v5332, %v5023
        %v5334 = vadd.f32 %v5333, %v5024
        %v5335 = vadd.f32 %v5334, %v5025
        %v5336 = vadd.f32 %v5335, %v5026
        %v5337 = vadd.f32 %v5336, %v5027
        %v5338 = vadd.f32 %v5337, %v5028
        %v5339 = vadd.f32 %v5338, %v5029
        %v5340 = vadd.f32 %v5339, %v5030
        %v5341 = vadd.f32 %v5340, %v5031
        %v5342 = vadd.f32 %v5341, %v5032
        %v5343 = vadd.f32 %v5342, %v5033
        %v5344 = vadd.f32 %v5343, %v5034
        %v5345 = vrot.slane %v5344, 4
        %v5346 = vadd.f32 %v5344, %v5345
        %v5347 = vrot.slane %v5346, 2
        %v5348 = vadd.f32 %v5346, %v5347
        %v5349 = vrot.slane %v5348, 1
        %v5350 = vadd.f32 %v5348, %v5349
        %v5351 = vadd.f32 %v5035, %v5036
        %v5352 = vadd.f32 %v5351, %v5037
        %v5353 = vadd.f32 %v5352, %v5038
        %v5354 = vadd.f32 %v5353, %v5039
        %v5355 = vadd.f32 %v5354, %v5040
        %v5356 = vadd.f32 %v5355, %v5041
        %v5357 = vadd.f32 %v5356, %v5042
        %v5358 = vadd.f32 %v5357, %v5043
        %v5359 = vadd.f32 %v5358, %v5044
        %v5360 = vadd.f32 %v5359, %v5045
        %v5361 = vadd.f32 %v5360, %v5046
        %v5362 = vadd.f32 %v5361, %v5047
        %v5363 = vadd.f32 %v5362, %v5048
        %v5364 = vadd.f32 %v5363, %v5049
        %v5365 = vadd.f32 %v5364, %v5050
        %v5366 = vrot.slane %v5365, 4
        %v5367 = vadd.f32 %v5365, %v5366
        %v5368 = vrot.slane %v5367, 2
        %v5369 = vadd.f32 %v5367, %v5368
        %v5370 = vrot.slane %v5369, 1
        %v5371 = vadd.f32 %v5369, %v5370
        %v5372 = vadd.f32 %v5051, %v5052
        %v5373 = vadd.f32 %v5372, %v5053
        %v5374 = vadd.f32 %v5373, %v5054
        %v5375 = vadd.f32 %v5374, %v5055
        %v5376 = vadd.f32 %v5375, %v5056
        %v5377 = vadd.f32 %v5376, %v5057
        %v5378 = vadd.f32 %v5377, %v5058
        %v5379 = vadd.f32 %v5378, %v5059
        %v5380 = vadd.f32 %v5379, %v5060
        %v5381 = vadd.f32 %v5380, %v5061
        %v5382 = vadd.f32 %v5381, %v5062
        %v5383 = vadd.f32 %v5382, %v5063
        %v5384 = vadd.f32 %v5383, %v5064
        %v5385 = vadd.f32 %v5384, %v5065
        %v5386 = vadd.f32 %v5385, %v5066
        %v5387 = vrot.slane %v5386, 4
        %v5388 = vadd.f32 %v5386, %v5387
        %v5389 = vrot.slane %v5388, 2
        %v5390 = vadd.f32 %v5388, %v5389
        %v5391 = vrot.slane %v5390, 1
        %v5392 = vadd.f32 %v5390, %v5391
        %v5393 = vadd.f32 %v5067, %v5068
        %v5394 = vadd.f32 %v5393, %v5069
        %v5395 = vadd.f32 %v5394, %v5070
        %v5396 = vadd.f32 %v5395, %v5071
        %v5397 = vadd.f32 %v5396, %v5072
        %v5398 = vadd.f32 %v5397, %v5073
        %v5399 = vadd.f32 %v5398, %v5074
        %v5400 = vadd.f32 %v5399, %v5075
        %v5401 = vadd.f32 %v5400, %v5076
        %v5402 = vadd.f32 %v5401, %v5077
        %v5403 = vadd.f32 %v5402, %v5078
        %v5404 = vadd.f32 %v5403, %v5079
        %v5405 = vadd.f32 %v5404, %v5080
        %v5406 = vadd.f32 %v5405, %v5081
        %v5407 = vadd.f32 %v5406, %v5082
        %v5408 = vrot.slane %v5407, 4
        %v5409 = vadd.f32 %v5407, %v5408
        %v5410 = vrot.slane %v5409, 2
        %v5411 = vadd.f32 %v5409, %v5410
        %v5412 = vrot.slane %v5411, 1
        %v5413 = vadd.f32 %v5411, %v5412
        %v5414 = vadd.f32 %v5083, %v5084
        %v5415 = vadd.f32 %v5414, %v5085
        %v5416 = vadd.f32 %v5415, %v5086
        %v5417 = vadd.f32 %v5416, %v5087
        %v5418 = vadd.f32 %v5417, %v5088
        %v5419 = vadd.f32 %v5418, %v5089
        %v5420 = vadd.f32 %v5419, %v5090
        %v5421 = vadd.f32 %v5420, %v5091
        %v5422 = vadd.f32 %v5421, %v5092
        %v5423 = vadd.f32 %v5422, %v5093
        %v5424 = vadd.f32 %v5423, %v5094
        %v5425 = vadd.f32 %v5424, %v5095
        %v5426 = vadd.f32 %v5425, %v5096
        %v5427 = vadd.f32 %v5426, %v5097
        %v5428 = vadd.f32 %v5427, %v5098
        %v5429 = vrot.slane %v5428, 4
        %v5430 = vadd.f32 %v5428, %v5429
        %v5431 = vrot.slane %v5430, 2
        %v5432 = vadd.f32 %v5430, %v5431
        %v5433 = vrot.slane %v5432, 1
        %v5434 = vadd.f32 %v5432, %v5433
        %v5435 = vpack.c.bf16 %v5119, %v5119
        %v5436 = vpack.c.bf16 %v5140, %v5140
        %v5437 = vpack.c.bf16 %v5161, %v5161
        %v5438 = vpack.c.bf16 %v5182, %v5182
        %v5439 = vpack.c.bf16 %v5203, %v5203
        %v5440 = vpack.c.bf16 %v5224, %v5224
        %v5441 = vpack.c.bf16 %v5245, %v5245
        %v5442 = vpack.c.bf16 %v5266, %v5266
        %v5443 = vpack.c.bf16 %v5287, %v5287
        %v5444 = vpack.c.bf16 %v5308, %v5308
        %v5445 = vpack.c.bf16 %v5329, %v5329
        %v5446 = vpack.c.bf16 %v5350, %v5350
        %v5447 = vpack.c.bf16 %v5371, %v5371
        %v5448 = vpack.c.bf16 %v5392, %v5392
        %v5449 = vpack.c.bf16 %v5413, %v5413
        %v5450 = vpack.c.bf16 %v5434, %v5434
        %v5451 = vld [vmem:[#allocation2] sm:$0xff]
        %v5452 = vld [vmem:[#allocation2 + $0x8] sm:$0xff]
        %v5453 = vunpack.c.l.bf16 %v5435
        %v5454 = vunpack.c.l.bf16 %v5436
        %v5455 = vunpack.c.l.bf16 %v5437
        %v5456 = vunpack.c.l.bf16 %v5438
        %v5457 = vunpack.c.l.bf16 %v5439
        %v5458 = vunpack.c.l.bf16 %v5440
        %v5459 = vunpack.c.l.bf16 %v5441
        %v5460 = vunpack.c.l.bf16 %v5442
        %v5461 = vunpack.c.l.bf16 %v5443
        %v5462 = vunpack.c.l.bf16 %v5444
        %v5463 = vunpack.c.l.bf16 %v5445
        %v5464 = vunpack.c.l.bf16 %v5446
        %v5465 = vunpack.c.l.bf16 %v5447
        %v5466 = vunpack.c.l.bf16 %v5448
        %v5467 = vunpack.c.l.bf16 %v5449
        %v5468 = vunpack.c.l.bf16 %v5450
        %v5485 = vsel %vm2845, %v5454, %v5453
        %v5486 = vsel %vm2847, %v5455, %v5485
        %v5487 = vsel %vm2849, %v5456, %v5486
        %v5488 = vsel %vm2851, %v5457, %v5487
        %v5489 = vsel %vm2853, %v5458, %v5488
        %v5490 = vsel %vm2855, %v5459, %v5489
        %v5491 = vsel %vm2857, %v5460, %v5490
        %v5492 = vsel %vm2845, %v5462, %v5461
        %v5493 = vsel %vm2847, %v5463, %v5492
        %v5494 = vsel %vm2849, %v5464, %v5493
        %v5495 = vsel %vm2851, %v5465, %v5494
        %v5496 = vsel %vm2853, %v5466, %v5495
        %v5497 = vsel %vm2855, %v5467, %v5496
        %v5498 = vsel %vm2857, %v5468, %v5497
        %v5501 = vadd.f32 %v5451, %v5491
        %v5502 = vadd.f32 %v5452, %v5498
        %5503 = vst [vmem:[#allocation2] sm:$0xff] %v5501
        %5504 = vst [vmem:[#allocation2 + $0x8] sm:$0xff] %v5502
        %v5505 = vld [vmem:[#allocation2] sm:$0xff]
        %v5506 = vld [vmem:[#allocation2 + $0x8] sm:$0xff]
        %v5507 = vld [vmem:[%s1] sm:$0xff]
        %v5508 = vld [vmem:[%s1 + $0x8] sm:$0xff]
        %v5509 = vld [vmem:[%s1 + $0x10] sm:$0xff]
        %v5510 = vld [vmem:[%s1 + $0x18] sm:$0xff]
        %v5511 = vld [vmem:[%s1 + $0x20] sm:$0xff]
        %v5512 = vld [vmem:[%s1 + $0x28] sm:$0xff]
        %v5513 = vld [vmem:[%s1 + $0x30] sm:$0xff]
        %v5514 = vld [vmem:[%s1 + $0x38] sm:$0xff]
        %v5515 = vld [vmem:[%s1 + $0x40] sm:$0xff]
        %v5516 = vld [vmem:[%s1 + $0x48] sm:$0xff]
        %v5517 = vld [vmem:[%s1 + $0x50] sm:$0xff]
        %v5518 = vld [vmem:[%s1 + $0x58] sm:$0xff]
        %v5519 = vld [vmem:[%s1 + $0x60] sm:$0xff]
        %v5520 = vld [vmem:[%s1 + $0x68] sm:$0xff]
        %v5521 = vld [vmem:[%s1 + $0x70] sm:$0xff]
        %v5522 = vld [vmem:[%s1 + $0x78] sm:$0xff]
        %v5523 = vld [vmem:[%s2] sm:$0x1]
        %v5525 = vlaneseq
        %v5526 = vshrl.u32 %v5525, 7
        %v5527 = vsub.s32 0, %v5526
        %v5528 = vrot.slane %v5523, %v5527
        %5530 = vmatprep.subr.mxu0 0.0
        %5531 = vmatpush1.msra.mxu0 %v5507
        %5532 = vmatprep.subr.mxu0 0.0
        %5533 = vmatpush1.msra.mxu0 %v5508
        %5534 = vmatprep.subr.mxu0 0.0
        %5535 = vmatpush1.msra.mxu0 %v5509
        %5536 = vmatprep.subr.mxu0 0.0
        %5537 = vmatpush1.msra.mxu0 %v5510
        %5538 = vmatprep.subr.mxu0 0.0
        %5539 = vmatpush1.msra.mxu0 %v5511
        %5540 = vmatprep.subr.mxu0 0.0
        %5541 = vmatpush1.msra.mxu0 %v5512
        %5542 = vmatprep.subr.mxu0 0.0
        %5543 = vmatpush1.msra.mxu0 %v5513
        %5544 = vmatprep.subr.mxu0 0.0
        %5545 = vmatpush1.msra.mxu0 %v5514
        %5546 = vmatprep.subr.mxu0 0.0
        %5547 = vmatpush1.msra.mxu0 %v5515
        %5548 = vmatprep.subr.mxu0 0.0
        %5549 = vmatpush1.msra.mxu0 %v5516
        %5550 = vmatprep.subr.mxu0 0.0
        %5551 = vmatpush1.msra.mxu0 %v5517
        %5552 = vmatprep.subr.mxu0 0.0
        %5553 = vmatpush1.msra.mxu0 %v5518
        %5554 = vmatprep.subr.mxu0 0.0
        %5555 = vmatpush1.msra.mxu0 %v5519
        %5556 = vmatprep.subr.mxu0 0.0
        %5557 = vmatpush1.msra.mxu0 %v5520
        %5558 = vmatprep.subr.mxu0 0.0
        %5559 = vmatpush1.msra.mxu0 %v5521
        %5560 = vmatprep.subr.mxu0 0.0
        %5561 = vmatpush1.msra.mxu0 %v5522
        %5562 = vmatprep.subr.mxu0 0.0
        %5563 = vmatpush1.msra.mxu0 0.0
        %5564 = vmatprep.subr.mxu0 0.0
        %5565 = vmatpush1.msra.mxu0 0.0
        %5566 = vmatprep.subr.mxu0 0.0
        %5567 = vmatpush1.msra.mxu0 0.0
        %5568 = vmatprep.subr.mxu0 0.0
        %5569 = vmatpush1.msra.mxu0 0.0
        %5570 = vmatprep.subr.mxu0 0.0
        %5571 = vmatpush1.msra.mxu0 0.0
        %5572 = vmatprep.subr.mxu0 0.0
        %5573 = vmatpush1.msra.mxu0 0.0
        %5574 = vmatprep.subr.mxu0 0.0
        %5575 = vmatpush1.msra.mxu0 0.0
        %5576 = vmatprep.subr.mxu0 0.0
        %5577 = vmatpush1.msra.mxu0 0.0
        %5578 = vmatprep.subr.mxu0 0.0
        %5579 = vmatpush1.msra.mxu0 0.0
        %5580 = vmatprep.subr.mxu0 0.0
        %5581 = vmatpush1.msra.mxu0 0.0
        %5582 = vmatprep.subr.mxu0 0.0
        %5583 = vmatpush1.msra.mxu0 0.0
        %5584 = vmatprep.subr.mxu0 0.0
        %5585 = vmatpush1.msra.mxu0 0.0
        %5586 = vmatprep.subr.mxu0 0.0
        %5587 = vmatpush1.msra.mxu0 0.0
        %5588 = vmatprep.subr.mxu0 0.0
        %5589 = vmatpush1.msra.mxu0 0.0
        %5590 = vmatprep.subr.mxu0 0.0
        %5591 = vmatpush1.msra.mxu0 0.0
        %5592 = vmatprep.subr.mxu0 0.0
        %5593 = vmatpush1.msra.mxu0 0.0
        %5594 = vmatprep.mubr.f32.mxu0 0.0
        %5595 = vmatmul.mubr.f32.gmra.mrb[0].mxu0 %v5505
        %v5596 = vpop.f32.mrb[0].mxu0
        %v5597 = vadd.f32 %v5528, %v5596
        %v5598 = vpop.f32.mrb[0].mxu0
        %5599 = vmatprep.mubr.f32.mxu0 0.0
        %5600 = vmatmul.mubr.f32.gmra.mrb[0].mxu0 %v5506
        %v5601 = vpop.f32.mrb[0].mxu0
        %v5602 = vadd.f32 %v5528, %v5601
        %v5603 = vpop.f32.mrb[0].mxu0
        %5604 = vdwg.mxu0
        %v5605 = vmax.f32 %v5597, 0.0
        %v5606 = vmax.f32 %v5602, 0.0
        %v5607 = vld [vmem:[%s3] sm:$0xff]
        %v5608 = vld [vmem:[%s3 + $0x8] sm:$0xff]
        %v5609 = vld [vmem:[%s4] sm:$0x1]
        %v5611 = vlaneseq
        %v5612 = vshrl.u32 %v5611, 7
        %v5613 = vsub.s32 0, %v5612
        %v5614 = vrot.slane %v5609, %v5613
        %vm5616 = vcmask 130048
        %v5618 = vsel %vm5616, %v5605, 0
        %v5621 = vsel %vm5616, %v5606, 0
        %5623 = vmatprep.subr.mxu0 0.0
        %5624 = vmatpush1.msra.mxu0 %v5607
        %5625 = vmatprep.subr.mxu0 0.0
        %5626 = vmatpush1.msra.mxu0 %v5608
        %5627 = vmatprep.subr.mxu0 0.0
        %5628 = vmatpush1.msra.mxu0 0.0
        %5629 = vmatprep.subr.mxu0 0.0
        %5630 = vmatpush1.msra.mxu0 0.0
        %5631 = vmatprep.subr.mxu0 0.0
        %5632 = vmatpush1.msra.mxu0 0.0
        %5633 = vmatprep.subr.mxu0 0.0
        %5634 = vmatpush1.msra.mxu0 0.0
        %5635 = vmatprep.subr.mxu0 0.0
        %5636 = vmatpush1.msra.mxu0 0.0
        %5637 = vmatprep.subr.mxu0 0.0
        %5638 = vmatpush1.msra.mxu0 0.0
        %5639 = vmatprep.subr.mxu0 0.0
        %5640 = vmatpush1.msra.mxu0 0.0
        %5641 = vmatprep.subr.mxu0 0.0
        %5642 = vmatpush1.msra.mxu0 0.0
        %5643 = vmatprep.subr.mxu0 0.0
        %5644 = vmatpush1.msra.mxu0 0.0
        %5645 = vmatprep.subr.mxu0 0.0
        %5646 = vmatpush1.msra.mxu0 0.0
        %5647 = vmatprep.subr.mxu0 0.0
        %5648 = vmatpush1.msra.mxu0 0.0
        %5649 = vmatprep.subr.mxu0 0.0
        %5650 = vmatpush1.msra.mxu0 0.0
        %5651 = vmatprep.subr.mxu0 0.0
        %5652 = vmatpush1.msra.mxu0 0.0
        %5653 = vmatprep.subr.mxu0 0.0
        %5654 = vmatpush1.msra.mxu0 0.0
        %5655 = vmatprep.subr.mxu0 0.0
        %5656 = vmatpush1.msra.mxu0 0.0
        %5657 = vmatprep.subr.mxu0 0.0
        %5658 = vmatpush1.msra.mxu0 0.0
        %5659 = vmatprep.subr.mxu0 0.0
        %5660 = vmatpush1.msra.mxu0 0.0
        %5661 = vmatprep.subr.mxu0 0.0
        %5662 = vmatpush1.msra.mxu0 0.0
        %5663 = vmatprep.subr.mxu0 0.0
        %5664 = vmatpush1.msra.mxu0 0.0
        %5665 = vmatprep.subr.mxu0 0.0
        %5666 = vmatpush1.msra.mxu0 0.0
        %5667 = vmatprep.subr.mxu0 0.0
        %5668 = vmatpush1.msra.mxu0 0.0
        %5669 = vmatprep.subr.mxu0 0.0
        %5670 = vmatpush1.msra.mxu0 0.0
        %5671 = vmatprep.subr.mxu0 0.0
        %5672 = vmatpush1.msra.mxu0 0.0
        %5673 = vmatprep.subr.mxu0 0.0
        %5674 = vmatpush1.msra.mxu0 0.0
        %5675 = vmatprep.subr.mxu0 0.0
        %5676 = vmatpush1.msra.mxu0 0.0
        %5677 = vmatprep.subr.mxu0 0.0
        %5678 = vmatpush1.msra.mxu0 0.0
        %5679 = vmatprep.subr.mxu0 0.0
        %5680 = vmatpush1.msra.mxu0 0.0
        %5681 = vmatprep.subr.mxu0 0.0
        %5682 = vmatpush1.msra.mxu0 0.0
        %5683 = vmatprep.subr.mxu0 0.0
        %5684 = vmatpush1.msra.mxu0 0.0
        %5685 = vmatprep.subr.mxu0 0.0
        %5686 = vmatpush1.msra.mxu0 0.0
        %5687 = vmatprep.mubr.f32.mxu0 0.0
        %5688 = vmatmul.mubr.f32.gmra.mrb[0].mxu0 %v5618
        %v5689 = vpop.f32.mrb[0].mxu0
        %v5690 = vadd.f32 %v5614, %v5689
        %v5691 = vpop.f32.mrb[0].mxu0
        %5692 = vmatprep.mubr.f32.mxu0 0.0
        %5693 = vmatmul.mubr.f32.gmra.mrb[0].mxu0 %v5621
        %v5694 = vpop.f32.mrb[0].mxu0
        %v5695 = vadd.f32 %v5614, %v5694
        %v5696 = vpop.f32.mrb[0].mxu0
        %5697 = vdwg.mxu0
        %5698 = vst [vmem:[%s220] sm:$0xff] %v5690
        %5699 = vst [vmem:[%s220 + $0x8] sm:$0xff] %v5695
        %s5700 = sand.u32 %s137, 1
        %s5701 = scalar_lea.sflag [#allocation4], %s5700
        %s5702 = sand.u32 %s137, 1
        %s5703 = smul.addr %s5702, 16
        %s5704 = scalar_lea.vmem [#allocation3], %s5703
        // Predicated region
        $region41: #{tpu_custom_call.1} parent=39 // pred_check
          %p5705 = pneg %p147
        $region42: #{tpu_custom_call.1} parent=39 // pred_check_branch
          %5707 = sbr.rel (%p5705) target = $region44
        $region43: #{tpu_custom_call.1} parent=39 // pred_region
          %s5708 = smul.u32 2, %s19
          %s5710 = ssub.s32 256, 256
          %5711 = vsyncadd %s5701, %s5710
          %s5712 = smul.addr %s5708, 128
          %s5713 = scalar_lea.hbm %s5, %s5712
          %s5714 = sshll.u32 %s5704, 4
          %s5715 = int_to_ptr.vmem [resolvable:$true] %s5714
          %5720 = dma.vmem_to_hbm [thread:$0]  %s5715, 256, %s5713, %s5701, 128, 128, 8
        $region44: #{tpu_custom_call.1} parent=39 // pred_fallthru
          _
      $region40: #{tpu_custom_call.1} parent=5 // pred_fallthru
        _
      %p5721 = scmp.le.s32.totalorder 2, %s14
      // Predicated region
      $region45: #{tpu_custom_call.1} parent=5 // pred_check
        %p5722 = pneg %p5721
      $region46: #{tpu_custom_call.1} parent=5 // pred_check_branch
        %5724 = sbr.rel (%p5722) target = $region48
      $region47: #{tpu_custom_call.1} parent=5 // pred_region
        %s5725 = ssub.s32 %s14, 2
        // Predicated region
        $region49: #{tpu_custom_call.1} parent=47 // pred_check
          %p5726 = pneg %p153
        $region50: #{tpu_custom_call.1} parent=47 // pred_check_branch
          %5728 = sbr.rel (%p5726) target = $region52
        $region51: #{tpu_custom_call.1} parent=47 // pred_region
          %s5729 = sand.u32 %s138, 1
          %s5730 = scalar_lea.sflag [#allocation4], %s5729
          %s5731 = sand.u32 %s138, 1
          %s5732 = smul.addr %s5731, 16
          %s5733 = scalar_lea.vmem [#allocation3], %s5732
          %5734 = dma.done %s5730, 256
        $region52: #{tpu_custom_call.1} parent=47 // pred_fallthru
          _
      $region48: #{tpu_custom_call.1} parent=5 // pred_fallthru
        _
    $region6: #{tpu_custom_call.1} parent=1 // loop_footer
      %s18 = sadd.s32 1, %s14
    $region7: #{tpu_custom_call.1} parent=1 // loop_footer_branch
      %13 = sbr.rel target = $region3
    $region8: #{tpu_custom_call.1} parent=1 // loop_exit
      _
    %5735 = vsyncpa [#allocation4], 1
    %s5736 = scalar_lea.sflag [#allocation4], 1
    %5737 = vsyncpa %s5736, 1

</llo_original>
